<compile_context>
chip_gen: v7x
topology: tpu7x:2x2x1
jax: 0.10.0
libtpu: 0.0.40
codegen_flags: <defaults>
</compile_context>

<pallas_src>
import jax
import jax.numpy as jnp
from jax.experimental import pallas as pl
from jax.experimental.pallas import tpu as pltpu


# ----------------------------------------------------------------------------
# Kernel: one grid step == one Q head (program_id(0) selects the head).
# ----------------------------------------------------------------------------
def _critic_fused_kernel(s_ref, a_ref,
                         w1_ref, b1_ref,
                         w2s_ref, w2a_ref, b2a_ref,
                         w3_ref, b3_ref,
                         q_ref):
    s = s_ref[...]                      # [B, state_dim]  f32
    a = a_ref[...]                      # [B, action_dim] f32

    # layer_1 / layer_4 + relu
    w1 = w1_ref[0].astype(jnp.float32)  # bf16 -> f32 (VPU; memory-bound kernel)
    s1 = jnp.dot(s, w1, preferred_element_type=jnp.float32) + b1_ref[0]
    s1 = jnp.maximum(s1, 0.0)

    # mm(s1, W2s^T) + mm(a, W2a^T) + b2a  (layer_2_s bias unused, as in torch)
    h = (jnp.dot(s1, w2s_ref[0].astype(jnp.float32),
                 preferred_element_type=jnp.float32)
         + jnp.dot(a, w2a_ref[0].astype(jnp.float32),
                   preferred_element_type=jnp.float32)
         + b2a_ref[0])
    h = jnp.maximum(h, 0.0)

    # layer_3 / layer_6 (output dim 1)
    q_ref[0] = jnp.dot(h, w3_ref[0].astype(jnp.float32),
                       preferred_element_type=jnp.float32) + b3_ref[0]


def _head_spec(shape):
    # shape = (2, d0, d1); one head's slab per grid step.
    return pl.BlockSpec((1,) + tuple(shape[1:]), lambda h: (h, 0, 0))


def _shared_spec(shape):
    # Shared (head-invariant) input: same full block every step.
    return pl.BlockSpec(tuple(shape), lambda h, _n=len(shape): (0,) * _n)


@jax.jit
def critic_forward(s, a, params):
    """Returns (q1, q2), each [B, 1] float32."""
    B = s.shape[0]
    inputs = (s, a,
              params["w1"], params["b1"],
              params["w2s"], params["w2a"], params["b2a"],
              params["w3"], params["b3"])
    in_specs = [_shared_spec(s.shape), _shared_spec(a.shape)] + \
               [_head_spec(x.shape) for x in inputs[2:]]

    q = pl.pallas_call(
        _critic_fused_kernel,
        out_shape=jax.ShapeDtypeStruct((2, B, 1), jnp.float32),
        grid=(2,),                               # one step per Q head
        in_specs=in_specs,
        out_specs=pl.BlockSpec((1, B, 1), lambda h: (h, 0, 0)),
        compiler_params=pltpu.CompilerParams(
            dimension_semantics=("parallel",)),  # heads are independent
    )(*inputs)
    return q[0], q[1]


# ----------------------------------------------------------------------------
# Parameter construction (weights pre-transposed to [in, out], stacked by head,
# stored bf16; biases stored f32 as [1, out]).
# ----------------------------------------------------------------------------
def init_params(key, state_dim, action_dim, weight_dtype=jnp.bfloat16):
    def linear(key, fan_in, fan_out):
        kw, kb = jax.random.split(key)
        bound = 1.0 / (float(fan_in) ** 0.5)
        w = jax.random.uniform(kw, (fan_in, fan_out), jnp.float32, -bound, bound)
        b = jax.random.uniform(kb, (1, fan_out), jnp.float32, -bound, bound)
        return w, b

    keys = jax.random.split(key, 8)
    w1a, b1a = linear(keys[0], state_dim, 800)       # layer_1
    w2s_a, _ = linear(keys[1], 800, 600)             # layer_2_s (bias never used)
    w2a_a, b2a_a = linear(keys[2], action_dim, 600)  # layer_2_a
    w3a, b3a = linear(keys[3], 600, 1)               # layer_3
    w1b, b1b = linear(keys[4], state_dim, 800)       # layer_4
    w2s_b, _ = linear(keys[5], 800, 600)             # layer_5_s (bias never used)
    w2a_b, b2a_b = linear(keys[6], action_dim, 600)  # layer_5_a
    w3b, b3b = linear(keys[7], 600, 1)               # layer_6

    stack_w = lambda x, y: jnp.stack([x, y], axis=0).astype(weight_dtype)
    stack_b = lambda x, y: jnp.stack([x, y], axis=0).astype(jnp.float32)
    return dict(
        w1=stack_w(w1a, w1b), b1=stack_b(b1a, b1b),
        w2s=stack_w(w2s_a, w2s_b),
        w2a=stack_w(w2a_a, w2a_b), b2a=stack_b(b2a_a, b2a_b),
        w3=stack_w(w3a, w3b), b3=stack_b(b3a, b3b),
    )


def critic_forward_ref(s, a, p):
    """Pure-JAX reference (same stored weights, f32 math)."""
    def head(h):
        w1 = p["w1"][h].astype(jnp.float32)
        w2s = p["w2s"][h].astype(jnp.float32)
        w2a = p["w2a"][h].astype(jnp.float32)
        w3 = p["w3"][h].astype(jnp.float32)
        s1 = jax.nn.relu(s @ w1 + p["b1"][h])
        hid = jax.nn.relu(s1 @ w2s + a @ w2a + p["b2a"][h])
        return hid @ w3 + p["b3"][h]
    return head(0), head(1)


if __name__ == "__main__":
    # Small shapes consistent with the TD3 robot-navigation Critic:
    # state_dim = 24 (20 laser bins + 4 robot state), action_dim = 2.
    B, STATE_DIM, ACTION_DIM = 2, 24, 2

    key = jax.random.PRNGKey(0)
    kp, ks, ka = jax.random.split(key, 3)
    params = init_params(kp, STATE_DIM, ACTION_DIM)
    s = jax.random.normal(ks, (B, STATE_DIM), jnp.float32)
    a = jax.random.uniform(ka, (B, ACTION_DIM), jnp.float32, -1.0, 1.0)

    q1, q2 = critic_forward(s, a, params)
    jax.block_until_ready((q1, q2))

    # Sanity check against pure-JAX reference (same bf16-stored weights).
    q1_ref, q2_ref = critic_forward_ref(s, a, params)
    assert q1.shape == (B, 1) and q2.shape == (B, 1)
    assert jnp.allclose(q1, q1_ref, atol=1e-3, rtol=1e-3)
    assert jnp.allclose(q2, q2_ref, atol=1e-3, rtol=1e-3)

    print("KERNEL_OK")
</pallas_src>

<mosaic_0001>
module attributes {stable_mosaic.version = 11 : i64} {
  func.func @_critic_fused_kernel(%arg0: i32, %arg1: memref<2x24xf32, #tpu.memory_space<vmem>>, %arg2: memref<2x2xf32, #tpu.memory_space<vmem>>, %arg3: memref<1x24x800xbf16, #tpu.memory_space<vmem>>, %arg4: memref<1x1x800xf32, #tpu.memory_space<vmem>>, %arg5: memref<1x800x600xbf16, #tpu.memory_space<vmem>>, %arg6: memref<1x2x600xbf16, #tpu.memory_space<vmem>>, %arg7: memref<1x1x600xf32, #tpu.memory_space<vmem>>, %arg8: memref<1x600x1xbf16, #tpu.memory_space<vmem>>, %arg9: memref<1x1x1xf32, #tpu.memory_space<vmem>>, %arg10: memref<1x2x1xf32, #tpu.memory_space<vmem>>) attributes {dimension_semantics = [#tpu.dimension_semantics<parallel>], iteration_bounds = array<i64: 2>, scalar_prefetch = 0 : i64, scratch_operands = 0 : i64, tpu.core_type = #tpu.core_type<tc>, window_params = [{pipeline_mode = #tpu.pipeline_mode<synchronous>, transform_indices = @transform_0, window_bounds = array<i64: 2, 24>}, {pipeline_mode = #tpu.pipeline_mode<synchronous>, transform_indices = @transform_1, window_bounds = array<i64: 2, 2>}, {transform_indices = @transform_2, window_bounds = array<i64: 1, 24, 800>}, {transform_indices = @transform_3, window_bounds = array<i64: 1, 1, 800>}, {transform_indices = @transform_4, window_bounds = array<i64: 1, 800, 600>}, {transform_indices = @transform_5, window_bounds = array<i64: 1, 2, 600>}, {transform_indices = @transform_6, window_bounds = array<i64: 1, 1, 600>}, {transform_indices = @transform_7, window_bounds = array<i64: 1, 600, 1>}, {transform_indices = @transform_8, window_bounds = array<i64: 1, 1, 1>}, {transform_indices = @transform_9, window_bounds = array<i64: 1, 2, 1>}]} {
    %c0 = arith.constant 0 : index
    %c0_0 = arith.constant 0 : index
    %0 = vector.load %arg1[%c0, %c0_0] : memref<2x24xf32, #tpu.memory_space<vmem>>, vector<2x24xf32>
    %c0_1 = arith.constant 0 : index
    %c0_2 = arith.constant 0 : index
    %1 = vector.load %arg2[%c0_1, %c0_2] : memref<2x2xf32, #tpu.memory_space<vmem>>, vector<2x2xf32>
    %c0_3 = arith.constant 0 : index
    %c0_4 = arith.constant 0 : index
    %c0_5 = arith.constant 0 : index
    %2 = vector.load %arg3[%c0_3, %c0_4, %c0_5] : memref<1x24x800xbf16, #tpu.memory_space<vmem>>, vector<1x24x800xbf16>
    %3 = vector.shape_cast %2 : vector<1x24x800xbf16> to vector<24x800xbf16>
    %4 = arith.extf %3 : vector<24x800xbf16> to vector<24x800xf32>
    %cst = arith.constant dense<0.000000e+00> : vector<2x800xf32>
    %5 = tpu.matmul %0, %4, %cst {dimension_numbers = #tpu.dot_dimension_numbers<[1], [0], [0], [1], [0, 0, 1, 1], [], []>} : vector<2x24xf32>, vector<24x800xf32>, vector<2x800xf32> -> vector<2x800xf32>
    %c0_6 = arith.constant 0 : index
    %c0_7 = arith.constant 0 : index
    %c0_8 = arith.constant 0 : index
    %6 = vector.load %arg4[%c0_6, %c0_7, %c0_8] : memref<1x1x800xf32, #tpu.memory_space<vmem>>, vector<1x1x800xf32>
    %7 = vector.shape_cast %6 : vector<1x1x800xf32> to vector<1x800xf32>
    %8 = vector.broadcast %7 : vector<1x800xf32> to vector<2x800xf32>
    %9 = arith.addf %5, %8 : vector<2x800xf32>
    %cst_9 = arith.constant 0.000000e+00 : f32
    %10 = vector.broadcast %cst_9 : f32 to vector<2x800xf32>
    %11 = arith.maximumf %9, %10 : vector<2x800xf32>
    %c0_10 = arith.constant 0 : index
    %c0_11 = arith.constant 0 : index
    %c0_12 = arith.constant 0 : index
    %12 = vector.load %arg5[%c0_10, %c0_11, %c0_12] : memref<1x800x600xbf16, #tpu.memory_space<vmem>>, vector<1x800x600xbf16>
    %13 = vector.shape_cast %12 : vector<1x800x600xbf16> to vector<800x600xbf16>
    %14 = arith.extf %13 : vector<800x600xbf16> to vector<800x600xf32>
    %cst_13 = arith.constant dense<0.000000e+00> : vector<2x600xf32>
    %15 = tpu.matmul %11, %14, %cst_13 {dimension_numbers = #tpu.dot_dimension_numbers<[1], [0], [0], [1], [0, 0, 1, 1], [], []>} : vector<2x800xf32>, vector<800x600xf32>, vector<2x600xf32> -> vector<2x600xf32>
    %c0_14 = arith.constant 0 : index
    %c0_15 = arith.constant 0 : index
    %c0_16 = arith.constant 0 : index
    %16 = vector.load %arg6[%c0_14, %c0_15, %c0_16] : memref<1x2x600xbf16, #tpu.memory_space<vmem>>, vector<1x2x600xbf16>
    %17 = vector.shape_cast %16 : vector<1x2x600xbf16> to vector<2x600xbf16>
    %18 = arith.extf %17 : vector<2x600xbf16> to vector<2x600xf32>
    %cst_17 = arith.constant dense<0.000000e+00> : vector<2x600xf32>
    %19 = tpu.matmul %1, %18, %cst_17 {dimension_numbers = #tpu.dot_dimension_numbers<[1], [0], [0], [1], [0, 0, 1, 1], [], []>} : vector<2x2xf32>, vector<2x600xf32>, vector<2x600xf32> -> vector<2x600xf32>
    %20 = arith.addf %15, %19 : vector<2x600xf32>
    %c0_18 = arith.constant 0 : index
    %c0_19 = arith.constant 0 : index
    %c0_20 = arith.constant 0 : index
    %21 = vector.load %arg7[%c0_18, %c0_19, %c0_20] : memref<1x1x600xf32, #tpu.memory_space<vmem>>, vector<1x1x600xf32>
    %22 = vector.shape_cast %21 : vector<1x1x600xf32> to vector<1x600xf32>
    %23 = vector.broadcast %22 : vector<1x600xf32> to vector<2x600xf32>
    %24 = arith.addf %20, %23 : vector<2x600xf32>
    %cst_21 = arith.constant 0.000000e+00 : f32
    %25 = vector.broadcast %cst_21 : f32 to vector<2x600xf32>
    %26 = arith.maximumf %24, %25 : vector<2x600xf32>
    %c0_22 = arith.constant 0 : index
    %c0_23 = arith.constant 0 : index
    %c0_24 = arith.constant 0 : index
    %27 = vector.load %arg8[%c0_22, %c0_23, %c0_24] : memref<1x600x1xbf16, #tpu.memory_space<vmem>>, vector<1x600x1xbf16>
    %28 = vector.shape_cast %27 : vector<1x600x1xbf16> to vector<600x1xbf16>
    %29 = arith.extf %28 : vector<600x1xbf16> to vector<600x1xf32>
    %cst_25 = arith.constant dense<0.000000e+00> : vector<2x1xf32>
    %30 = tpu.matmul %26, %29, %cst_25 {dimension_numbers = #tpu.dot_dimension_numbers<[1], [0], [0], [1], [0, 0, 1, 1], [], []>} : vector<2x600xf32>, vector<600x1xf32>, vector<2x1xf32> -> vector<2x1xf32>
    %c0_26 = arith.constant 0 : index
    %c0_27 = arith.constant 0 : index
    %c0_28 = arith.constant 0 : index
    %31 = vector.load %arg9[%c0_26, %c0_27, %c0_28] : memref<1x1x1xf32, #tpu.memory_space<vmem>>, vector<1x1x1xf32>
    %32 = vector.shape_cast %31 : vector<1x1x1xf32> to vector<1x1xf32>
    %33 = vector.broadcast %32 : vector<1x1xf32> to vector<2x1xf32>
    %34 = arith.addf %30, %33 : vector<2x1xf32>
    %c0_29 = arith.constant 0 : index
    %c0_30 = arith.constant 0 : index
    %c0_31 = arith.constant 0 : index
    %35 = vector.load %arg10[%c0_29, %c0_30, %c0_31] : memref<1x2x1xf32, #tpu.memory_space<vmem>>, vector<1x2x1xf32>
    %36 = vector.shape_cast %35 : vector<1x2x1xf32> to vector<2x1xf32>
    %37 = vector.shape_cast %34 : vector<2x1xf32> to vector<1x2x1xf32>
    tpu.vector_store %arg10[%c0_29, %c0_30, %c0_31], %37 {strides = array<i32>} : memref<1x2x1xf32, #tpu.memory_space<vmem>>, vector<1x2x1xf32>,
    return
  }
  func.func @transform_0(%arg0: i32) -> (i32, i32) {
    %c0_i32 = arith.constant 0 : i32
    %c0_i32_0 = arith.constant 0 : i32
    %c0_i32_1 = arith.constant 0 : i32
    return %c0_i32, %c0_i32_0 : i32, i32
  }
  func.func @transform_1(%arg0: i32) -> (i32, i32) {
    %c0_i32 = arith.constant 0 : i32
    %c0_i32_0 = arith.constant 0 : i32
    %c0_i32_1 = arith.constant 0 : i32
    return %c0_i32, %c0_i32_0 : i32, i32
  }
  func.func @transform_2(%arg0: i32) -> (i32, i32, i32) {
    %c0_i32 = arith.constant 0 : i32
    %c0_i32_0 = arith.constant 0 : i32
    %c0_i32_1 = arith.constant 0 : i32
    return %arg0, %c0_i32, %c0_i32_0 : i32, i32, i32
  }
  func.func @transform_3(%arg0: i32) -> (i32, i32, i32) {
    %c0_i32 = arith.constant 0 : i32
    %c0_i32_0 = arith.constant 0 : i32
    %c0_i32_1 = arith.constant 0 : i32
    return %arg0, %c0_i32, %c0_i32_0 : i32, i32, i32
  }
  func.func @transform_4(%arg0: i32) -> (i32, i32, i32) {
    %c0_i32 = arith.constant 0 : i32
    %c0_i32_0 = arith.constant 0 : i32
    %c0_i32_1 = arith.constant 0 : i32
    return %arg0, %c0_i32, %c0_i32_0 : i32, i32, i32
  }
  func.func @transform_5(%arg0: i32) -> (i32, i32, i32) {
    %c0_i32 = arith.constant 0 : i32
    %c0_i32_0 = arith.constant 0 : i32
    %c0_i32_1 = arith.constant 0 : i32
    return %arg0, %c0_i32, %c0_i32_0 : i32, i32, i32
  }
  func.func @transform_6(%arg0: i32) -> (i32, i32, i32) {
    %c0_i32 = arith.constant 0 : i32
    %c0_i32_0 = arith.constant 0 : i32
    %c0_i32_1 = arith.constant 0 : i32
    return %arg0, %c0_i32, %c0_i32_0 : i32, i32, i32
  }
  func.func @transform_7(%arg0: i32) -> (i32, i32, i32) {
    %c0_i32 = arith.constant 0 : i32
    %c0_i32_0 = arith.constant 0 : i32
    %c0_i32_1 = arith.constant 0 : i32
    return %arg0, %c0_i32, %c0_i32_0 : i32, i32, i32
  }
  func.func @transform_8(%arg0: i32) -> (i32, i32, i32) {
    %c0_i32 = arith.constant 0 : i32
    %c0_i32_0 = arith.constant 0 : i32
    %c0_i32_1 = arith.constant 0 : i32
    return %arg0, %c0_i32, %c0_i32_0 : i32, i32, i32
  }
  func.func @transform_9(%arg0: i32) -> (i32, i32, i32) {
    %c0_i32 = arith.constant 0 : i32
    %c0_i32_0 = arith.constant 0 : i32
    %c0_i32_1 = arith.constant 0 : i32
    return %arg0, %c0_i32, %c0_i32_0 : i32, i32, i32
  }
}

</mosaic_0001>

<llo_original>
// kernel: critic_forward.1
$region0: #{critic_forward.1}
  #allocation0 [shape = 'u32[]', space=smem, size = 0x4, offset = 0x4, fixed_abs, tag = 'smem constant byte address 0x4 - core index']
  #allocation1 [shape = 'u32[144,128]{1,0:T(1,128)}', space=vmem, size = 0x12000, scoped, tag = 'internal scratch']
  %s0 = inlined_call_operand.hbm [shape: f32[2,24], index: 0, kind: input, shape index: {}]
  %s1 = inlined_call_operand.hbm [shape: f32[2,2], index: 1, kind: input, shape index: {}]
  %s2 = inlined_call_operand.hbm [shape: bf16[2,24,800], index: 2, kind: input, shape index: {}]
  %s3 = inlined_call_operand.hbm [shape: f32[2,1,800], index: 3, kind: input, shape index: {}]
  %s4 = inlined_call_operand.hbm [shape: bf16[2,800,600], index: 4, kind: input, shape index: {}]
  %s5 = inlined_call_operand.hbm [shape: bf16[2,2,600], index: 5, kind: input, shape index: {}]
  %s6 = inlined_call_operand.hbm [shape: f32[2,1,600], index: 6, kind: input, shape index: {}]
  %s7 = inlined_call_operand.vmem [shape: bf16[2,600,1], index: 7, kind: input, shape index: {}]
  %s8 = inlined_call_operand.vmem [shape: f32[2,1,1], index: 8, kind: input, shape index: {}]
  %s9 = inlined_call_operand.vmem [shape: f32[2,2,1], index: 9, kind: output, shape index: {}]
  %s10 = sld [smem:[#allocation0]]
  $region97: #{critic_forward.1} parent=0
    _
  %s12 = ssub.s32 1, %s10
  %s13 = scalar_select 0, %s12, %s10
  $region1: #{critic_forward.1} parent=0
    #allocation2 [shape = 'u8[1024]{0}', space=vmem, size = 0x400, scoped, tag = 'input window, operand 0, single buffered']
    #allocation3 [shape = 's32[2]{0}', space=sflag, size = 0x8, scoped, tag = 'scoped memory for critic_forward.1']
    #allocation4 [shape = 'u8[1024]{0}', space=vmem, size = 0x400, scoped, tag = 'input window, operand 1, single buffered']
    #allocation5 [shape = 's32[1]{0}', space=sflag, size = 0x4, scoped, tag = 'scoped memory for critic_forward.1']
    #allocation6 [shape = 'u8[86016]{0}', space=vmem, size = 0x15000, scoped, tag = 'input window, operand 2']
    #allocation7 [shape = 'u8[7168]{0}', space=vmem, size = 0x1c00, scoped, tag = 'input window, operand 3']
    #allocation8 [shape = 'u8[2048000]{0}', space=vmem, size = 0x1f4000, scoped, tag = 'input window, operand 4']
    #allocation9 [shape = 'u8[5120]{0}', space=vmem, size = 0x1400, scoped, tag = 'input window, operand 5']
    #allocation10 [shape = 'u8[5120]{0}', space=vmem, size = 0x1400, scoped, tag = 'input window, operand 6']
    %14 = vsyncpa [#allocation3], 0
    %15 = vsyncpa [#allocation5], 0
    loop: start=0, step=1, limit=4
    $region2: #{critic_forward.1} parent=1 // loop_pre_header
      _
    $region3: #{critic_forward.1} parent=1 // loop_header
      %s17 = sphi 0, %s21
      %p18 = scmp.ge.s32.totalorder %s17, 4
      %s25 = sphi 0, %s25
      %s27 = sphi 0, %s25
      %s28 = sphi 0, %s27
      %s42 = sphi 0, %s28
      %s46 = sphi 0, %s46
      %s48 = sphi 0, %s46
      %s49 = sphi 0, %s48
      %s63 = sphi 0, %s49
      %s69 = sphi 0, %s71
      %s72 = sphi 0, %s69
      %s73 = sphi 0, %s72
      %s89 = sphi 0, %s73
      %s95 = sphi 0, %s97
      %s98 = sphi 0, %s95
      %s99 = sphi 0, %s98
      %s115 = sphi 0, %s99
      %s121 = sphi 0, %s123
      %s124 = sphi 0, %s121
      %s125 = sphi 0, %s124
      %s141 = sphi 0, %s125
      %s147 = sphi 0, %s149
      %s150 = sphi 0, %s147
      %s151 = sphi 0, %s150
      %s167 = sphi 0, %s151
      %s173 = sphi 0, %s175
      %s176 = sphi 0, %s173
      %s177 = sphi 0, %s176
      %s193 = sphi 0, %s177
      %s199 = sphi 0, %s201
      %s202 = sphi 0, %s199
      %s203 = sphi 0, %s202
      %s219 = sphi 0, %s203
      %s225 = sphi 0, %s227
      %s228 = sphi 0, %s225
      %s229 = sphi 0, %s228
      %s245 = sphi 0, %s229
      %s251 = sphi 0, %s253
      %s254 = sphi 0, %s251
      %s255 = sphi 0, %s254
      %s271 = sphi 0, %s255
    $region4: #{critic_forward.1} parent=1 // loop_header_branch
      %20 = sbr.rel (%p18) target = $region8
    $region5: #{critic_forward.1} parent=1 // loop_body
      %s22 = ssub.s32 %s17, 1
      %s23 = ssub.s32 %s17, 2
      %s24 = sadd.s32 %s17, 1
      %s26 = sadd.s32 %s25, 1
      %p29 = scmp.eq.s32.totalorder %s17, 1
      %p30 = scmp.ne.s32.totalorder %s25, %s27
      %p31 = scmp.eq.s32.totalorder %s17, 0
      %p32 = por %p30, %p31
      %p33 = scmp.ne.s32.totalorder %s25, %s27
      %p34 = scmp.eq.s32.totalorder %s22, 1
      %p35 = por %p33, %p34
      %p36 = scmp.ne.s32.totalorder %s27, %s28
      %p37 = scmp.eq.s32.totalorder %s22, 0
      %p38 = por %p36, %p37
      %p39 = scmp.ne.s32.totalorder %s27, %s28
      %p40 = scmp.eq.s32.totalorder %s23, 1
      %p41 = por %p39, %p40
      %p43 = scmp.ne.s32.totalorder %s28, %s42
      %p44 = scmp.eq.s32.totalorder %s23, 0
      %p45 = por %p43, %p44
      %s47 = sadd.s32 %s46, 1
      %p50 = scmp.eq.s32.totalorder %s17, 1
      %p51 = scmp.ne.s32.totalorder %s46, %s48
      %p52 = scmp.eq.s32.totalorder %s17, 0
      %p53 = por %p51, %p52
      %p54 = scmp.ne.s32.totalorder %s46, %s48
      %p55 = scmp.eq.s32.totalorder %s22, 1
      %p56 = por %p54, %p55
      %p57 = scmp.ne.s32.totalorder %s48, %s49
      %p58 = scmp.eq.s32.totalorder %s22, 0
      %p59 = por %p57, %p58
      %p60 = scmp.ne.s32.totalorder %s48, %s49
      %p61 = scmp.eq.s32.totalorder %s23, 1
      %p62 = por %p60, %p61
      %p64 = scmp.ne.s32.totalorder %s49, %s63
      %p65 = scmp.eq.s32.totalorder %s23, 0
      %p66 = por %p64, %p65
      %s67 = ssub.s32 %s17, %s24
      %p68 = scmp.eq.s32.totalorder %s67, 0
      %s70 = sadd.s32 %s69, 1
      %s71 = scalar_select %p68, %s69, %s70
      %p74 = pneg %p68
      %p75 = scmp.eq.s32.totalorder %s17, 1
      %p76 = por %p74, %p75
      %p77 = scmp.ne.s32.totalorder %s69, %s72
      %p78 = scmp.eq.s32.totalorder %s17, 0
      %p79 = por %p77, %p78
      %p80 = scmp.ne.s32.totalorder %s69, %s72
      %p81 = scmp.eq.s32.totalorder %s22, 1
      %p82 = por %p80, %p81
      %p83 = scmp.ne.s32.totalorder %s72, %s73
      %p84 = scmp.eq.s32.totalorder %s22, 0
      %p85 = por %p83, %p84
      %p86 = scmp.ne.s32.totalorder %s72, %s73
      %p87 = scmp.eq.s32.totalorder %s23, 1
      %p88 = por %p86, %p87
      %p90 = scmp.ne.s32.totalorder %s73, %s89
      %p91 = scmp.eq.s32.totalorder %s23, 0
      %p92 = por %p90, %p91
      %s93 = ssub.s32 %s17, %s24
      %p94 = scmp.eq.s32.totalorder %s93, 0
      %s96 = sadd.s32 %s95, 1
      %s97 = scalar_select %p94, %s95, %s96
      %p100 = pneg %p94
      %p101 = scmp.eq.s32.totalorder %s17, 1
      %p102 = por %p100, %p101
      %p103 = scmp.ne.s32.totalorder %s95, %s98
      %p104 = scmp.eq.s32.totalorder %s17, 0
      %p105 = por %p103, %p104
      %p106 = scmp.ne.s32.totalorder %s95, %s98
      %p107 = scmp.eq.s32.totalorder %s22, 1
      %p108 = por %p106, %p107
      %p109 = scmp.ne.s32.totalorder %s98, %s99
      %p110 = scmp.eq.s32.totalorder %s22, 0
      %p111 = por %p109, %p110
      %p112 = scmp.ne.s32.totalorder %s98, %s99
      %p113 = scmp.eq.s32.totalorder %s23, 1
      %p114 = por %p112, %p113
      %p116 = scmp.ne.s32.totalorder %s99, %s115
      %p117 = scmp.eq.s32.totalorder %s23, 0
      %p118 = por %p116, %p117
      %s119 = ssub.s32 %s17, %s24
      %p120 = scmp.eq.s32.totalorder %s119, 0
      %s122 = sadd.s32 %s121, 1
      %s123 = scalar_select %p120, %s121, %s122
      %p126 = pneg %p120
      %p127 = scmp.eq.s32.totalorder %s17, 1
      %p128 = por %p126, %p127
      %p129 = scmp.ne.s32.totalorder %s121, %s124
      %p130 = scmp.eq.s32.totalorder %s17, 0
      %p131 = por %p129, %p130
      %p132 = scmp.ne.s32.totalorder %s121, %s124
      %p133 = scmp.eq.s32.totalorder %s22, 1
      %p134 = por %p132, %p133
      %p135 = scmp.ne.s32.totalorder %s124, %s125
      %p136 = scmp.eq.s32.totalorder %s22, 0
      %p137 = por %p135, %p136
      %p138 = scmp.ne.s32.totalorder %s124, %s125
      %p139 = scmp.eq.s32.totalorder %s23, 1
      %p140 = por %p138, %p139
      %p142 = scmp.ne.s32.totalorder %s125, %s141
      %p143 = scmp.eq.s32.totalorder %s23, 0
      %p144 = por %p142, %p143
      %s145 = ssub.s32 %s17, %s24
      %p146 = scmp.eq.s32.totalorder %s145, 0
      %s148 = sadd.s32 %s147, 1
      %s149 = scalar_select %p146, %s147, %s148
      %p152 = pneg %p146
      %p153 = scmp.eq.s32.totalorder %s17, 1
      %p154 = por %p152, %p153
      %p155 = scmp.ne.s32.totalorder %s147, %s150
      %p156 = scmp.eq.s32.totalorder %s17, 0
      %p157 = por %p155, %p156
      %p158 = scmp.ne.s32.totalorder %s147, %s150
      %p159 = scmp.eq.s32.totalorder %s22, 1
      %p160 = por %p158, %p159
      %p161 = scmp.ne.s32.totalorder %s150, %s151
      %p162 = scmp.eq.s32.totalorder %s22, 0
      %p163 = por %p161, %p162
      %p164 = scmp.ne.s32.totalorder %s150, %s151
      %p165 = scmp.eq.s32.totalorder %s23, 1
      %p166 = por %p164, %p165
      %p168 = scmp.ne.s32.totalorder %s151, %s167
      %p169 = scmp.eq.s32.totalorder %s23, 0
      %p170 = por %p168, %p169
      %s171 = ssub.s32 %s17, %s24
      %p172 = scmp.eq.s32.totalorder %s171, 0
      %s174 = sadd.s32 %s173, 1
      %s175 = scalar_select %p172, %s173, %s174
      %p178 = pneg %p172
      %p179 = scmp.eq.s32.totalorder %s17, 1
      %p180 = por %p178, %p179
      %p181 = scmp.ne.s32.totalorder %s173, %s176
      %p182 = scmp.eq.s32.totalorder %s17, 0
      %p183 = por %p181, %p182
      %p184 = scmp.ne.s32.totalorder %s173, %s176
      %p185 = scmp.eq.s32.totalorder %s22, 1
      %p186 = por %p184, %p185
      %p187 = scmp.ne.s32.totalorder %s176, %s177
      %p188 = scmp.eq.s32.totalorder %s22, 0
      %p189 = por %p187, %p188
      %p190 = scmp.ne.s32.totalorder %s176, %s177
      %p191 = scmp.eq.s32.totalorder %s23, 1
      %p192 = por %p190, %p191
      %p194 = scmp.ne.s32.totalorder %s177, %s193
      %p195 = scmp.eq.s32.totalorder %s23, 0
      %p196 = por %p194, %p195
      %s197 = ssub.s32 %s17, %s24
      %p198 = scmp.eq.s32.totalorder %s197, 0
      %s200 = sadd.s32 %s199, 1
      %s201 = scalar_select %p198, %s199, %s200
      %p204 = pneg %p198
      %p205 = scmp.eq.s32.totalorder %s17, 1
      %p206 = por %p204, %p205
      %p207 = scmp.ne.s32.totalorder %s199, %s202
      %p208 = scmp.eq.s32.totalorder %s17, 0
      %p209 = por %p207, %p208
      %p210 = scmp.ne.s32.totalorder %s199, %s202
      %p211 = scmp.eq.s32.totalorder %s22, 1
      %p212 = por %p210, %p211
      %p213 = scmp.ne.s32.totalorder %s202, %s203
      %p214 = scmp.eq.s32.totalorder %s22, 0
      %p215 = por %p213, %p214
      %p216 = scmp.ne.s32.totalorder %s202, %s203
      %p217 = scmp.eq.s32.totalorder %s23, 1
      %p218 = por %p216, %p217
      %p220 = scmp.ne.s32.totalorder %s203, %s219
      %p221 = scmp.eq.s32.totalorder %s23, 0
      %p222 = por %p220, %p221
      %s223 = ssub.s32 %s17, %s24
      %p224 = scmp.eq.s32.totalorder %s223, 0
      %s226 = sadd.s32 %s225, 1
      %s227 = scalar_select %p224, %s225, %s226
      %p230 = pneg %p224
      %p231 = scmp.eq.s32.totalorder %s17, 1
      %p232 = por %p230, %p231
      %p233 = scmp.ne.s32.totalorder %s225, %s228
      %p234 = scmp.eq.s32.totalorder %s17, 0
      %p235 = por %p233, %p234
      %p236 = scmp.ne.s32.totalorder %s225, %s228
      %p237 = scmp.eq.s32.totalorder %s22, 1
      %p238 = por %p236, %p237
      %p239 = scmp.ne.s32.totalorder %s228, %s229
      %p240 = scmp.eq.s32.totalorder %s22, 0
      %p241 = por %p239, %p240
      %p242 = scmp.ne.s32.totalorder %s228, %s229
      %p243 = scmp.eq.s32.totalorder %s23, 1
      %p244 = por %p242, %p243
      %p246 = scmp.ne.s32.totalorder %s229, %s245
      %p247 = scmp.eq.s32.totalorder %s23, 0
      %p248 = por %p246, %p247
      %s249 = ssub.s32 %s17, %s24
      %p250 = scmp.eq.s32.totalorder %s249, 0
      %s252 = sadd.s32 %s251, 1
      %s253 = scalar_select %p250, %s251, %s252
      %p256 = pneg %p250
      %p257 = scmp.eq.s32.totalorder %s17, 1
      %p258 = por %p256, %p257
      %p259 = scmp.ne.s32.totalorder %s251, %s254
      %p260 = scmp.eq.s32.totalorder %s17, 0
      %p261 = por %p259, %p260
      %p262 = scmp.ne.s32.totalorder %s251, %s254
      %p263 = scmp.eq.s32.totalorder %s22, 1
      %p264 = por %p262, %p263
      %p265 = scmp.ne.s32.totalorder %s254, %s255
      %p266 = scmp.eq.s32.totalorder %s22, 0
      %p267 = por %p265, %p266
      %p268 = scmp.ne.s32.totalorder %s254, %s255
      %p269 = scmp.eq.s32.totalorder %s23, 1
      %p270 = por %p268, %p269
      %p272 = scmp.ne.s32.totalorder %s255, %s271
      %p273 = scmp.eq.s32.totalorder %s23, 0
      %p274 = por %p272, %p273
      %p275 = scmp.le.s32.totalorder 1, %s17
      %p276 = scmp.lt.s32.totalorder %s17, 3
      %p277 = pnand %p275, %p276
      %p278 = pneg %p277
      // Predicated region
      $region9: #{critic_forward.1} parent=5 // pred_check
        _
      $region10: #{critic_forward.1} parent=5 // pred_check_branch
        %280 = sbr.rel (%p277) target = $region12
      $region11: #{critic_forward.1} parent=5 // pred_region
        %s281 = ssub.s32 %s17, 1
        // Predicated region
        $region13: #{critic_forward.1} parent=11 // pred_check
          %p282 = pneg %p38
        $region14: #{critic_forward.1} parent=11 // pred_check_branch
          %284 = sbr.rel (%p282) target = $region16
        $region15: #{critic_forward.1} parent=11 // pred_region
          %s286 = ssub.s32 32, 32
          %287 = vsyncadd [#allocation3], %s286
          %s289 = sshll.u32 [#allocation2], 4
          %s290 = int_to_ptr.vmem [resolvable:$true] %s289
          %292 = dma.hbm_to_vmem [thread:$0]  %s0, 32, %s290, [#allocation3]
        $region16: #{critic_forward.1} parent=11 // pred_fallthru
          _
        // Predicated region
        $region17: #{critic_forward.1} parent=11 // pred_check
          %p293 = pneg %p59
        $region18: #{critic_forward.1} parent=11 // pred_check_branch
          %295 = sbr.rel (%p293) target = $region20
        $region19: #{critic_forward.1} parent=11 // pred_region
          %s297 = ssub.s32 32, 32
          %298 = vsyncadd [#allocation5], %s297
          %s300 = sshll.u32 [#allocation4], 4
          %s301 = int_to_ptr.vmem [resolvable:$true] %s300
          %303 = dma.hbm_to_vmem [thread:$0]  %s1, 32, %s301, [#allocation5]
        $region20: #{critic_forward.1} parent=11 // pred_fallthru
          _
      $region12: #{critic_forward.1} parent=5 // pred_fallthru
        _
      %p304 = scmp.lt.s32.totalorder %s17, 2
      // Predicated region
      $region21: #{critic_forward.1} parent=5 // pred_check
        %p305 = pneg %p304
      $region22: #{critic_forward.1} parent=5 // pred_check_branch
        %307 = sbr.rel (%p305) target = $region24
      $region23: #{critic_forward.1} parent=5 // pred_region
        // Predicated region
        $region25: #{critic_forward.1} parent=23 // pred_check
          %p308 = pneg %p79
        $region26: #{critic_forward.1} parent=23 // pred_check_branch
          %310 = sbr.rel (%p308) target = $region28
        $region27: #{critic_forward.1} parent=23 // pred_region
          %s311 = sand.u32 %s17, 1
          %s312 = scalar_lea.sflag [#allocation3], %s311
          %s313 = sand.u32 %s69, 1
          %s314 = smul.addr %s313, 84
          %s315 = scalar_lea.vmem [#allocation6], %s314
          %s317 = ssub.s32 1344, 1344
          %318 = vsyncadd %s312, %s317
          %s319 = smul.addr %s17, 21
          %s320 = smul.addr %s319, 64
          %s321 = scalar_lea.hbm %s2, %s320
          %s322 = sshll.u32 %s315, 4
          %s323 = int_to_ptr.vmem [resolvable:$true] %s322
          %328 = dma.hbm_to_vmem [thread:$0]  %s321, 1344, %s323, %s312, 448, 448, 28
        $region28: #{critic_forward.1} parent=23 // pred_fallthru
          _
        // Predicated region
        $region29: #{critic_forward.1} parent=23 // pred_check
          %p329 = pneg %p105
        $region30: #{critic_forward.1} parent=23 // pred_check_branch
          %331 = sbr.rel (%p329) target = $region32
        $region31: #{critic_forward.1} parent=23 // pred_region
          %s332 = sand.u32 %s17, 1
          %s333 = scalar_lea.sflag [#allocation3], %s332
          %s334 = sand.u32 %s95, 1
          %s335 = smul.addr %s334, 7
          %s336 = scalar_lea.vmem [#allocation7], %s335
          %s338 = ssub.s32 112, 112
          %339 = vsyncadd %s333, %s338
          %s340 = smul.addr %s17, 7
          %s341 = smul.addr %s340, 16
          %s342 = scalar_lea.hbm %s3, %s341
          %s344 = sshll.u32 %s336, 4
          %s345 = int_to_ptr.vmem [resolvable:$true] %s344
          %347 = dma.hbm_to_vmem [thread:$0]  %s342, 112, %s345, %s333
        $region32: #{critic_forward.1} parent=23 // pred_fallthru
          _
        // Predicated region
        $region33: #{critic_forward.1} parent=23 // pred_check
          %p348 = pneg %p131
        $region34: #{critic_forward.1} parent=23 // pred_check_branch
          %350 = sbr.rel (%p348) target = $region36
        $region35: #{critic_forward.1} parent=23 // pred_region
          %s351 = sand.u32 %s17, 1
          %s352 = scalar_lea.sflag [#allocation3], %s351
          %s353 = sand.u32 %s121, 1
          %s354 = smul.addr %s353, 2000
          %s355 = scalar_lea.vmem [#allocation8], %s354
          %s357 = ssub.s32 32000, 32000
          %358 = vsyncadd %s352, %s357
          %s359 = smul.addr %s17, 500
          %s360 = smul.addr %s359, 64
          %s361 = scalar_lea.hbm %s4, %s360
          %s362 = sshll.u32 %s355, 4
          %s363 = int_to_ptr.vmem [resolvable:$true] %s362
          %368 = dma.hbm_to_vmem [thread:$0]  %s361, 32000, %s363, %s352, 320, 320, 20
        $region36: #{critic_forward.1} parent=23 // pred_fallthru
          _
        // Predicated region
        $region37: #{critic_forward.1} parent=23 // pred_check
          %p369 = pneg %p157
        $region38: #{critic_forward.1} parent=23 // pred_check_branch
          %371 = sbr.rel (%p369) target = $region40
        $region39: #{critic_forward.1} parent=23 // pred_region
          %s372 = sand.u32 %s17, 1
          %s373 = scalar_lea.sflag [#allocation3], %s372
          %s374 = sand.u32 %s147, 1
          %s375 = smul.addr %s374, 5
          %s376 = scalar_lea.vmem [#allocation9], %s375
          %s378 = ssub.s32 80, 80
          %379 = vsyncadd %s373, %s378
          %s380 = smul.addr %s17, 5
          %s381 = smul.addr %s380, 16
          %s382 = scalar_lea.hbm %s5, %s381
          %s384 = sshll.u32 %s376, 4
          %s385 = int_to_ptr.vmem [resolvable:$true] %s384
          %387 = dma.hbm_to_vmem [thread:$0]  %s382, 80, %s385, %s373
        $region40: #{critic_forward.1} parent=23 // pred_fallthru
          _
        // Predicated region
        $region41: #{critic_forward.1} parent=23 // pred_check
          %p388 = pneg %p183
        $region42: #{critic_forward.1} parent=23 // pred_check_branch
          %390 = sbr.rel (%p388) target = $region44
        $region43: #{critic_forward.1} parent=23 // pred_region
          %s391 = sand.u32 %s17, 1
          %s392 = scalar_lea.sflag [#allocation3], %s391
          %s393 = sand.u32 %s173, 1
          %s394 = smul.addr %s393, 5
          %s395 = scalar_lea.vmem [#allocation10], %s394
          %s397 = ssub.s32 80, 80
          %398 = vsyncadd %s392, %s397
          %s399 = smul.addr %s17, 5
          %s400 = smul.addr %s399, 16
          %s401 = scalar_lea.hbm %s6, %s400
          %s403 = sshll.u32 %s395, 4
          %s404 = int_to_ptr.vmem [resolvable:$true] %s403
          %406 = dma.hbm_to_vmem [thread:$0]  %s401, 80, %s404, %s392
        $region44: #{critic_forward.1} parent=23 // pred_fallthru
          _
        // Predicated region
        $region45: #{critic_forward.1} parent=23 // pred_check
          %p407 = pneg %p209
        $region46: #{critic_forward.1} parent=23 // pred_check_branch
          %409 = sbr.rel (%p407) target = $region48
        $region47: #{critic_forward.1} parent=23 // pred_region
          %p410 = scmp.lt.s32.totalorder %s17, 1
          %s411 = scalar_select %p410, %s17, 1
          %s412 = smul.addr %s411, 75
          %s413 = smul.addr %s412, 4
          %s414 = scalar_lea.vmem %s7, %s413
        $region48: #{critic_forward.1} parent=23 // pred_fallthru
          _
        // Predicated region
        $region49: #{critic_forward.1} parent=23 // pred_check
          %p415 = pneg %p235
        $region50: #{critic_forward.1} parent=23 // pred_check_branch
          %417 = sbr.rel (%p415) target = $region52
        $region51: #{critic_forward.1} parent=23 // pred_region
          %p418 = scmp.lt.s32.totalorder %s17, 1
          %s419 = scalar_select %p418, %s17, 1
          %s420 = scalar_lea.vmem %s8, %s419
        $region52: #{critic_forward.1} parent=23 // pred_fallthru
          _
      $region24: #{critic_forward.1} parent=5 // pred_fallthru
        _
      %p421 = scmp.le.s32.totalorder 1, %s17
      %p422 = scmp.lt.s32.totalorder %s17, 3
      %p423 = pnand %p421, %p422
      %p424 = pneg %p423
      // Predicated region
      $region53: #{critic_forward.1} parent=5 // pred_check
        _
      $region54: #{critic_forward.1} parent=5 // pred_check_branch
        %426 = sbr.rel (%p423) target = $region56
      $region55: #{critic_forward.1} parent=5 // pred_region
        %s427 = ssub.s32 %s17, 1
        // Predicated region
        $region57: #{critic_forward.1} parent=55 // pred_check
          %p428 = pneg %p38
        $region58: #{critic_forward.1} parent=55 // pred_check_branch
          %430 = sbr.rel (%p428) target = $region60
        $region59: #{critic_forward.1} parent=55 // pred_region
          %431 = dma.done [#allocation3], 32
        $region60: #{critic_forward.1} parent=55 // pred_fallthru
          _
        // Predicated region
        $region61: #{critic_forward.1} parent=55 // pred_check
          %p432 = pneg %p59
        $region62: #{critic_forward.1} parent=55 // pred_check_branch
          %434 = sbr.rel (%p432) target = $region64
        $region63: #{critic_forward.1} parent=55 // pred_region
          %435 = dma.done [#allocation5], 32
        $region64: #{critic_forward.1} parent=55 // pred_fallthru
          _
        %s436 = sand.u32 %s22, 1
        %s437 = scalar_lea.sflag [#allocation3], %s436
        %s438 = sand.u32 %s72, 1
        %s439 = smul.addr %s438, 84
        %s440 = scalar_lea.vmem [#allocation6], %s439
        // Predicated region
        $region65: #{critic_forward.1} parent=55 // pred_check
          %p441 = pneg %p85
        $region66: #{critic_forward.1} parent=55 // pred_check_branch
          %443 = sbr.rel (%p441) target = $region68
        $region67: #{critic_forward.1} parent=55 // pred_region
          %444 = dma.done %s437, 1344
        $region68: #{critic_forward.1} parent=55 // pred_fallthru
          _
        %s445 = sand.u32 %s22, 1
        %s446 = scalar_lea.sflag [#allocation3], %s445
        %s447 = sand.u32 %s98, 1
        %s448 = smul.addr %s447, 7
        %s449 = scalar_lea.vmem [#allocation7], %s448
        // Predicated region
        $region69: #{critic_forward.1} parent=55 // pred_check
          %p450 = pneg %p111
        $region70: #{critic_forward.1} parent=55 // pred_check_branch
          %452 = sbr.rel (%p450) target = $region72
        $region71: #{critic_forward.1} parent=55 // pred_region
          %453 = dma.done %s446, 112
        $region72: #{critic_forward.1} parent=55 // pred_fallthru
          _
        %s454 = sand.u32 %s22, 1
        %s455 = scalar_lea.sflag [#allocation3], %s454
        %s456 = sand.u32 %s124, 1
        %s457 = smul.addr %s456, 2000
        %s458 = scalar_lea.vmem [#allocation8], %s457
        // Predicated region
        $region73: #{critic_forward.1} parent=55 // pred_check
          %p459 = pneg %p137
        $region74: #{critic_forward.1} parent=55 // pred_check_branch
          %461 = sbr.rel (%p459) target = $region76
        $region75: #{critic_forward.1} parent=55 // pred_region
          %462 = dma.done %s455, 32000
        $region76: #{critic_forward.1} parent=55 // pred_fallthru
          _
        %s463 = sand.u32 %s22, 1
        %s464 = scalar_lea.sflag [#allocation3], %s463
        %s465 = sand.u32 %s150, 1
        %s466 = smul.addr %s465, 5
        %s467 = scalar_lea.vmem [#allocation9], %s466
        // Predicated region
        $region77: #{critic_forward.1} parent=55 // pred_check
          %p468 = pneg %p163
        $region78: #{critic_forward.1} parent=55 // pred_check_branch
          %470 = sbr.rel (%p468) target = $region80
        $region79: #{critic_forward.1} parent=55 // pred_region
          %471 = dma.done %s464, 80
        $region80: #{critic_forward.1} parent=55 // pred_fallthru
          _
        %s472 = sand.u32 %s22, 1
        %s473 = scalar_lea.sflag [#allocation3], %s472
        %s474 = sand.u32 %s176, 1
        %s475 = smul.addr %s474, 5
        %s476 = scalar_lea.vmem [#allocation10], %s475
        // Predicated region
        $region81: #{critic_forward.1} parent=55 // pred_check
          %p477 = pneg %p189
        $region82: #{critic_forward.1} parent=55 // pred_check_branch
          %479 = sbr.rel (%p477) target = $region84
        $region83: #{critic_forward.1} parent=55 // pred_region
          %480 = dma.done %s473, 80
        $region84: #{critic_forward.1} parent=55 // pred_fallthru
          _
        %p481 = pneg %p38
        %p482 = pneg %p35
        %p483 = pneg %p59
        %p484 = pneg %p56
        %s485 = sand.u32 %s22, 1
        %s486 = scalar_lea.sflag [#allocation3], %s485
        %s487 = sand.u32 %s72, 1
        %s488 = smul.addr %s487, 84
        %s489 = scalar_lea.vmem [#allocation6], %s488
        %p490 = pneg %p85
        %p491 = pneg %p82
        %s492 = sand.u32 %s22, 1
        %s493 = scalar_lea.sflag [#allocation3], %s492
        %s494 = sand.u32 %s98, 1
        %s495 = smul.addr %s494, 7
        %s496 = scalar_lea.vmem [#allocation7], %s495
        %p497 = pneg %p111
        %p498 = pneg %p108
        %s499 = sand.u32 %s22, 1
        %s500 = scalar_lea.sflag [#allocation3], %s499
        %s501 = sand.u32 %s124, 1
        %s502 = smul.addr %s501, 2000
        %s503 = scalar_lea.vmem [#allocation8], %s502
        %p504 = pneg %p137
        %p505 = pneg %p134
        %s506 = sand.u32 %s22, 1
        %s507 = scalar_lea.sflag [#allocation3], %s506
        %s508 = sand.u32 %s150, 1
        %s509 = smul.addr %s508, 5
        %s510 = scalar_lea.vmem [#allocation9], %s509
        %p511 = pneg %p163
        %p512 = pneg %p160
        %s513 = sand.u32 %s22, 1
        %s514 = scalar_lea.sflag [#allocation3], %s513
        %s515 = sand.u32 %s176, 1
        %s516 = smul.addr %s515, 5
        %s517 = scalar_lea.vmem [#allocation10], %s516
        %p518 = pneg %p189
        %p519 = pneg %p186
        %p520 = scmp.lt.s32.totalorder %s22, 1
        %s521 = scalar_select %p520, %s22, 1
        %s522 = smul.addr %s521, 75
        %s523 = smul.addr %s522, 4
        %s524 = scalar_lea.vmem %s7, %s523
        %p525 = pneg %p215
        %p526 = pneg %p212
        %p527 = scmp.lt.s32.totalorder %s22, 1
        %s528 = scalar_select %p527, %s22, 1
        %s529 = scalar_lea.vmem %s8, %s528
        %p530 = pneg %p241
        %p531 = pneg %p238
        %p532 = pneg %p267
        %p533 = pneg %p264
        %p534 = scmp.lt.s32.totalorder %s22, 1
        %s535 = scalar_select %p534, %s22, 1
        %s536 = smul.addr %s535, 2
        %s537 = scalar_lea.vmem %s9, %s536
        %p538 = scmp.lt.s32.totalorder %s22, 1
        %s539 = scalar_select %p538, %s22, 1
        %s540 = smul.addr %s539, 75
        %s541 = smul.addr %s540, 4
        %s542 = scalar_lea.vmem %s7, %s541
        %p543 = scmp.lt.s32.totalorder %s22, 1
        %s544 = scalar_select %p543, %s22, 1
        %s545 = scalar_lea.vmem %s8, %s544
        %p546 = scmp.lt.s32.totalorder %s22, 1
        %s547 = scalar_select %p546, %s22, 1
        %s548 = smul.addr %s547, 2
        %s549 = scalar_lea.vmem %s9, %s548
        %v550 = vld [vmem:[#allocation2] sm:$0x3]
        %v551 = vld [vmem:[#allocation4] sm:$0x3]
        %v552 = vld [vmem:[%s440] sm:$0xff]
        %v553 = vld [vmem:[%s440 + $0x8] sm:$0xff]
        %v554 = vld [vmem:[%s440 + $0x10] sm:$0xff]
        %v555 = vld [vmem:[%s440 + $0x18] sm:$0xf]
        %v556 = vld [vmem:[%s440 + $0x1c] sm:$0xff]
        %v557 = vld [vmem:[%s440 + $0x24] sm:$0xff]
        %v558 = vld [vmem:[%s440 + $0x2c] sm:$0xff]
        %v559 = vld [vmem:[%s440 + $0x34] sm:$0xf]
        %v560 = vld [vmem:[%s440 + $0x38] sm:$0xff]
        %v561 = vld [vmem:[%s440 + $0x40] sm:$0xff]
        %v562 = vld [vmem:[%s440 + $0x48] sm:$0xff]
        %v563 = vld [vmem:[%s440 + $0x50] sm:$0xf]
        %v564 = vunpack.c.l.bf16 %v552
        %v565 = vunpack.c.h.bf16 %v552
        %v566 = vunpack.c.l.bf16 %v553
        %v567 = vunpack.c.h.bf16 %v553
        %v568 = vunpack.c.l.bf16 %v554
        %v569 = vunpack.c.h.bf16 %v554
        %v570 = vunpack.c.l.bf16 %v555
        %v571 = vunpack.c.l.bf16 %v556
        %v572 = vunpack.c.h.bf16 %v556
        %v573 = vunpack.c.l.bf16 %v557
        %v574 = vunpack.c.h.bf16 %v557
        %v575 = vunpack.c.l.bf16 %v558
        %v576 = vunpack.c.h.bf16 %v558
        %v577 = vunpack.c.l.bf16 %v559
        %v578 = vunpack.c.l.bf16 %v560
        %v579 = vunpack.c.h.bf16 %v560
        %v580 = vunpack.c.l.bf16 %v561
        %v581 = vunpack.c.h.bf16 %v561
        %v582 = vunpack.c.l.bf16 %v562
        %v583 = vunpack.c.h.bf16 %v562
        %v584 = vunpack.c.l.bf16 %v563
        %v585 = vld [vmem:[%s449] sm:$0x7f]
        %v587 = vlaneseq
        %v588 = vshrl.u32 %v587, 7
        %v589 = vsub.s32 0, %v588
        %v590 = vrot.slane %v585, %v589
        %v591 = vlaneseq
        %v592 = vshrl.u32 %v591, 7
        %v593 = vsub.s32 1, %v592
        %v594 = vrot.slane %v585, %v593
        %v595 = vlaneseq
        %v596 = vshrl.u32 %v595, 7
        %v597 = vsub.s32 2, %v596
        %v598 = vrot.slane %v585, %v597
        %v599 = vlaneseq
        %v600 = vshrl.u32 %v599, 7
        %v601 = vsub.s32 3, %v600
        %v602 = vrot.slane %v585, %v601
        %v603 = vlaneseq
        %v604 = vshrl.u32 %v603, 7
        %v605 = vsub.s32 4, %v604
        %v606 = vrot.slane %v585, %v605
        %v607 = vlaneseq
        %v608 = vshrl.u32 %v607, 7
        %v609 = vsub.s32 5, %v608
        %v610 = vrot.slane %v585, %v609
        %v611 = vlaneseq
        %v612 = vshrl.u32 %v611, 7
        %v613 = vsub.s32 6, %v612
        %v614 = vrot.slane %v585, %v613
        %vm622 = vcmask 195584
        %v624 = vsel %vm622, %v550, 0
        %626 = vmatprep.subr.mxu0 %v565
        %627 = vmatpush1.msra.mxu0 %v564
        %628 = vmatprep.subr.mxu0 %v572
        %629 = vmatpush1.msra.mxu0 %v571
        %630 = vmatprep.subr.mxu0 %v579
        %631 = vmatpush1.msra.mxu0 %v578
        %632 = vmatprep.subr.mxu0 0.0
        %633 = vmatpush1.msra.mxu0 0.0
        %634 = vmatprep.subr.mxu0 0.0
        %635 = vmatpush1.msra.mxu0 0.0
        %636 = vmatprep.subr.mxu0 0.0
        %637 = vmatpush1.msra.mxu0 0.0
        %638 = vmatprep.subr.mxu0 0.0
        %639 = vmatpush1.msra.mxu0 0.0
        %640 = vmatprep.subr.mxu0 0.0
        %641 = vmatpush1.msra.mxu0 0.0
        %642 = vmatprep.subr.mxu0 0.0
        %643 = vmatpush1.msra.mxu0 0.0
        %644 = vmatprep.subr.mxu0 0.0
        %645 = vmatpush1.msra.mxu0 0.0
        %646 = vmatprep.subr.mxu0 0.0
        %647 = vmatpush1.msra.mxu0 0.0
        %648 = vmatprep.subr.mxu0 0.0
        %649 = vmatpush1.msra.mxu0 0.0
        %650 = vmatprep.subr.mxu0 0.0
        %651 = vmatpush1.msra.mxu0 0.0
        %652 = vmatprep.subr.mxu0 0.0
        %653 = vmatpush1.msra.mxu0 0.0
        %654 = vmatprep.subr.mxu0 0.0
        %655 = vmatpush1.msra.mxu0 0.0
        %656 = vmatprep.subr.mxu0 0.0
        %657 = vmatpush1.msra.mxu0 0.0
        %658 = vmatprep.subr.mxu0 0.0
        %659 = vmatpush1.msra.mxu0 0.0
        %660 = vmatprep.subr.mxu0 0.0
        %661 = vmatpush1.msra.mxu0 0.0
        %662 = vmatprep.subr.mxu0 0.0
        %663 = vmatpush1.msra.mxu0 0.0
        %664 = vmatprep.subr.mxu0 0.0
        %665 = vmatpush1.msra.mxu0 0.0
        %666 = vmatprep.subr.mxu0 0.0
        %667 = vmatpush1.msra.mxu0 0.0
        %668 = vmatprep.subr.mxu0 0.0
        %669 = vmatpush1.msra.mxu0 0.0
        %670 = vmatprep.subr.mxu0 0.0
        %671 = vmatpush1.msra.mxu0 0.0
        %672 = vmatprep.subr.mxu0 0.0
        %673 = vmatpush1.msra.mxu0 0.0
        %674 = vmatprep.subr.mxu0 0.0
        %675 = vmatpush1.msra.mxu0 0.0
        %676 = vmatprep.subr.mxu0 0.0
        %677 = vmatpush1.msra.mxu0 0.0
        %678 = vmatprep.subr.mxu0 0.0
        %679 = vmatpush1.msra.mxu0 0.0
        %680 = vmatprep.subr.mxu0 0.0
        %681 = vmatpush1.msra.mxu0 0.0
        %682 = vmatprep.subr.mxu0 0.0
        %683 = vmatpush1.msra.mxu0 0.0
        %684 = vmatprep.subr.mxu0 0.0
        %685 = vmatpush1.msra.mxu0 0.0
        %686 = vmatprep.subr.mxu0 0.0
        %687 = vmatpush1.msra.mxu0 0.0
        %688 = vmatprep.subr.mxu0 0.0
        %689 = vmatpush1.msra.mxu0 0.0
        %690 = vmatprep.mubr.f32.mxu0 0.0
        %691 = vmatmul.mubr.f32.gmra.mrb[0].mxu0 %v624
        %v692 = vpop.f32.mrb[0].mxu0
        %v693 = vadd.f32 %v590, %v692
        %v694 = vpop.f32.mrb[0].mxu0
        %v695 = vadd.f32 %v594, %v694
        %696 = vdwg.mxu0
        %697 = vmatprep.subr.mxu0 %v567
        %698 = vmatpush1.msra.mxu0 %v566
        %699 = vmatprep.subr.mxu0 %v574
        %700 = vmatpush1.msra.mxu0 %v573
        %701 = vmatprep.subr.mxu0 %v581
        %702 = vmatpush1.msra.mxu0 %v580
        %703 = vmatprep.subr.mxu0 0.0
        %704 = vmatpush1.msra.mxu0 0.0
        %705 = vmatprep.subr.mxu0 0.0
        %706 = vmatpush1.msra.mxu0 0.0
        %707 = vmatprep.subr.mxu0 0.0
        %708 = vmatpush1.msra.mxu0 0.0
        %709 = vmatprep.subr.mxu0 0.0
        %710 = vmatpush1.msra.mxu0 0.0
        %711 = vmatprep.subr.mxu0 0.0
        %712 = vmatpush1.msra.mxu0 0.0
        %713 = vmatprep.subr.mxu0 0.0
        %714 = vmatpush1.msra.mxu0 0.0
        %715 = vmatprep.subr.mxu0 0.0
        %716 = vmatpush1.msra.mxu0 0.0
        %717 = vmatprep.subr.mxu0 0.0
        %718 = vmatpush1.msra.mxu0 0.0
        %719 = vmatprep.subr.mxu0 0.0
        %720 = vmatpush1.msra.mxu0 0.0
        %721 = vmatprep.subr.mxu0 0.0
        %722 = vmatpush1.msra.mxu0 0.0
        %723 = vmatprep.subr.mxu0 0.0
        %724 = vmatpush1.msra.mxu0 0.0
        %725 = vmatprep.subr.mxu0 0.0
        %726 = vmatpush1.msra.mxu0 0.0
        %727 = vmatprep.subr.mxu0 0.0
        %728 = vmatpush1.msra.mxu0 0.0
        %729 = vmatprep.subr.mxu0 0.0
        %730 = vmatpush1.msra.mxu0 0.0
        %731 = vmatprep.subr.mxu0 0.0
        %732 = vmatpush1.msra.mxu0 0.0
        %733 = vmatprep.subr.mxu0 0.0
        %734 = vmatpush1.msra.mxu0 0.0
        %735 = vmatprep.subr.mxu0 0.0
        %736 = vmatpush1.msra.mxu0 0.0
        %737 = vmatprep.subr.mxu0 0.0
        %738 = vmatpush1.msra.mxu0 0.0
        %739 = vmatprep.subr.mxu0 0.0
        %740 = vmatpush1.msra.mxu0 0.0
        %741 = vmatprep.subr.mxu0 0.0
        %742 = vmatpush1.msra.mxu0 0.0
        %743 = vmatprep.subr.mxu0 0.0
        %744 = vmatpush1.msra.mxu0 0.0
        %745 = vmatprep.subr.mxu0 0.0
        %746 = vmatpush1.msra.mxu0 0.0
        %747 = vmatprep.subr.mxu0 0.0
        %748 = vmatpush1.msra.mxu0 0.0
        %749 = vmatprep.subr.mxu0 0.0
        %750 = vmatpush1.msra.mxu0 0.0
        %751 = vmatprep.subr.mxu0 0.0
        %752 = vmatpush1.msra.mxu0 0.0
        %753 = vmatprep.subr.mxu0 0.0
        %754 = vmatpush1.msra.mxu0 0.0
        %755 = vmatprep.subr.mxu0 0.0
        %756 = vmatpush1.msra.mxu0 0.0
        %757 = vmatprep.subr.mxu0 0.0
        %758 = vmatpush1.msra.mxu0 0.0
        %759 = vmatprep.subr.mxu0 0.0
        %760 = vmatpush1.msra.mxu0 0.0
        %761 = vmatprep.mubr.f32.mxu0 0.0
        %762 = vmatmul.mubr.f32.gmra.mrb[0].mxu0 %v624
        %v763 = vpop.f32.mrb[0].mxu0
        %v764 = vadd.f32 %v598, %v763
        %v765 = vpop.f32.mrb[0].mxu0
        %v766 = vadd.f32 %v602, %v765
        %767 = vdwg.mxu0
        %768 = vmatprep.subr.mxu0 %v569
        %769 = vmatpush1.msra.mxu0 %v568
        %770 = vmatprep.subr.mxu0 %v576
        %771 = vmatpush1.msra.mxu0 %v575
        %772 = vmatprep.subr.mxu0 %v583
        %773 = vmatpush1.msra.mxu0 %v582
        %774 = vmatprep.subr.mxu0 0.0
        %775 = vmatpush1.msra.mxu0 0.0
        %776 = vmatprep.subr.mxu0 0.0
        %777 = vmatpush1.msra.mxu0 0.0
        %778 = vmatprep.subr.mxu0 0.0
        %779 = vmatpush1.msra.mxu0 0.0
        %780 = vmatprep.subr.mxu0 0.0
        %781 = vmatpush1.msra.mxu0 0.0
        %782 = vmatprep.subr.mxu0 0.0
        %783 = vmatpush1.msra.mxu0 0.0
        %784 = vmatprep.subr.mxu0 0.0
        %785 = vmatpush1.msra.mxu0 0.0
        %786 = vmatprep.subr.mxu0 0.0
        %787 = vmatpush1.msra.mxu0 0.0
        %788 = vmatprep.subr.mxu0 0.0
        %789 = vmatpush1.msra.mxu0 0.0
        %790 = vmatprep.subr.mxu0 0.0
        %791 = vmatpush1.msra.mxu0 0.0
        %792 = vmatprep.subr.mxu0 0.0
        %793 = vmatpush1.msra.mxu0 0.0
        %794 = vmatprep.subr.mxu0 0.0
        %795 = vmatpush1.msra.mxu0 0.0
        %796 = vmatprep.subr.mxu0 0.0
        %797 = vmatpush1.msra.mxu0 0.0
        %798 = vmatprep.subr.mxu0 0.0
        %799 = vmatpush1.msra.mxu0 0.0
        %800 = vmatprep.subr.mxu0 0.0
        %801 = vmatpush1.msra.mxu0 0.0
        %802 = vmatprep.subr.mxu0 0.0
        %803 = vmatpush1.msra.mxu0 0.0
        %804 = vmatprep.subr.mxu0 0.0
        %805 = vmatpush1.msra.mxu0 0.0
        %806 = vmatprep.subr.mxu0 0.0
        %807 = vmatpush1.msra.mxu0 0.0
        %808 = vmatprep.subr.mxu0 0.0
        %809 = vmatpush1.msra.mxu0 0.0
        %810 = vmatprep.subr.mxu0 0.0
        %811 = vmatpush1.msra.mxu0 0.0
        %812 = vmatprep.subr.mxu0 0.0
        %813 = vmatpush1.msra.mxu0 0.0
        %814 = vmatprep.subr.mxu0 0.0
        %815 = vmatpush1.msra.mxu0 0.0
        %816 = vmatprep.subr.mxu0 0.0
        %817 = vmatpush1.msra.mxu0 0.0
        %818 = vmatprep.subr.mxu0 0.0
        %819 = vmatpush1.msra.mxu0 0.0
        %820 = vmatprep.subr.mxu0 0.0
        %821 = vmatpush1.msra.mxu0 0.0
        %822 = vmatprep.subr.mxu0 0.0
        %823 = vmatpush1.msra.mxu0 0.0
        %824 = vmatprep.subr.mxu0 0.0
        %825 = vmatpush1.msra.mxu0 0.0
        %826 = vmatprep.subr.mxu0 0.0
        %827 = vmatpush1.msra.mxu0 0.0
        %828 = vmatprep.subr.mxu0 0.0
        %829 = vmatpush1.msra.mxu0 0.0
        %830 = vmatprep.subr.mxu0 0.0
        %831 = vmatpush1.msra.mxu0 0.0
        %832 = vmatprep.mubr.f32.mxu0 0.0
        %833 = vmatmul.mubr.f32.gmra.mrb[0].mxu0 %v624
        %v834 = vpop.f32.mrb[0].mxu0
        %v835 = vadd.f32 %v606, %v834
        %v836 = vpop.f32.mrb[0].mxu0
        %v837 = vadd.f32 %v610, %v836
        %838 = vdwg.mxu0
        %839 = vmatprep.subr.mxu0 0.0
        %840 = vmatpush1.msra.mxu0 %v570
        %841 = vmatprep.subr.mxu0 0.0
        %842 = vmatpush1.msra.mxu0 %v577
        %843 = vmatprep.subr.mxu0 0.0
        %844 = vmatpush1.msra.mxu0 %v584
        %845 = vmatprep.subr.mxu0 0.0
        %846 = vmatpush1.msra.mxu0 0.0
        %847 = vmatprep.subr.mxu0 0.0
        %848 = vmatpush1.msra.mxu0 0.0
        %849 = vmatprep.subr.mxu0 0.0
        %850 = vmatpush1.msra.mxu0 0.0
        %851 = vmatprep.subr.mxu0 0.0
        %852 = vmatpush1.msra.mxu0 0.0
        %853 = vmatprep.subr.mxu0 0.0
        %854 = vmatpush1.msra.mxu0 0.0
        %855 = vmatprep.subr.mxu0 0.0
        %856 = vmatpush1.msra.mxu0 0.0
        %857 = vmatprep.subr.mxu0 0.0
        %858 = vmatpush1.msra.mxu0 0.0
        %859 = vmatprep.subr.mxu0 0.0
        %860 = vmatpush1.msra.mxu0 0.0
        %861 = vmatprep.subr.mxu0 0.0
        %862 = vmatpush1.msra.mxu0 0.0
        %863 = vmatprep.subr.mxu0 0.0
        %864 = vmatpush1.msra.mxu0 0.0
        %865 = vmatprep.subr.mxu0 0.0
        %866 = vmatpush1.msra.mxu0 0.0
        %867 = vmatprep.subr.mxu0 0.0
        %868 = vmatpush1.msra.mxu0 0.0
        %869 = vmatprep.subr.mxu0 0.0
        %870 = vmatpush1.msra.mxu0 0.0
        %871 = vmatprep.subr.mxu0 0.0
        %872 = vmatpush1.msra.mxu0 0.0
        %873 = vmatprep.subr.mxu0 0.0
        %874 = vmatpush1.msra.mxu0 0.0
        %875 = vmatprep.subr.mxu0 0.0
        %876 = vmatpush1.msra.mxu0 0.0
        %877 = vmatprep.subr.mxu0 0.0
        %878 = vmatpush1.msra.mxu0 0.0
        %879 = vmatprep.subr.mxu0 0.0
        %880 = vmatpush1.msra.mxu0 0.0
        %881 = vmatprep.subr.mxu0 0.0
        %882 = vmatpush1.msra.mxu0 0.0
        %883 = vmatprep.subr.mxu0 0.0
        %884 = vmatpush1.msra.mxu0 0.0
        %885 = vmatprep.subr.mxu0 0.0
        %886 = vmatpush1.msra.mxu0 0.0
        %887 = vmatprep.subr.mxu0 0.0
        %888 = vmatpush1.msra.mxu0 0.0
        %889 = vmatprep.subr.mxu0 0.0
        %890 = vmatpush1.msra.mxu0 0.0
        %891 = vmatprep.subr.mxu0 0.0
        %892 = vmatpush1.msra.mxu0 0.0
        %893 = vmatprep.subr.mxu0 0.0
        %894 = vmatpush1.msra.mxu0 0.0
        %895 = vmatprep.subr.mxu0 0.0
        %896 = vmatpush1.msra.mxu0 0.0
        %897 = vmatprep.subr.mxu0 0.0
        %898 = vmatpush1.msra.mxu0 0.0
        %899 = vmatprep.subr.mxu0 0.0
        %900 = vmatpush1.msra.mxu0 0.0
        %901 = vmatprep.subr.mxu0 0.0
        %902 = vmatpush1.msra.mxu0 0.0
        %903 = vmatprep.mubr.f32.mxu0 0.0
        %904 = vmatmul.mubr.f32.gmra.mrb[0].mxu0 %v624
        %v905 = vpop.f32.mrb[0].mxu0
        %v906 = vadd.f32 %v614, %v905
        %v907 = vpop.f32.mrb[0].mxu0
        %908 = vdwg.mxu0
        %v909 = vmax.f32 %v693, 0.0
        %v910 = vmax.f32 %v695, 0.0
        %v911 = vmax.f32 %v764, 0.0
        %v912 = vmax.f32 %v766, 0.0
        %v913 = vmax.f32 %v835, 0.0
        %v914 = vmax.f32 %v837, 0.0
        %v915 = vmax.f32 %v906, 0.0
        %v916 = vld [vmem:[%s458] sm:$0xff]
        %v917 = vld [vmem:[%s458 + $0x8] sm:$0xff]
        %v918 = vld [vmem:[%s458 + $0x10] sm:$0xf]
        %v919 = vld [vmem:[%s458 + $0x14] sm:$0xff]
        %v920 = vld [vmem:[%s458 + $0x1c] sm:$0xff]
        %v921 = vld [vmem:[%s458 + $0x24] sm:$0xf]
        %v922 = vld [vmem:[%s458 + $0x28] sm:$0xff]
        %v923 = vld [vmem:[%s458 + $0x30] sm:$0xff]
        %v924 = vld [vmem:[%s458 + $0x38] sm:$0xf]
        %v925 = vld [vmem:[%s458 + $0x3c] sm:$0xff]
        %v926 = vld [vmem:[%s458 + $0x44] sm:$0xff]
        %v927 = vld [vmem:[%s458 + $0x4c] sm:$0xf]
        %v928 = vld [vmem:[%s458 + $0x50] sm:$0xff]
        %v929 = vld [vmem:[%s458 + $0x58] sm:$0xff]
        %v930 = vld [vmem:[%s458 + $0x60] sm:$0xf]
        %v931 = vld [vmem:[%s458 + $0x64] sm:$0xff]
        %v932 = vld [vmem:[%s458 + $0x6c] sm:$0xff]
        %v933 = vld [vmem:[%s458 + $0x74] sm:$0xf]
        %v934 = vld [vmem:[%s458 + $0x78] sm:$0xff]
        %v935 = vld [vmem:[%s458 + $0x80] sm:$0xff]
        %v936 = vld [vmem:[%s458 + $0x88] sm:$0xf]
        %v937 = vld [vmem:[%s458 + $0x8c] sm:$0xff]
        %v938 = vld [vmem:[%s458 + $0x94] sm:$0xff]
        %v939 = vld [vmem:[%s458 + $0x9c] sm:$0xf]
        %v940 = vld [vmem:[%s458 + $0xa0] sm:$0xff]
        %v941 = vld [vmem:[%s458 + $0xa8] sm:$0xff]
        %v942 = vld [vmem:[%s458 + $0xb0] sm:$0xf]
        %v943 = vld [vmem:[%s458 + $0xb4] sm:$0xff]
        %v944 = vld [vmem:[%s458 + $0xbc] sm:$0xff]
        %v945 = vld [vmem:[%s458 + $0xc4] sm:$0xf]
        %v946 = vld [vmem:[%s458 + $0xc8] sm:$0xff]
        %v947 = vld [vmem:[%s458 + $0xd0] sm:$0xff]
        %v948 = vld [vmem:[%s458 + $0xd8] sm:$0xf]
        %v949 = vld [vmem:[%s458 + $0xdc] sm:$0xff]
        %v950 = vld [vmem:[%s458 + $0xe4] sm:$0xff]
        %v951 = vld [vmem:[%s458 + $0xec] sm:$0xf]
        %v952 = vld [vmem:[%s458 + $0xf0] sm:$0xff]
        %v953 = vld [vmem:[%s458 + $0xf8] sm:$0xff]
        %v954 = vld [vmem:[%s458 + $0x100] sm:$0xf]
        %v955 = vld [vmem:[%s458 + $0x104] sm:$0xff]
        %v956 = vld [vmem:[%s458 + $0x10c] sm:$0xff]
        %v957 = vld [vmem:[%s458 + $0x114] sm:$0xf]
        %v958 = vld [vmem:[%s458 + $0x118] sm:$0xff]
        %v959 = vld [vmem:[%s458 + $0x120] sm:$0xff]
        %v960 = vld [vmem:[%s458 + $0x128] sm:$0xf]
        %v961 = vld [vmem:[%s458 + $0x12c] sm:$0xff]
        %v962 = vld [vmem:[%s458 + $0x134] sm:$0xff]
        %v963 = vld [vmem:[%s458 + $0x13c] sm:$0xf]
        %v964 = vld [vmem:[%s458 + $0x140] sm:$0xff]
        %v965 = vld [vmem:[%s458 + $0x148] sm:$0xff]
        %v966 = vld [vmem:[%s458 + $0x150] sm:$0xf]
        %v967 = vld [vmem:[%s458 + $0x154] sm:$0xff]
        %v968 = vld [vmem:[%s458 + $0x15c] sm:$0xff]
        %v969 = vld [vmem:[%s458 + $0x164] sm:$0xf]
        %v970 = vld [vmem:[%s458 + $0x168] sm:$0xff]
        %v971 = vld [vmem:[%s458 + $0x170] sm:$0xff]
        %v972 = vld [vmem:[%s458 + $0x178] sm:$0xf]
        %v973 = vld [vmem:[%s458 + $0x17c] sm:$0xff]
        %v974 = vld [vmem:[%s458 + $0x184] sm:$0xff]
        %v975 = vld [vmem:[%s458 + $0x18c] sm:$0xf]
        %v976 = vld [vmem:[%s458 + $0x190] sm:$0xff]
        %v977 = vld [vmem:[%s458 + $0x198] sm:$0xff]
        %v978 = vld [vmem:[%s458 + $0x1a0] sm:$0xf]
        %v979 = vld [vmem:[%s458 + $0x1a4] sm:$0xff]
        %v980 = vld [vmem:[%s458 + $0x1ac] sm:$0xff]
        %v981 = vld [vmem:[%s458 + $0x1b4] sm:$0xf]
        %v982 = vld [vmem:[%s458 + $0x1b8] sm:$0xff]
        %v983 = vld [vmem:[%s458 + $0x1c0] sm:$0xff]
        %v984 = vld [vmem:[%s458 + $0x1c8] sm:$0xf]
        %v985 = vld [vmem:[%s458 + $0x1cc] sm:$0xff]
        %v986 = vld [vmem:[%s458 + $0x1d4] sm:$0xff]
        %v987 = vld [vmem:[%s458 + $0x1dc] sm:$0xf]
        %v988 = vld [vmem:[%s458 + $0x1e0] sm:$0xff]
        %v989 = vld [vmem:[%s458 + $0x1e8] sm:$0xff]
        %v990 = vld [vmem:[%s458 + $0x1f0] sm:$0xf]
        %v991 = vld [vmem:[%s458 + $0x1f4] sm:$0xff]
        %v992 = vld [vmem:[%s458 + $0x1fc] sm:$0xff]
        %v993 = vld [vmem:[%s458 + $0x204] sm:$0xf]
        %v994 = vld [vmem:[%s458 + $0x208] sm:$0xff]
        %v995 = vld [vmem:[%s458 + $0x210] sm:$0xff]
        %v996 = vld [vmem:[%s458 + $0x218] sm:$0xf]
        %v997 = vld [vmem:[%s458 + $0x21c] sm:$0xff]
        %v998 = vld [vmem:[%s458 + $0x224] sm:$0xff]
        %v999 = vld [vmem:[%s458 + $0x22c] sm:$0xf]
        %v1000 = vld [vmem:[%s458 + $0x230] sm:$0xff]
        %v1001 = vld [vmem:[%s458 + $0x238] sm:$0xff]
        %v1002 = vld [vmem:[%s458 + $0x240] sm:$0xf]
        %v1003 = vld [vmem:[%s458 + $0x244] sm:$0xff]
        %v1004 = vld [vmem:[%s458 + $0x24c] sm:$0xff]
        %v1005 = vld [vmem:[%s458 + $0x254] sm:$0xf]
        %v1006 = vld [vmem:[%s458 + $0x258] sm:$0xff]
        %v1007 = vld [vmem:[%s458 + $0x260] sm:$0xff]
        %v1008 = vld [vmem:[%s458 + $0x268] sm:$0xf]
        %v1009 = vld [vmem:[%s458 + $0x26c] sm:$0xff]
        %v1010 = vld [vmem:[%s458 + $0x274] sm:$0xff]
        %v1011 = vld [vmem:[%s458 + $0x27c] sm:$0xf]
        %v1012 = vld [vmem:[%s458 + $0x280] sm:$0xff]
        %v1013 = vld [vmem:[%s458 + $0x288] sm:$0xff]
        %v1014 = vld [vmem:[%s458 + $0x290] sm:$0xf]
        %v1015 = vld [vmem:[%s458 + $0x294] sm:$0xff]
        %v1016 = vld [vmem:[%s458 + $0x29c] sm:$0xff]
        %v1017 = vld [vmem:[%s458 + $0x2a4] sm:$0xf]
        %v1018 = vld [vmem:[%s458 + $0x2a8] sm:$0xff]
        %v1019 = vld [vmem:[%s458 + $0x2b0] sm:$0xff]
        %v1020 = vld [vmem:[%s458 + $0x2b8] sm:$0xf]
        %v1021 = vld [vmem:[%s458 + $0x2bc] sm:$0xff]
        %v1022 = vld [vmem:[%s458 + $0x2c4] sm:$0xff]
        %v1023 = vld [vmem:[%s458 + $0x2cc] sm:$0xf]
        %v1024 = vld [vmem:[%s458 + $0x2d0] sm:$0xff]
        %v1025 = vld [vmem:[%s458 + $0x2d8] sm:$0xff]
        %v1026 = vld [vmem:[%s458 + $0x2e0] sm:$0xf]
        %v1027 = vld [vmem:[%s458 + $0x2e4] sm:$0xff]
        %v1028 = vld [vmem:[%s458 + $0x2ec] sm:$0xff]
        %v1029 = vld [vmem:[%s458 + $0x2f4] sm:$0xf]
        %v1030 = vld [vmem:[%s458 + $0x2f8] sm:$0xff]
        %v1031 = vld [vmem:[%s458 + $0x300] sm:$0xff]
        %v1032 = vld [vmem:[%s458 + $0x308] sm:$0xf]
        %v1033 = vld [vmem:[%s458 + $0x30c] sm:$0xff]
        %v1034 = vld [vmem:[%s458 + $0x314] sm:$0xff]
        %v1035 = vld [vmem:[%s458 + $0x31c] sm:$0xf]
        %v1036 = vld [vmem:[%s458 + $0x320] sm:$0xff]
        %v1037 = vld [vmem:[%s458 + $0x328] sm:$0xff]
        %v1038 = vld [vmem:[%s458 + $0x330] sm:$0xf]
        %v1039 = vld [vmem:[%s458 + $0x334] sm:$0xff]
        %v1040 = vld [vmem:[%s458 + $0x33c] sm:$0xff]
        %v1041 = vld [vmem:[%s458 + $0x344] sm:$0xf]
        %v1042 = vld [vmem:[%s458 + $0x348] sm:$0xff]
        %v1043 = vld [vmem:[%s458 + $0x350] sm:$0xff]
        %v1044 = vld [vmem:[%s458 + $0x358] sm:$0xf]
        %v1045 = vld [vmem:[%s458 + $0x35c] sm:$0xff]
        %v1046 = vld [vmem:[%s458 + $0x364] sm:$0xff]
        %v1047 = vld [vmem:[%s458 + $0x36c] sm:$0xf]
        %v1048 = vld [vmem:[%s458 + $0x370] sm:$0xff]
        %v1049 = vld [vmem:[%s458 + $0x378] sm:$0xff]
        %v1050 = vld [vmem:[%s458 + $0x380] sm:$0xf]
        %v1051 = vld [vmem:[%s458 + $0x384] sm:$0xff]
        %v1052 = vld [vmem:[%s458 + $0x38c] sm:$0xff]
        %v1053 = vld [vmem:[%s458 + $0x394] sm:$0xf]
        %v1054 = vld [vmem:[%s458 + $0x398] sm:$0xff]
        %v1055 = vld [vmem:[%s458 + $0x3a0] sm:$0xff]
        %v1056 = vld [vmem:[%s458 + $0x3a8] sm:$0xf]
        %v1057 = vld [vmem:[%s458 + $0x3ac] sm:$0xff]
        %v1058 = vld [vmem:[%s458 + $0x3b4] sm:$0xff]
        %v1059 = vld [vmem:[%s458 + $0x3bc] sm:$0xf]
        %v1060 = vld [vmem:[%s458 + $0x3c0] sm:$0xff]
        %v1061 = vld [vmem:[%s458 + $0x3c8] sm:$0xff]
        %v1062 = vld [vmem:[%s458 + $0x3d0] sm:$0xf]
        %v1063 = vld [vmem:[%s458 + $0x3d4] sm:$0xff]
        %v1064 = vld [vmem:[%s458 + $0x3dc] sm:$0xff]
        %v1065 = vld [vmem:[%s458 + $0x3e4] sm:$0xf]
        %v1066 = vld [vmem:[%s458 + $0x3e8] sm:$0xff]
        %v1067 = vld [vmem:[%s458 + $0x3f0] sm:$0xff]
        %v1068 = vld [vmem:[%s458 + $0x3f8] sm:$0xf]
        %v1069 = vld [vmem:[%s458 + $0x3fc] sm:$0xff]
        %v1070 = vld [vmem:[%s458 + $0x404] sm:$0xff]
        %v1071 = vld [vmem:[%s458 + $0x40c] sm:$0xf]
        %v1072 = vld [vmem:[%s458 + $0x410] sm:$0xff]
        %v1073 = vld [vmem:[%s458 + $0x418] sm:$0xff]
        %v1074 = vld [vmem:[%s458 + $0x420] sm:$0xf]
        %v1075 = vld [vmem:[%s458 + $0x424] sm:$0xff]
        %v1076 = vld [vmem:[%s458 + $0x42c] sm:$0xff]
        %v1077 = vld [vmem:[%s458 + $0x434] sm:$0xf]
        %v1078 = vld [vmem:[%s458 + $0x438] sm:$0xff]
        %v1079 = vld [vmem:[%s458 + $0x440] sm:$0xff]
        %v1080 = vld [vmem:[%s458 + $0x448] sm:$0xf]
        %v1081 = vld [vmem:[%s458 + $0x44c] sm:$0xff]
        %v1082 = vld [vmem:[%s458 + $0x454] sm:$0xff]
        %v1083 = vld [vmem:[%s458 + $0x45c] sm:$0xf]
        %v1084 = vld [vmem:[%s458 + $0x460] sm:$0xff]
        %v1085 = vld [vmem:[%s458 + $0x468] sm:$0xff]
        %v1086 = vld [vmem:[%s458 + $0x470] sm:$0xf]
        %v1087 = vld [vmem:[%s458 + $0x474] sm:$0xff]
        %v1088 = vld [vmem:[%s458 + $0x47c] sm:$0xff]
        %v1089 = vld [vmem:[%s458 + $0x484] sm:$0xf]
        %v1090 = vld [vmem:[%s458 + $0x488] sm:$0xff]
        %v1091 = vld [vmem:[%s458 + $0x490] sm:$0xff]
        %v1092 = vld [vmem:[%s458 + $0x498] sm:$0xf]
        %v1093 = vld [vmem:[%s458 + $0x49c] sm:$0xff]
        %v1094 = vld [vmem:[%s458 + $0x4a4] sm:$0xff]
        %v1095 = vld [vmem:[%s458 + $0x4ac] sm:$0xf]
        %v1096 = vld [vmem:[%s458 + $0x4b0] sm:$0xff]
        %v1097 = vld [vmem:[%s458 + $0x4b8] sm:$0xff]
        %v1098 = vld [vmem:[%s458 + $0x4c0] sm:$0xf]
        %v1099 = vld [vmem:[%s458 + $0x4c4] sm:$0xff]
        %v1100 = vld [vmem:[%s458 + $0x4cc] sm:$0xff]
        %v1101 = vld [vmem:[%s458 + $0x4d4] sm:$0xf]
        %v1102 = vld [vmem:[%s458 + $0x4d8] sm:$0xff]
        %v1103 = vld [vmem:[%s458 + $0x4e0] sm:$0xff]
        %v1104 = vld [vmem:[%s458 + $0x4e8] sm:$0xf]
        %v1105 = vld [vmem:[%s458 + $0x4ec] sm:$0xff]
        %v1106 = vld [vmem:[%s458 + $0x4f4] sm:$0xff]
        %v1107 = vld [vmem:[%s458 + $0x4fc] sm:$0xf]
        %v1108 = vld [vmem:[%s458 + $0x500] sm:$0xff]
        %v1109 = vld [vmem:[%s458 + $0x508] sm:$0xff]
        %v1110 = vld [vmem:[%s458 + $0x510] sm:$0xf]
        %v1111 = vld [vmem:[%s458 + $0x514] sm:$0xff]
        %v1112 = vld [vmem:[%s458 + $0x51c] sm:$0xff]
        %v1113 = vld [vmem:[%s458 + $0x524] sm:$0xf]
        %v1114 = vld [vmem:[%s458 + $0x528] sm:$0xff]
        %v1115 = vld [vmem:[%s458 + $0x530] sm:$0xff]
        %v1116 = vld [vmem:[%s458 + $0x538] sm:$0xf]
        %v1117 = vld [vmem:[%s458 + $0x53c] sm:$0xff]
        %v1118 = vld [vmem:[%s458 + $0x544] sm:$0xff]
        %v1119 = vld [vmem:[%s458 + $0x54c] sm:$0xf]
        %v1120 = vld [vmem:[%s458 + $0x550] sm:$0xff]
        %v1121 = vld [vmem:[%s458 + $0x558] sm:$0xff]
        %v1122 = vld [vmem:[%s458 + $0x560] sm:$0xf]
        %v1123 = vld [vmem:[%s458 + $0x564] sm:$0xff]
        %v1124 = vld [vmem:[%s458 + $0x56c] sm:$0xff]
        %v1125 = vld [vmem:[%s458 + $0x574] sm:$0xf]
        %v1126 = vld [vmem:[%s458 + $0x578] sm:$0xff]
        %v1127 = vld [vmem:[%s458 + $0x580] sm:$0xff]
        %v1128 = vld [vmem:[%s458 + $0x588] sm:$0xf]
        %v1129 = vld [vmem:[%s458 + $0x58c] sm:$0xff]
        %v1130 = vld [vmem:[%s458 + $0x594] sm:$0xff]
        %v1131 = vld [vmem:[%s458 + $0x59c] sm:$0xf]
        %v1132 = vld [vmem:[%s458 + $0x5a0] sm:$0xff]
        %v1133 = vld [vmem:[%s458 + $0x5a8] sm:$0xff]
        %v1134 = vld [vmem:[%s458 + $0x5b0] sm:$0xf]
        %v1135 = vld [vmem:[%s458 + $0x5b4] sm:$0xff]
        %v1136 = vld [vmem:[%s458 + $0x5bc] sm:$0xff]
        %v1137 = vld [vmem:[%s458 + $0x5c4] sm:$0xf]
        %v1138 = vld [vmem:[%s458 + $0x5c8] sm:$0xff]
        %v1139 = vld [vmem:[%s458 + $0x5d0] sm:$0xff]
        %v1140 = vld [vmem:[%s458 + $0x5d8] sm:$0xf]
        %v1141 = vld [vmem:[%s458 + $0x5dc] sm:$0xff]
        %v1142 = vld [vmem:[%s458 + $0x5e4] sm:$0xff]
        %v1143 = vld [vmem:[%s458 + $0x5ec] sm:$0xf]
        %v1144 = vld [vmem:[%s458 + $0x5f0] sm:$0xff]
        %v1145 = vld [vmem:[%s458 + $0x5f8] sm:$0xff]
        %v1146 = vld [vmem:[%s458 + $0x600] sm:$0xf]
        %v1147 = vld [vmem:[%s458 + $0x604] sm:$0xff]
        %v1148 = vld [vmem:[%s458 + $0x60c] sm:$0xff]
        %v1149 = vld [vmem:[%s458 + $0x614] sm:$0xf]
        %v1150 = vld [vmem:[%s458 + $0x618] sm:$0xff]
        %v1151 = vld [vmem:[%s458 + $0x620] sm:$0xff]
        %v1152 = vld [vmem:[%s458 + $0x628] sm:$0xf]
        %v1153 = vld [vmem:[%s458 + $0x62c] sm:$0xff]
        %v1154 = vld [vmem:[%s458 + $0x634] sm:$0xff]
        %v1155 = vld [vmem:[%s458 + $0x63c] sm:$0xf]
        %v1156 = vld [vmem:[%s458 + $0x640] sm:$0xff]
        %v1157 = vld [vmem:[%s458 + $0x648] sm:$0xff]
        %v1158 = vld [vmem:[%s458 + $0x650] sm:$0xf]
        %v1159 = vld [vmem:[%s458 + $0x654] sm:$0xff]
        %v1160 = vld [vmem:[%s458 + $0x65c] sm:$0xff]
        %v1161 = vld [vmem:[%s458 + $0x664] sm:$0xf]
        %v1162 = vld [vmem:[%s458 + $0x668] sm:$0xff]
        %v1163 = vld [vmem:[%s458 + $0x670] sm:$0xff]
        %v1164 = vld [vmem:[%s458 + $0x678] sm:$0xf]
        %v1165 = vld [vmem:[%s458 + $0x67c] sm:$0xff]
        %v1166 = vld [vmem:[%s458 + $0x684] sm:$0xff]
        %v1167 = vld [vmem:[%s458 + $0x68c] sm:$0xf]
        %v1168 = vld [vmem:[%s458 + $0x690] sm:$0xff]
        %v1169 = vld [vmem:[%s458 + $0x698] sm:$0xff]
        %v1170 = vld [vmem:[%s458 + $0x6a0] sm:$0xf]
        %v1171 = vld [vmem:[%s458 + $0x6a4] sm:$0xff]
        %v1172 = vld [vmem:[%s458 + $0x6ac] sm:$0xff]
        %v1173 = vld [vmem:[%s458 + $0x6b4] sm:$0xf]
        %v1174 = vld [vmem:[%s458 + $0x6b8] sm:$0xff]
        %v1175 = vld [vmem:[%s458 + $0x6c0] sm:$0xff]
        %v1176 = vld [vmem:[%s458 + $0x6c8] sm:$0xf]
        %v1177 = vld [vmem:[%s458 + $0x6cc] sm:$0xff]
        %v1178 = vld [vmem:[%s458 + $0x6d4] sm:$0xff]
        %v1179 = vld [vmem:[%s458 + $0x6dc] sm:$0xf]
        %v1180 = vld [vmem:[%s458 + $0x6e0] sm:$0xff]
        %v1181 = vld [vmem:[%s458 + $0x6e8] sm:$0xff]
        %v1182 = vld [vmem:[%s458 + $0x6f0] sm:$0xf]
        %v1183 = vld [vmem:[%s458 + $0x6f4] sm:$0xff]
        %v1184 = vld [vmem:[%s458 + $0x6fc] sm:$0xff]
        %v1185 = vld [vmem:[%s458 + $0x704] sm:$0xf]
        %v1186 = vld [vmem:[%s458 + $0x708] sm:$0xff]
        %v1187 = vld [vmem:[%s458 + $0x710] sm:$0xff]
        %v1188 = vld [vmem:[%s458 + $0x718] sm:$0xf]
        %v1189 = vld [vmem:[%s458 + $0x71c] sm:$0xff]
        %v1190 = vld [vmem:[%s458 + $0x724] sm:$0xff]
        %v1191 = vld [vmem:[%s458 + $0x72c] sm:$0xf]
        %v1192 = vld [vmem:[%s458 + $0x730] sm:$0xff]
        %v1193 = vld [vmem:[%s458 + $0x738] sm:$0xff]
        %v1194 = vld [vmem:[%s458 + $0x740] sm:$0xf]
        %v1195 = vld [vmem:[%s458 + $0x744] sm:$0xff]
        %v1196 = vld [vmem:[%s458 + $0x74c] sm:$0xff]
        %v1197 = vld [vmem:[%s458 + $0x754] sm:$0xf]
        %v1198 = vld [vmem:[%s458 + $0x758] sm:$0xff]
        %v1199 = vld [vmem:[%s458 + $0x760] sm:$0xff]
        %v1200 = vld [vmem:[%s458 + $0x768] sm:$0xf]
        %v1201 = vld [vmem:[%s458 + $0x76c] sm:$0xff]
        %v1202 = vld [vmem:[%s458 + $0x774] sm:$0xff]
        %v1203 = vld [vmem:[%s458 + $0x77c] sm:$0xf]
        %v1204 = vld [vmem:[%s458 + $0x780] sm:$0xff]
        %v1205 = vld [vmem:[%s458 + $0x788] sm:$0xff]
        %v1206 = vld [vmem:[%s458 + $0x790] sm:$0xf]
        %v1207 = vld [vmem:[%s458 + $0x794] sm:$0xff]
        %v1208 = vld [vmem:[%s458 + $0x79c] sm:$0xff]
        %v1209 = vld [vmem:[%s458 + $0x7a4] sm:$0xf]
        %v1210 = vld [vmem:[%s458 + $0x7a8] sm:$0xff]
        %v1211 = vld [vmem:[%s458 + $0x7b0] sm:$0xff]
        %v1212 = vld [vmem:[%s458 + $0x7b8] sm:$0xf]
        %v1213 = vld [vmem:[%s458 + $0x7bc] sm:$0xff]
        %v1214 = vld [vmem:[%s458 + $0x7c4] sm:$0xff]
        %v1215 = vld [vmem:[%s458 + $0x7cc] sm:$0xf]
        %v1216 = vunpack.c.l.bf16 %v916
        %v1217 = vunpack.c.h.bf16 %v916
        %v1218 = vunpack.c.l.bf16 %v917
        %v1219 = vunpack.c.h.bf16 %v917
        %v1220 = vunpack.c.l.bf16 %v918
        %v1221 = vunpack.c.l.bf16 %v919
        %v1222 = vunpack.c.h.bf16 %v919
        %v1223 = vunpack.c.l.bf16 %v920
        %v1224 = vunpack.c.h.bf16 %v920
        %v1225 = vunpack.c.l.bf16 %v921
        %v1226 = vunpack.c.l.bf16 %v922
        %v1227 = vunpack.c.h.bf16 %v922
        %v1228 = vunpack.c.l.bf16 %v923
        %v1229 = vunpack.c.h.bf16 %v923
        %v1230 = vunpack.c.l.bf16 %v924
        %v1231 = vunpack.c.l.bf16 %v925
        %v1232 = vunpack.c.h.bf16 %v925
        %v1233 = vunpack.c.l.bf16 %v926
        %v1234 = vunpack.c.h.bf16 %v926
        %v1235 = vunpack.c.l.bf16 %v927
        %v1236 = vunpack.c.l.bf16 %v928
        %v1237 = vunpack.c.h.bf16 %v928
        %v1238 = vunpack.c.l.bf16 %v929
        %v1239 = vunpack.c.h.bf16 %v929
        %v1240 = vunpack.c.l.bf16 %v930
        %v1241 = vunpack.c.l.bf16 %v931
        %v1242 = vunpack.c.h.bf16 %v931
        %v1243 = vunpack.c.l.bf16 %v932
        %v1244 = vunpack.c.h.bf16 %v932
        %v1245 = vunpack.c.l.bf16 %v933
        %v1246 = vunpack.c.l.bf16 %v934
        %v1247 = vunpack.c.h.bf16 %v934
        %v1248 = vunpack.c.l.bf16 %v935
        %v1249 = vunpack.c.h.bf16 %v935
        %v1250 = vunpack.c.l.bf16 %v936
        %v1251 = vunpack.c.l.bf16 %v937
        %v1252 = vunpack.c.h.bf16 %v937
        %v1253 = vunpack.c.l.bf16 %v938
        %v1254 = vunpack.c.h.bf16 %v938
        %v1255 = vunpack.c.l.bf16 %v939
        %v1256 = vunpack.c.l.bf16 %v940
        %v1257 = vunpack.c.h.bf16 %v940
        %v1258 = vunpack.c.l.bf16 %v941
        %v1259 = vunpack.c.h.bf16 %v941
        %v1260 = vunpack.c.l.bf16 %v942
        %v1261 = vunpack.c.l.bf16 %v943
        %v1262 = vunpack.c.h.bf16 %v943
        %v1263 = vunpack.c.l.bf16 %v944
        %v1264 = vunpack.c.h.bf16 %v944
        %v1265 = vunpack.c.l.bf16 %v945
        %v1266 = vunpack.c.l.bf16 %v946
        %v1267 = vunpack.c.h.bf16 %v946
        %v1268 = vunpack.c.l.bf16 %v947
        %v1269 = vunpack.c.h.bf16 %v947
        %v1270 = vunpack.c.l.bf16 %v948
        %v1271 = vunpack.c.l.bf16 %v949
        %v1272 = vunpack.c.h.bf16 %v949
        %v1273 = vunpack.c.l.bf16 %v950
        %v1274 = vunpack.c.h.bf16 %v950
        %v1275 = vunpack.c.l.bf16 %v951
        %v1276 = vunpack.c.l.bf16 %v952
        %v1277 = vunpack.c.h.bf16 %v952
        %v1278 = vunpack.c.l.bf16 %v953
        %v1279 = vunpack.c.h.bf16 %v953
        %v1280 = vunpack.c.l.bf16 %v954
        %v1281 = vunpack.c.l.bf16 %v955
        %v1282 = vunpack.c.h.bf16 %v955
        %v1283 = vunpack.c.l.bf16 %v956
        %v1284 = vunpack.c.h.bf16 %v956
        %v1285 = vunpack.c.l.bf16 %v957
        %v1286 = vunpack.c.l.bf16 %v958
        %v1287 = vunpack.c.h.bf16 %v958
        %v1288 = vunpack.c.l.bf16 %v959
        %v1289 = vunpack.c.h.bf16 %v959
        %v1290 = vunpack.c.l.bf16 %v960
        %v1291 = vunpack.c.l.bf16 %v961
        %v1292 = vunpack.c.h.bf16 %v961
        %v1293 = vunpack.c.l.bf16 %v962
        %v1294 = vunpack.c.h.bf16 %v962
        %v1295 = vunpack.c.l.bf16 %v963
        %v1296 = vunpack.c.l.bf16 %v964
        %v1297 = vunpack.c.h.bf16 %v964
        %v1298 = vunpack.c.l.bf16 %v965
        %v1299 = vunpack.c.h.bf16 %v965
        %v1300 = vunpack.c.l.bf16 %v966
        %v1301 = vunpack.c.l.bf16 %v967
        %v1302 = vunpack.c.h.bf16 %v967
        %v1303 = vunpack.c.l.bf16 %v968
        %v1304 = vunpack.c.h.bf16 %v968
        %v1305 = vunpack.c.l.bf16 %v969
        %v1306 = vunpack.c.l.bf16 %v970
        %v1307 = vunpack.c.h.bf16 %v970
        %v1308 = vunpack.c.l.bf16 %v971
        %v1309 = vunpack.c.h.bf16 %v971
        %v1310 = vunpack.c.l.bf16 %v972
        %v1311 = vunpack.c.l.bf16 %v973
        %v1312 = vunpack.c.h.bf16 %v973
        %v1313 = vunpack.c.l.bf16 %v974
        %v1314 = vunpack.c.h.bf16 %v974
        %v1315 = vunpack.c.l.bf16 %v975
        %v1316 = vunpack.c.l.bf16 %v976
        %v1317 = vunpack.c.h.bf16 %v976
        %v1318 = vunpack.c.l.bf16 %v977
        %v1319 = vunpack.c.h.bf16 %v977
        %v1320 = vunpack.c.l.bf16 %v978
        %v1321 = vunpack.c.l.bf16 %v979
        %v1322 = vunpack.c.h.bf16 %v979
        %v1323 = vunpack.c.l.bf16 %v980
        %v1324 = vunpack.c.h.bf16 %v980
        %v1325 = vunpack.c.l.bf16 %v981
        %v1326 = vunpack.c.l.bf16 %v982
        %v1327 = vunpack.c.h.bf16 %v982
        %v1328 = vunpack.c.l.bf16 %v983
        %v1329 = vunpack.c.h.bf16 %v983
        %v1330 = vunpack.c.l.bf16 %v984
        %v1331 = vunpack.c.l.bf16 %v985
        %v1332 = vunpack.c.h.bf16 %v985
        %v1333 = vunpack.c.l.bf16 %v986
        %v1334 = vunpack.c.h.bf16 %v986
        %v1335 = vunpack.c.l.bf16 %v987
        %v1336 = vunpack.c.l.bf16 %v988
        %v1337 = vunpack.c.h.bf16 %v988
        %v1338 = vunpack.c.l.bf16 %v989
        %v1339 = vunpack.c.h.bf16 %v989
        %v1340 = vunpack.c.l.bf16 %v990
        %v1341 = vunpack.c.l.bf16 %v991
        %v1342 = vunpack.c.h.bf16 %v991
        %v1343 = vunpack.c.l.bf16 %v992
        %v1344 = vunpack.c.h.bf16 %v992
        %v1345 = vunpack.c.l.bf16 %v993
        %v1346 = vunpack.c.l.bf16 %v994
        %v1347 = vunpack.c.h.bf16 %v994
        %v1348 = vunpack.c.l.bf16 %v995
        %v1349 = vunpack.c.h.bf16 %v995
        %v1350 = vunpack.c.l.bf16 %v996
        %v1351 = vunpack.c.l.bf16 %v997
        %v1352 = vunpack.c.h.bf16 %v997
        %v1353 = vunpack.c.l.bf16 %v998
        %v1354 = vunpack.c.h.bf16 %v998
        %v1355 = vunpack.c.l.bf16 %v999
        %v1356 = vunpack.c.l.bf16 %v1000
        %v1357 = vunpack.c.h.bf16 %v1000
        %v1358 = vunpack.c.l.bf16 %v1001
        %v1359 = vunpack.c.h.bf16 %v1001
        %v1360 = vunpack.c.l.bf16 %v1002
        %v1361 = vunpack.c.l.bf16 %v1003
        %v1362 = vunpack.c.h.bf16 %v1003
        %v1363 = vunpack.c.l.bf16 %v1004
        %v1364 = vunpack.c.h.bf16 %v1004
        %v1365 = vunpack.c.l.bf16 %v1005
        %v1366 = vunpack.c.l.bf16 %v1006
        %v1367 = vunpack.c.h.bf16 %v1006
        %v1368 = vunpack.c.l.bf16 %v1007
        %v1369 = vunpack.c.h.bf16 %v1007
        %v1370 = vunpack.c.l.bf16 %v1008
        %v1371 = vunpack.c.l.bf16 %v1009
        %v1372 = vunpack.c.h.bf16 %v1009
        %v1373 = vunpack.c.l.bf16 %v1010
        %v1374 = vunpack.c.h.bf16 %v1010
        %v1375 = vunpack.c.l.bf16 %v1011
        %v1376 = vunpack.c.l.bf16 %v1012
        %v1377 = vunpack.c.h.bf16 %v1012
        %v1378 = vunpack.c.l.bf16 %v1013
        %v1379 = vunpack.c.h.bf16 %v1013
        %v1380 = vunpack.c.l.bf16 %v1014
        %v1381 = vunpack.c.l.bf16 %v1015
        %v1382 = vunpack.c.h.bf16 %v1015
        %v1383 = vunpack.c.l.bf16 %v1016
        %v1384 = vunpack.c.h.bf16 %v1016
        %v1385 = vunpack.c.l.bf16 %v1017
        %v1386 = vunpack.c.l.bf16 %v1018
        %v1387 = vunpack.c.h.bf16 %v1018
        %v1388 = vunpack.c.l.bf16 %v1019
        %v1389 = vunpack.c.h.bf16 %v1019
        %v1390 = vunpack.c.l.bf16 %v1020
        %v1391 = vunpack.c.l.bf16 %v1021
        %v1392 = vunpack.c.h.bf16 %v1021
        %v1393 = vunpack.c.l.bf16 %v1022
        %v1394 = vunpack.c.h.bf16 %v1022
        %v1395 = vunpack.c.l.bf16 %v1023
        %v1396 = vunpack.c.l.bf16 %v1024
        %v1397 = vunpack.c.h.bf16 %v1024
        %v1398 = vunpack.c.l.bf16 %v1025
        %v1399 = vunpack.c.h.bf16 %v1025
        %v1400 = vunpack.c.l.bf16 %v1026
        %v1401 = vunpack.c.l.bf16 %v1027
        %v1402 = vunpack.c.h.bf16 %v1027
        %v1403 = vunpack.c.l.bf16 %v1028
        %v1404 = vunpack.c.h.bf16 %v1028
        %v1405 = vunpack.c.l.bf16 %v1029
        %v1406 = vunpack.c.l.bf16 %v1030
        %v1407 = vunpack.c.h.bf16 %v1030
        %v1408 = vunpack.c.l.bf16 %v1031
        %v1409 = vunpack.c.h.bf16 %v1031
        %v1410 = vunpack.c.l.bf16 %v1032
        %v1411 = vunpack.c.l.bf16 %v1033
        %v1412 = vunpack.c.h.bf16 %v1033
        %v1413 = vunpack.c.l.bf16 %v1034
        %v1414 = vunpack.c.h.bf16 %v1034
        %v1415 = vunpack.c.l.bf16 %v1035
        %v1416 = vunpack.c.l.bf16 %v1036
        %v1417 = vunpack.c.h.bf16 %v1036
        %v1418 = vunpack.c.l.bf16 %v1037
        %v1419 = vunpack.c.h.bf16 %v1037
        %v1420 = vunpack.c.l.bf16 %v1038
        %v1421 = vunpack.c.l.bf16 %v1039
        %v1422 = vunpack.c.h.bf16 %v1039
        %v1423 = vunpack.c.l.bf16 %v1040
        %v1424 = vunpack.c.h.bf16 %v1040
        %v1425 = vunpack.c.l.bf16 %v1041
        %v1426 = vunpack.c.l.bf16 %v1042
        %v1427 = vunpack.c.h.bf16 %v1042
        %v1428 = vunpack.c.l.bf16 %v1043
        %v1429 = vunpack.c.h.bf16 %v1043
        %v1430 = vunpack.c.l.bf16 %v1044
        %v1431 = vunpack.c.l.bf16 %v1045
        %v1432 = vunpack.c.h.bf16 %v1045
        %v1433 = vunpack.c.l.bf16 %v1046
        %v1434 = vunpack.c.h.bf16 %v1046
        %v1435 = vunpack.c.l.bf16 %v1047
        %v1436 = vunpack.c.l.bf16 %v1048
        %v1437 = vunpack.c.h.bf16 %v1048
        %v1438 = vunpack.c.l.bf16 %v1049
        %v1439 = vunpack.c.h.bf16 %v1049
        %v1440 = vunpack.c.l.bf16 %v1050
        %v1441 = vunpack.c.l.bf16 %v1051
        %v1442 = vunpack.c.h.bf16 %v1051
        %v1443 = vunpack.c.l.bf16 %v1052
        %v1444 = vunpack.c.h.bf16 %v1052
        %v1445 = vunpack.c.l.bf16 %v1053
        %v1446 = vunpack.c.l.bf16 %v1054
        %v1447 = vunpack.c.h.bf16 %v1054
        %v1448 = vunpack.c.l.bf16 %v1055
        %v1449 = vunpack.c.h.bf16 %v1055
        %v1450 = vunpack.c.l.bf16 %v1056
        %v1451 = vunpack.c.l.bf16 %v1057
        %v1452 = vunpack.c.h.bf16 %v1057
        %v1453 = vunpack.c.l.bf16 %v1058
        %v1454 = vunpack.c.h.bf16 %v1058
        %v1455 = vunpack.c.l.bf16 %v1059
        %v1456 = vunpack.c.l.bf16 %v1060
        %v1457 = vunpack.c.h.bf16 %v1060
        %v1458 = vunpack.c.l.bf16 %v1061
        %v1459 = vunpack.c.h.bf16 %v1061
        %v1460 = vunpack.c.l.bf16 %v1062
        %v1461 = vunpack.c.l.bf16 %v1063
        %v1462 = vunpack.c.h.bf16 %v1063
        %v1463 = vunpack.c.l.bf16 %v1064
        %v1464 = vunpack.c.h.bf16 %v1064
        %v1465 = vunpack.c.l.bf16 %v1065
        %v1466 = vunpack.c.l.bf16 %v1066
        %v1467 = vunpack.c.h.bf16 %v1066
        %v1468 = vunpack.c.l.bf16 %v1067
        %v1469 = vunpack.c.h.bf16 %v1067
        %v1470 = vunpack.c.l.bf16 %v1068
        %v1471 = vunpack.c.l.bf16 %v1069
        %v1472 = vunpack.c.h.bf16 %v1069
        %v1473 = vunpack.c.l.bf16 %v1070
        %v1474 = vunpack.c.h.bf16 %v1070
        %v1475 = vunpack.c.l.bf16 %v1071
        %v1476 = vunpack.c.l.bf16 %v1072
        %v1477 = vunpack.c.h.bf16 %v1072
        %v1478 = vunpack.c.l.bf16 %v1073
        %v1479 = vunpack.c.h.bf16 %v1073
        %v1480 = vunpack.c.l.bf16 %v1074
        %v1481 = vunpack.c.l.bf16 %v1075
        %v1482 = vunpack.c.h.bf16 %v1075
        %v1483 = vunpack.c.l.bf16 %v1076
        %v1484 = vunpack.c.h.bf16 %v1076
        %v1485 = vunpack.c.l.bf16 %v1077
        %v1486 = vunpack.c.l.bf16 %v1078
        %v1487 = vunpack.c.h.bf16 %v1078
        %v1488 = vunpack.c.l.bf16 %v1079
        %v1489 = vunpack.c.h.bf16 %v1079
        %v1490 = vunpack.c.l.bf16 %v1080
        %v1491 = vunpack.c.l.bf16 %v1081
        %v1492 = vunpack.c.h.bf16 %v1081
        %v1493 = vunpack.c.l.bf16 %v1082
        %v1494 = vunpack.c.h.bf16 %v1082
        %v1495 = vunpack.c.l.bf16 %v1083
        %v1496 = vunpack.c.l.bf16 %v1084
        %v1497 = vunpack.c.h.bf16 %v1084
        %v1498 = vunpack.c.l.bf16 %v1085
        %v1499 = vunpack.c.h.bf16 %v1085
        %v1500 = vunpack.c.l.bf16 %v1086
        %v1501 = vunpack.c.l.bf16 %v1087
        %v1502 = vunpack.c.h.bf16 %v1087
        %v1503 = vunpack.c.l.bf16 %v1088
        %v1504 = vunpack.c.h.bf16 %v1088
        %v1505 = vunpack.c.l.bf16 %v1089
        %v1506 = vunpack.c.l.bf16 %v1090
        %v1507 = vunpack.c.h.bf16 %v1090
        %v1508 = vunpack.c.l.bf16 %v1091
        %v1509 = vunpack.c.h.bf16 %v1091
        %v1510 = vunpack.c.l.bf16 %v1092
        %v1511 = vunpack.c.l.bf16 %v1093
        %v1512 = vunpack.c.h.bf16 %v1093
        %v1513 = vunpack.c.l.bf16 %v1094
        %v1514 = vunpack.c.h.bf16 %v1094
        %v1515 = vunpack.c.l.bf16 %v1095
        %v1516 = vunpack.c.l.bf16 %v1096
        %v1517 = vunpack.c.h.bf16 %v1096
        %v1518 = vunpack.c.l.bf16 %v1097
        %v1519 = vunpack.c.h.bf16 %v1097
        %v1520 = vunpack.c.l.bf16 %v1098
        %v1521 = vunpack.c.l.bf16 %v1099
        %v1522 = vunpack.c.h.bf16 %v1099
        %v1523 = vunpack.c.l.bf16 %v1100
        %v1524 = vunpack.c.h.bf16 %v1100
        %v1525 = vunpack.c.l.bf16 %v1101
        %v1526 = vunpack.c.l.bf16 %v1102
        %v1527 = vunpack.c.h.bf16 %v1102
        %v1528 = vunpack.c.l.bf16 %v1103
        %v1529 = vunpack.c.h.bf16 %v1103
        %v1530 = vunpack.c.l.bf16 %v1104
        %v1531 = vunpack.c.l.bf16 %v1105
        %v1532 = vunpack.c.h.bf16 %v1105
        %v1533 = vunpack.c.l.bf16 %v1106
        %v1534 = vunpack.c.h.bf16 %v1106
        %v1535 = vunpack.c.l.bf16 %v1107
        %v1536 = vunpack.c.l.bf16 %v1108
        %v1537 = vunpack.c.h.bf16 %v1108
        %v1538 = vunpack.c.l.bf16 %v1109
        %v1539 = vunpack.c.h.bf16 %v1109
        %v1540 = vunpack.c.l.bf16 %v1110
        %v1541 = vunpack.c.l.bf16 %v1111
        %v1542 = vunpack.c.h.bf16 %v1111
        %v1543 = vunpack.c.l.bf16 %v1112
        %v1544 = vunpack.c.h.bf16 %v1112
        %v1545 = vunpack.c.l.bf16 %v1113
        %v1546 = vunpack.c.l.bf16 %v1114
        %v1547 = vunpack.c.h.bf16 %v1114
        %v1548 = vunpack.c.l.bf16 %v1115
        %v1549 = vunpack.c.h.bf16 %v1115
        %v1550 = vunpack.c.l.bf16 %v1116
        %v1551 = vunpack.c.l.bf16 %v1117
        %v1552 = vunpack.c.h.bf16 %v1117
        %v1553 = vunpack.c.l.bf16 %v1118
        %v1554 = vunpack.c.h.bf16 %v1118
        %v1555 = vunpack.c.l.bf16 %v1119
        %v1556 = vunpack.c.l.bf16 %v1120
        %v1557 = vunpack.c.h.bf16 %v1120
        %v1558 = vunpack.c.l.bf16 %v1121
        %v1559 = vunpack.c.h.bf16 %v1121
        %v1560 = vunpack.c.l.bf16 %v1122
        %v1561 = vunpack.c.l.bf16 %v1123
        %v1562 = vunpack.c.h.bf16 %v1123
        %v1563 = vunpack.c.l.bf16 %v1124
        %v1564 = vunpack.c.h.bf16 %v1124
        %v1565 = vunpack.c.l.bf16 %v1125
        %v1566 = vunpack.c.l.bf16 %v1126
        %v1567 = vunpack.c.h.bf16 %v1126
        %v1568 = vunpack.c.l.bf16 %v1127
        %v1569 = vunpack.c.h.bf16 %v1127
        %v1570 = vunpack.c.l.bf16 %v1128
        %v1571 = vunpack.c.l.bf16 %v1129
        %v1572 = vunpack.c.h.bf16 %v1129
        %v1573 = vunpack.c.l.bf16 %v1130
        %v1574 = vunpack.c.h.bf16 %v1130
        %v1575 = vunpack.c.l.bf16 %v1131
        %v1576 = vunpack.c.l.bf16 %v1132
        %v1577 = vunpack.c.h.bf16 %v1132
        %v1578 = vunpack.c.l.bf16 %v1133
        %v1579 = vunpack.c.h.bf16 %v1133
        %v1580 = vunpack.c.l.bf16 %v1134
        %v1581 = vunpack.c.l.bf16 %v1135
        %v1582 = vunpack.c.h.bf16 %v1135
        %v1583 = vunpack.c.l.bf16 %v1136
        %v1584 = vunpack.c.h.bf16 %v1136
        %v1585 = vunpack.c.l.bf16 %v1137
        %v1586 = vunpack.c.l.bf16 %v1138
        %v1587 = vunpack.c.h.bf16 %v1138
        %v1588 = vunpack.c.l.bf16 %v1139
        %v1589 = vunpack.c.h.bf16 %v1139
        %v1590 = vunpack.c.l.bf16 %v1140
        %v1591 = vunpack.c.l.bf16 %v1141
        %v1592 = vunpack.c.h.bf16 %v1141
        %v1593 = vunpack.c.l.bf16 %v1142
        %v1594 = vunpack.c.h.bf16 %v1142
        %v1595 = vunpack.c.l.bf16 %v1143
        %v1596 = vunpack.c.l.bf16 %v1144
        %v1597 = vunpack.c.h.bf16 %v1144
        %v1598 = vunpack.c.l.bf16 %v1145
        %v1599 = vunpack.c.h.bf16 %v1145
        %v1600 = vunpack.c.l.bf16 %v1146
        %v1601 = vunpack.c.l.bf16 %v1147
        %v1602 = vunpack.c.h.bf16 %v1147
        %v1603 = vunpack.c.l.bf16 %v1148
        %v1604 = vunpack.c.h.bf16 %v1148
        %v1605 = vunpack.c.l.bf16 %v1149
        %v1606 = vunpack.c.l.bf16 %v1150
        %v1607 = vunpack.c.h.bf16 %v1150
        %v1608 = vunpack.c.l.bf16 %v1151
        %v1609 = vunpack.c.h.bf16 %v1151
        %v1610 = vunpack.c.l.bf16 %v1152
        %v1611 = vunpack.c.l.bf16 %v1153
        %v1612 = vunpack.c.h.bf16 %v1153
        %v1613 = vunpack.c.l.bf16 %v1154
        %v1614 = vunpack.c.h.bf16 %v1154
        %v1615 = vunpack.c.l.bf16 %v1155
        %v1616 = vunpack.c.l.bf16 %v1156
        %v1617 = vunpack.c.h.bf16 %v1156
        %v1618 = vunpack.c.l.bf16 %v1157
        %v1619 = vunpack.c.h.bf16 %v1157
        %v1620 = vunpack.c.l.bf16 %v1158
        %v1621 = vunpack.c.l.bf16 %v1159
        %v1622 = vunpack.c.h.bf16 %v1159
        %v1623 = vunpack.c.l.bf16 %v1160
        %v1624 = vunpack.c.h.bf16 %v1160
        %v1625 = vunpack.c.l.bf16 %v1161
        %v1626 = vunpack.c.l.bf16 %v1162
        %v1627 = vunpack.c.h.bf16 %v1162
        %v1628 = vunpack.c.l.bf16 %v1163
        %v1629 = vunpack.c.h.bf16 %v1163
        %v1630 = vunpack.c.l.bf16 %v1164
        %v1631 = vunpack.c.l.bf16 %v1165
        %v1632 = vunpack.c.h.bf16 %v1165
        %v1633 = vunpack.c.l.bf16 %v1166
        %v1634 = vunpack.c.h.bf16 %v1166
        %v1635 = vunpack.c.l.bf16 %v1167
        %v1636 = vunpack.c.l.bf16 %v1168
        %v1637 = vunpack.c.h.bf16 %v1168
        %v1638 = vunpack.c.l.bf16 %v1169
        %v1639 = vunpack.c.h.bf16 %v1169
        %v1640 = vunpack.c.l.bf16 %v1170
        %v1641 = vunpack.c.l.bf16 %v1171
        %v1642 = vunpack.c.h.bf16 %v1171
        %v1643 = vunpack.c.l.bf16 %v1172
        %v1644 = vunpack.c.h.bf16 %v1172
        %v1645 = vunpack.c.l.bf16 %v1173
        %v1646 = vunpack.c.l.bf16 %v1174
        %v1647 = vunpack.c.h.bf16 %v1174
        %v1648 = vunpack.c.l.bf16 %v1175
        %v1649 = vunpack.c.h.bf16 %v1175
        %v1650 = vunpack.c.l.bf16 %v1176
        %v1651 = vunpack.c.l.bf16 %v1177
        %v1652 = vunpack.c.h.bf16 %v1177
        %v1653 = vunpack.c.l.bf16 %v1178
        %v1654 = vunpack.c.h.bf16 %v1178
        %v1655 = vunpack.c.l.bf16 %v1179
        %v1656 = vunpack.c.l.bf16 %v1180
        %v1657 = vunpack.c.h.bf16 %v1180
        %v1658 = vunpack.c.l.bf16 %v1181
        %v1659 = vunpack.c.h.bf16 %v1181
        %v1660 = vunpack.c.l.bf16 %v1182
        %v1661 = vunpack.c.l.bf16 %v1183
        %v1662 = vunpack.c.h.bf16 %v1183
        %v1663 = vunpack.c.l.bf16 %v1184
        %v1664 = vunpack.c.h.bf16 %v1184
        %v1665 = vunpack.c.l.bf16 %v1185
        %v1666 = vunpack.c.l.bf16 %v1186
        %v1667 = vunpack.c.h.bf16 %v1186
        %v1668 = vunpack.c.l.bf16 %v1187
        %v1669 = vunpack.c.h.bf16 %v1187
        %v1670 = vunpack.c.l.bf16 %v1188
        %v1671 = vunpack.c.l.bf16 %v1189
        %v1672 = vunpack.c.h.bf16 %v1189
        %v1673 = vunpack.c.l.bf16 %v1190
        %v1674 = vunpack.c.h.bf16 %v1190
        %v1675 = vunpack.c.l.bf16 %v1191
        %v1676 = vunpack.c.l.bf16 %v1192
        %v1677 = vunpack.c.h.bf16 %v1192
        %v1678 = vunpack.c.l.bf16 %v1193
        %v1679 = vunpack.c.h.bf16 %v1193
        %v1680 = vunpack.c.l.bf16 %v1194
        %v1681 = vunpack.c.l.bf16 %v1195
        %v1682 = vunpack.c.h.bf16 %v1195
        %v1683 = vunpack.c.l.bf16 %v1196
        %v1684 = vunpack.c.h.bf16 %v1196
        %v1685 = vunpack.c.l.bf16 %v1197
        %v1686 = vunpack.c.l.bf16 %v1198
        %v1687 = vunpack.c.h.bf16 %v1198
        %v1688 = vunpack.c.l.bf16 %v1199
        %v1689 = vunpack.c.h.bf16 %v1199
        %v1690 = vunpack.c.l.bf16 %v1200
        %v1691 = vunpack.c.l.bf16 %v1201
        %v1692 = vunpack.c.h.bf16 %v1201
        %v1693 = vunpack.c.l.bf16 %v1202
        %v1694 = vunpack.c.h.bf16 %v1202
        %v1695 = vunpack.c.l.bf16 %v1203
        %v1696 = vunpack.c.l.bf16 %v1204
        %v1697 = vunpack.c.h.bf16 %v1204
        %v1698 = vunpack.c.l.bf16 %v1205
        %v1699 = vunpack.c.h.bf16 %v1205
        %v1700 = vunpack.c.l.bf16 %v1206
        %v1701 = vunpack.c.l.bf16 %v1207
        %v1702 = vunpack.c.h.bf16 %v1207
        %v1703 = vunpack.c.l.bf16 %v1208
        %v1704 = vunpack.c.h.bf16 %v1208
        %v1705 = vunpack.c.l.bf16 %v1209
        %v1706 = vunpack.c.l.bf16 %v1210
        %v1707 = vunpack.c.h.bf16 %v1210
        %v1708 = vunpack.c.l.bf16 %v1211
        %v1709 = vunpack.c.h.bf16 %v1211
        %v1710 = vunpack.c.l.bf16 %v1212
        %v1711 = vunpack.c.l.bf16 %v1213
        %v1712 = vunpack.c.h.bf16 %v1213
        %v1713 = vunpack.c.l.bf16 %v1214
        %v1714 = vunpack.c.h.bf16 %v1214
        %v1715 = vunpack.c.l.bf16 %v1215
        %v1716 = vld [vmem:[%s467] sm:$0x1f]
        %v1717 = vunpack.c.l.bf16 %v1716
        %v1718 = vunpack.c.h.bf16 %v1716
        %v1721 = vcombine.high %v1717, %v1717
        %v1723 = vunpack.c.l.s4 1983009808
        %v1724 = vunpack.c.0.s8 %v1723
        %v1725 = vlaneseq
        %v1726 = vshrl.u32 %v1725, 7
        %v1727 = vsub.s32 %v1724, %v1726
        %v1728 = vrot.slane %v1717, %v1727
        %v1730 = vunpack.c.l.s4 1983009808
        %v1731 = vunpack.c.0.s8 %v1730
        %v1732 = vlaneseq
        %v1733 = vshrl.u32 %v1732, 7
        %v1734 = vsub.s32 %v1731, %v1733
        %v1735 = vrot.slane %v1721, %v1734
        %v1736 = vcombine.high %v1728, %v1728
        %v1737 = vcombine.high %v1735, %v1735
        %v1739 = vunpack.c.l.s4 1983009808
        %v1740 = vunpack.c.0.s8 %v1739
        %v1741 = vlaneseq
        %v1742 = vshrl.u32 %v1741, 7
        %v1743 = vsub.s32 %v1740, %v1742
        %v1744 = vrot.slane %v1718, %v1743
        %vm1745 = vcmask 15360
        %v1747 = vsel %vm1745, %v551, 0
        %vm1749 = vcmask 1041408
        %v1750 = vsel %vm1749, %v1728, 0
        %v1752 = vsel %vm1749, %v1736, 0
        %v1754 = vsel %vm1749, %v1735, 0
        %v1756 = vsel %vm1749, %v1737, 0
        %v1758 = vsel %vm1749, %v1744, 0
        %1760 = vmatprep.subr.mxu0 %v1752
        %1761 = vmatpush1.msra.mxu0 %v1750
        %1762 = vmatprep.subr.mxu0 0.0
        %1763 = vmatpush1.msra.mxu0 0.0
        %1764 = vmatprep.subr.mxu0 0.0
        %1765 = vmatpush1.msra.mxu0 0.0
        %1766 = vmatprep.subr.mxu0 0.0
        %1767 = vmatpush1.msra.mxu0 0.0
        %1768 = vmatprep.subr.mxu0 0.0
        %1769 = vmatpush1.msra.mxu0 0.0
        %1770 = vmatprep.subr.mxu0 0.0
        %1771 = vmatpush1.msra.mxu0 0.0
        %1772 = vmatprep.subr.mxu0 0.0
        %1773 = vmatpush1.msra.mxu0 0.0
        %1774 = vmatprep.subr.mxu0 0.0
        %1775 = vmatpush1.msra.mxu0 0.0
        %1776 = vmatprep.subr.mxu0 0.0
        %1777 = vmatpush1.msra.mxu0 0.0
        %1778 = vmatprep.subr.mxu0 0.0
        %1779 = vmatpush1.msra.mxu0 0.0
        %1780 = vmatprep.subr.mxu0 0.0
        %1781 = vmatpush1.msra.mxu0 0.0
        %1782 = vmatprep.subr.mxu0 0.0
        %1783 = vmatpush1.msra.mxu0 0.0
        %1784 = vmatprep.subr.mxu0 0.0
        %1785 = vmatpush1.msra.mxu0 0.0
        %1786 = vmatprep.subr.mxu0 0.0
        %1787 = vmatpush1.msra.mxu0 0.0
        %1788 = vmatprep.subr.mxu0 0.0
        %1789 = vmatpush1.msra.mxu0 0.0
        %1790 = vmatprep.subr.mxu0 0.0
        %1791 = vmatpush1.msra.mxu0 0.0
        %1792 = vmatprep.subr.mxu0 0.0
        %1793 = vmatpush1.msra.mxu0 0.0
        %1794 = vmatprep.subr.mxu0 0.0
        %1795 = vmatpush1.msra.mxu0 0.0
        %1796 = vmatprep.subr.mxu0 0.0
        %1797 = vmatpush1.msra.mxu0 0.0
        %1798 = vmatprep.subr.mxu0 0.0
        %1799 = vmatpush1.msra.mxu0 0.0
        %1800 = vmatprep.subr.mxu0 0.0
        %1801 = vmatpush1.msra.mxu0 0.0
        %1802 = vmatprep.subr.mxu0 0.0
        %1803 = vmatpush1.msra.mxu0 0.0
        %1804 = vmatprep.subr.mxu0 0.0
        %1805 = vmatpush1.msra.mxu0 0.0
        %1806 = vmatprep.subr.mxu0 0.0
        %1807 = vmatpush1.msra.mxu0 0.0
        %1808 = vmatprep.subr.mxu0 0.0
        %1809 = vmatpush1.msra.mxu0 0.0
        %1810 = vmatprep.subr.mxu0 0.0
        %1811 = vmatpush1.msra.mxu0 0.0
        %1812 = vmatprep.subr.mxu0 0.0
        %1813 = vmatpush1.msra.mxu0 0.0
        %1814 = vmatprep.subr.mxu0 0.0
        %1815 = vmatpush1.msra.mxu0 0.0
        %1816 = vmatprep.subr.mxu0 0.0
        %1817 = vmatpush1.msra.mxu0 0.0
        %1818 = vmatprep.subr.mxu0 0.0
        %1819 = vmatpush1.msra.mxu0 0.0
        %1820 = vmatprep.subr.mxu0 0.0
        %1821 = vmatpush1.msra.mxu0 0.0
        %1822 = vmatprep.subr.mxu0 0.0
        %1823 = vmatpush1.msra.mxu0 0.0
        %1824 = vmatprep.mubr.f32.mxu0 0.0
        %1825 = vmatmul.mubr.f32.gmra.mrb[0].mxu0 %v1747
        %v1826 = vpop.f32.mrb[0].mxu0
        %v1827 = vadd.f32 0.0, %v1826
        %v1828 = vpop.f32.mrb[0].mxu0
        %v1829 = vadd.f32 0.0, %v1828
        %1830 = vdwg.mxu0
        %1831 = vmatprep.subr.mxu0 %v1756
        %1832 = vmatpush1.msra.mxu0 %v1754
        %1833 = vmatprep.subr.mxu0 0.0
        %1834 = vmatpush1.msra.mxu0 0.0
        %1835 = vmatprep.subr.mxu0 0.0
        %1836 = vmatpush1.msra.mxu0 0.0
        %1837 = vmatprep.subr.mxu0 0.0
        %1838 = vmatpush1.msra.mxu0 0.0
        %1839 = vmatprep.subr.mxu0 0.0
        %1840 = vmatpush1.msra.mxu0 0.0
        %1841 = vmatprep.subr.mxu0 0.0
        %1842 = vmatpush1.msra.mxu0 0.0
        %1843 = vmatprep.subr.mxu0 0.0
        %1844 = vmatpush1.msra.mxu0 0.0
        %1845 = vmatprep.subr.mxu0 0.0
        %1846 = vmatpush1.msra.mxu0 0.0
        %1847 = vmatprep.subr.mxu0 0.0
        %1848 = vmatpush1.msra.mxu0 0.0
        %1849 = vmatprep.subr.mxu0 0.0
        %1850 = vmatpush1.msra.mxu0 0.0
        %1851 = vmatprep.subr.mxu0 0.0
        %1852 = vmatpush1.msra.mxu0 0.0
        %1853 = vmatprep.subr.mxu0 0.0
        %1854 = vmatpush1.msra.mxu0 0.0
        %1855 = vmatprep.subr.mxu0 0.0
        %1856 = vmatpush1.msra.mxu0 0.0
        %1857 = vmatprep.subr.mxu0 0.0
        %1858 = vmatpush1.msra.mxu0 0.0
        %1859 = vmatprep.subr.mxu0 0.0
        %1860 = vmatpush1.msra.mxu0 0.0
        %1861 = vmatprep.subr.mxu0 0.0
        %1862 = vmatpush1.msra.mxu0 0.0
        %1863 = vmatprep.subr.mxu0 0.0
        %1864 = vmatpush1.msra.mxu0 0.0
        %1865 = vmatprep.subr.mxu0 0.0
        %1866 = vmatpush1.msra.mxu0 0.0
        %1867 = vmatprep.subr.mxu0 0.0
        %1868 = vmatpush1.msra.mxu0 0.0
        %1869 = vmatprep.subr.mxu0 0.0
        %1870 = vmatpush1.msra.mxu0 0.0
        %1871 = vmatprep.subr.mxu0 0.0
        %1872 = vmatpush1.msra.mxu0 0.0
        %1873 = vmatprep.subr.mxu0 0.0
        %1874 = vmatpush1.msra.mxu0 0.0
        %1875 = vmatprep.subr.mxu0 0.0
        %1876 = vmatpush1.msra.mxu0 0.0
        %1877 = vmatprep.subr.mxu0 0.0
        %1878 = vmatpush1.msra.mxu0 0.0
        %1879 = vmatprep.subr.mxu0 0.0
        %1880 = vmatpush1.msra.mxu0 0.0
        %1881 = vmatprep.subr.mxu0 0.0
        %1882 = vmatpush1.msra.mxu0 0.0
        %1883 = vmatprep.subr.mxu0 0.0
        %1884 = vmatpush1.msra.mxu0 0.0
        %1885 = vmatprep.subr.mxu0 0.0
        %1886 = vmatpush1.msra.mxu0 0.0
        %1887 = vmatprep.subr.mxu0 0.0
        %1888 = vmatpush1.msra.mxu0 0.0
        %1889 = vmatprep.subr.mxu0 0.0
        %1890 = vmatpush1.msra.mxu0 0.0
        %1891 = vmatprep.subr.mxu0 0.0
        %1892 = vmatpush1.msra.mxu0 0.0
        %1893 = vmatprep.subr.mxu0 0.0
        %1894 = vmatpush1.msra.mxu0 0.0
        %1895 = vmatprep.mubr.f32.mxu0 0.0
        %1896 = vmatmul.mubr.f32.gmra.mrb[0].mxu0 %v1747
        %v1897 = vpop.f32.mrb[0].mxu0
        %v1898 = vadd.f32 0.0, %v1897
        %v1899 = vpop.f32.mrb[0].mxu0
        %v1900 = vadd.f32 0.0, %v1899
        %1901 = vdwg.mxu0
        %1902 = vmatprep.subr.mxu0 0.0
        %1903 = vmatpush1.msra.mxu0 %v1758
        %1904 = vmatprep.subr.mxu0 0.0
        %1905 = vmatpush1.msra.mxu0 0.0
        %1906 = vmatprep.subr.mxu0 0.0
        %1907 = vmatpush1.msra.mxu0 0.0
        %1908 = vmatprep.subr.mxu0 0.0
        %1909 = vmatpush1.msra.mxu0 0.0
        %1910 = vmatprep.subr.mxu0 0.0
        %1911 = vmatpush1.msra.mxu0 0.0
        %1912 = vmatprep.subr.mxu0 0.0
        %1913 = vmatpush1.msra.mxu0 0.0
        %1914 = vmatprep.subr.mxu0 0.0
        %1915 = vmatpush1.msra.mxu0 0.0
        %1916 = vmatprep.subr.mxu0 0.0
        %1917 = vmatpush1.msra.mxu0 0.0
        %1918 = vmatprep.subr.mxu0 0.0
        %1919 = vmatpush1.msra.mxu0 0.0
        %1920 = vmatprep.subr.mxu0 0.0
        %1921 = vmatpush1.msra.mxu0 0.0
        %1922 = vmatprep.subr.mxu0 0.0
        %1923 = vmatpush1.msra.mxu0 0.0
        %1924 = vmatprep.subr.mxu0 0.0
        %1925 = vmatpush1.msra.mxu0 0.0
        %1926 = vmatprep.subr.mxu0 0.0
        %1927 = vmatpush1.msra.mxu0 0.0
        %1928 = vmatprep.subr.mxu0 0.0
        %1929 = vmatpush1.msra.mxu0 0.0
        %1930 = vmatprep.subr.mxu0 0.0
        %1931 = vmatpush1.msra.mxu0 0.0
        %1932 = vmatprep.subr.mxu0 0.0
        %1933 = vmatpush1.msra.mxu0 0.0
        %1934 = vmatprep.subr.mxu0 0.0
        %1935 = vmatpush1.msra.mxu0 0.0
        %1936 = vmatprep.subr.mxu0 0.0
        %1937 = vmatpush1.msra.mxu0 0.0
        %1938 = vmatprep.subr.mxu0 0.0
        %1939 = vmatpush1.msra.mxu0 0.0
        %1940 = vmatprep.subr.mxu0 0.0
        %1941 = vmatpush1.msra.mxu0 0.0
        %1942 = vmatprep.subr.mxu0 0.0
        %1943 = vmatpush1.msra.mxu0 0.0
        %1944 = vmatprep.subr.mxu0 0.0
        %1945 = vmatpush1.msra.mxu0 0.0
        %1946 = vmatprep.subr.mxu0 0.0
        %1947 = vmatpush1.msra.mxu0 0.0
        %1948 = vmatprep.subr.mxu0 0.0
        %1949 = vmatpush1.msra.mxu0 0.0
        %1950 = vmatprep.subr.mxu0 0.0
        %1951 = vmatpush1.msra.mxu0 0.0
        %1952 = vmatprep.subr.mxu0 0.0
        %1953 = vmatpush1.msra.mxu0 0.0
        %1954 = vmatprep.subr.mxu0 0.0
        %1955 = vmatpush1.msra.mxu0 0.0
        %1956 = vmatprep.subr.mxu0 0.0
        %1957 = vmatpush1.msra.mxu0 0.0
        %1958 = vmatprep.subr.mxu0 0.0
        %1959 = vmatpush1.msra.mxu0 0.0
        %1960 = vmatprep.subr.mxu0 0.0
        %1961 = vmatpush1.msra.mxu0 0.0
        %1962 = vmatprep.subr.mxu0 0.0
        %1963 = vmatpush1.msra.mxu0 0.0
        %1964 = vmatprep.subr.mxu0 0.0
        %1965 = vmatpush1.msra.mxu0 0.0
        %1966 = vmatprep.mubr.f32.mxu0 0.0
        %1967 = vmatmul.mubr.f32.gmra.mrb[0].mxu0 %v1747
        %v1968 = vpop.f32.mrb[0].mxu0
        %v1969 = vadd.f32 0.0, %v1968
        %v1970 = vpop.f32.mrb[0].mxu0
        %1971 = vdwg.mxu0
        %vm1972 = vcmask 261120
        %v1974 = vsel %vm1972, %v915, 0
        %1976 = vmatprep.subr.mxu0 %v1217
        %1977 = vmatpush1.msra.mxu0 %v1216
        %1978 = vmatprep.subr.mxu0 %v1222
        %1979 = vmatpush1.msra.mxu0 %v1221
        %1980 = vmatprep.subr.mxu0 %v1227
        %1981 = vmatpush1.msra.mxu0 %v1226
        %1982 = vmatprep.subr.mxu0 %v1232
        %1983 = vmatpush1.msra.mxu0 %v1231
        %1984 = vmatprep.subr.mxu0 %v1237
        %1985 = vmatpush1.msra.mxu0 %v1236
        %1986 = vmatprep.subr.mxu0 %v1242
        %1987 = vmatpush1.msra.mxu0 %v1241
        %1988 = vmatprep.subr.mxu0 %v1247
        %1989 = vmatpush1.msra.mxu0 %v1246
        %1990 = vmatprep.subr.mxu0 %v1252
        %1991 = vmatpush1.msra.mxu0 %v1251
        %1992 = vmatprep.subr.mxu0 %v1257
        %1993 = vmatpush1.msra.mxu0 %v1256
        %1994 = vmatprep.subr.mxu0 %v1262
        %1995 = vmatpush1.msra.mxu0 %v1261
        %1996 = vmatprep.subr.mxu0 %v1267
        %1997 = vmatpush1.msra.mxu0 %v1266
        %1998 = vmatprep.subr.mxu0 %v1272
        %1999 = vmatpush1.msra.mxu0 %v1271
        %2000 = vmatprep.subr.mxu0 %v1277
        %2001 = vmatpush1.msra.mxu0 %v1276
        %2002 = vmatprep.subr.mxu0 %v1282
        %2003 = vmatpush1.msra.mxu0 %v1281
        %2004 = vmatprep.subr.mxu0 %v1287
        %2005 = vmatpush1.msra.mxu0 %v1286
        %2006 = vmatprep.subr.mxu0 %v1292
        %2007 = vmatpush1.msra.mxu0 %v1291
        %2008 = vmatprep.subr.mxu0 %v1297
        %2009 = vmatpush1.msra.mxu0 %v1296
        %2010 = vmatprep.subr.mxu0 %v1302
        %2011 = vmatpush1.msra.mxu0 %v1301
        %2012 = vmatprep.subr.mxu0 %v1307
        %2013 = vmatpush1.msra.mxu0 %v1306
        %2014 = vmatprep.subr.mxu0 %v1312
        %2015 = vmatpush1.msra.mxu0 %v1311
        %2016 = vmatprep.subr.mxu0 %v1317
        %2017 = vmatpush1.msra.mxu0 %v1316
        %2018 = vmatprep.subr.mxu0 %v1322
        %2019 = vmatpush1.msra.mxu0 %v1321
        %2020 = vmatprep.subr.mxu0 %v1327
        %2021 = vmatpush1.msra.mxu0 %v1326
        %2022 = vmatprep.subr.mxu0 %v1332
        %2023 = vmatpush1.msra.mxu0 %v1331
        %2024 = vmatprep.subr.mxu0 %v1337
        %2025 = vmatpush1.msra.mxu0 %v1336
        %2026 = vmatprep.subr.mxu0 %v1342
        %2027 = vmatpush1.msra.mxu0 %v1341
        %2028 = vmatprep.subr.mxu0 %v1347
        %2029 = vmatpush1.msra.mxu0 %v1346
        %2030 = vmatprep.subr.mxu0 %v1352
        %2031 = vmatpush1.msra.mxu0 %v1351
        %2032 = vmatprep.subr.mxu0 %v1357
        %2033 = vmatpush1.msra.mxu0 %v1356
        %2034 = vmatprep.subr.mxu0 %v1362
        %2035 = vmatpush1.msra.mxu0 %v1361
        %2036 = vmatprep.subr.mxu0 %v1367
        %2037 = vmatpush1.msra.mxu0 %v1366
        %2038 = vmatprep.subr.mxu0 %v1372
        %2039 = vmatpush1.msra.mxu0 %v1371
        %2040 = vmatprep.mubr.f32.mxu0 %v910
        %2041 = vmatmul.mubr.f32.gmra.mrb[0].mxu0 %v909
        %v2042 = vpop.f32.mrb[0].mxu0
        %v2043 = vadd.f32 %v1827, %v2042
        %v2044 = vpop.f32.mrb[0].mxu0
        %v2045 = vadd.f32 %v1829, %v2044
        %2046 = vdwg.mxu0
        %2047 = vmatprep.subr.mxu0 %v1377
        %2048 = vmatpush1.msra.mxu0 %v1376
        %2049 = vmatprep.subr.mxu0 %v1382
        %2050 = vmatpush1.msra.mxu0 %v1381
        %2051 = vmatprep.subr.mxu0 %v1387
        %2052 = vmatpush1.msra.mxu0 %v1386
        %2053 = vmatprep.subr.mxu0 %v1392
        %2054 = vmatpush1.msra.mxu0 %v1391
        %2055 = vmatprep.subr.mxu0 %v1397
        %2056 = vmatpush1.msra.mxu0 %v1396
        %2057 = vmatprep.subr.mxu0 %v1402
        %2058 = vmatpush1.msra.mxu0 %v1401
        %2059 = vmatprep.subr.mxu0 %v1407
        %2060 = vmatpush1.msra.mxu0 %v1406
        %2061 = vmatprep.subr.mxu0 %v1412
        %2062 = vmatpush1.msra.mxu0 %v1411
        %2063 = vmatprep.subr.mxu0 %v1417
        %2064 = vmatpush1.msra.mxu0 %v1416
        %2065 = vmatprep.subr.mxu0 %v1422
        %2066 = vmatpush1.msra.mxu0 %v1421
        %2067 = vmatprep.subr.mxu0 %v1427
        %2068 = vmatpush1.msra.mxu0 %v1426
        %2069 = vmatprep.subr.mxu0 %v1432
        %2070 = vmatpush1.msra.mxu0 %v1431
        %2071 = vmatprep.subr.mxu0 %v1437
        %2072 = vmatpush1.msra.mxu0 %v1436
        %2073 = vmatprep.subr.mxu0 %v1442
        %2074 = vmatpush1.msra.mxu0 %v1441
        %2075 = vmatprep.subr.mxu0 %v1447
        %2076 = vmatpush1.msra.mxu0 %v1446
        %2077 = vmatprep.subr.mxu0 %v1452
        %2078 = vmatpush1.msra.mxu0 %v1451
        %2079 = vmatprep.subr.mxu0 %v1457
        %2080 = vmatpush1.msra.mxu0 %v1456
        %2081 = vmatprep.subr.mxu0 %v1462
        %2082 = vmatpush1.msra.mxu0 %v1461
        %2083 = vmatprep.subr.mxu0 %v1467
        %2084 = vmatpush1.msra.mxu0 %v1466
        %2085 = vmatprep.subr.mxu0 %v1472
        %2086 = vmatpush1.msra.mxu0 %v1471
        %2087 = vmatprep.subr.mxu0 %v1477
        %2088 = vmatpush1.msra.mxu0 %v1476
        %2089 = vmatprep.subr.mxu0 %v1482
        %2090 = vmatpush1.msra.mxu0 %v1481
        %2091 = vmatprep.subr.mxu0 %v1487
        %2092 = vmatpush1.msra.mxu0 %v1486
        %2093 = vmatprep.subr.mxu0 %v1492
        %2094 = vmatpush1.msra.mxu0 %v1491
        %2095 = vmatprep.subr.mxu0 %v1497
        %2096 = vmatpush1.msra.mxu0 %v1496
        %2097 = vmatprep.subr.mxu0 %v1502
        %2098 = vmatpush1.msra.mxu0 %v1501
        %2099 = vmatprep.subr.mxu0 %v1507
        %2100 = vmatpush1.msra.mxu0 %v1506
        %2101 = vmatprep.subr.mxu0 %v1512
        %2102 = vmatpush1.msra.mxu0 %v1511
        %2103 = vmatprep.subr.mxu0 %v1517
        %2104 = vmatpush1.msra.mxu0 %v1516
        %2105 = vmatprep.subr.mxu0 %v1522
        %2106 = vmatpush1.msra.mxu0 %v1521
        %2107 = vmatprep.subr.mxu0 %v1527
        %2108 = vmatpush1.msra.mxu0 %v1526
        %2109 = vmatprep.subr.mxu0 %v1532
        %2110 = vmatpush1.msra.mxu0 %v1531
        %2111 = vmatprep.mubr.f32.mxu0 %v912
        %2112 = vmatmul.mubr.f32.gmra.mrb[0].mxu0 %v911
        %v2113 = vpop.f32.mrb[0].mxu0
        %v2114 = vadd.f32 %v2043, %v2113
        %v2115 = vpop.f32.mrb[0].mxu0
        %v2116 = vadd.f32 %v2045, %v2115
        %2117 = vdwg.mxu0
        %2118 = vmatprep.subr.mxu0 %v1537
        %2119 = vmatpush1.msra.mxu0 %v1536
        %2120 = vmatprep.subr.mxu0 %v1542
        %2121 = vmatpush1.msra.mxu0 %v1541
        %2122 = vmatprep.subr.mxu0 %v1547
        %2123 = vmatpush1.msra.mxu0 %v1546
        %2124 = vmatprep.subr.mxu0 %v1552
        %2125 = vmatpush1.msra.mxu0 %v1551
        %2126 = vmatprep.subr.mxu0 %v1557
        %2127 = vmatpush1.msra.mxu0 %v1556
        %2128 = vmatprep.subr.mxu0 %v1562
        %2129 = vmatpush1.msra.mxu0 %v1561
        %2130 = vmatprep.subr.mxu0 %v1567
        %2131 = vmatpush1.msra.mxu0 %v1566
        %2132 = vmatprep.subr.mxu0 %v1572
        %2133 = vmatpush1.msra.mxu0 %v1571
        %2134 = vmatprep.subr.mxu0 %v1577
        %2135 = vmatpush1.msra.mxu0 %v1576
        %2136 = vmatprep.subr.mxu0 %v1582
        %2137 = vmatpush1.msra.mxu0 %v1581
        %2138 = vmatprep.subr.mxu0 %v1587
        %2139 = vmatpush1.msra.mxu0 %v1586
        %2140 = vmatprep.subr.mxu0 %v1592
        %2141 = vmatpush1.msra.mxu0 %v1591
        %2142 = vmatprep.subr.mxu0 %v1597
        %2143 = vmatpush1.msra.mxu0 %v1596
        %2144 = vmatprep.subr.mxu0 %v1602
        %2145 = vmatpush1.msra.mxu0 %v1601
        %2146 = vmatprep.subr.mxu0 %v1607
        %2147 = vmatpush1.msra.mxu0 %v1606
        %2148 = vmatprep.subr.mxu0 %v1612
        %2149 = vmatpush1.msra.mxu0 %v1611
        %2150 = vmatprep.subr.mxu0 %v1617
        %2151 = vmatpush1.msra.mxu0 %v1616
        %2152 = vmatprep.subr.mxu0 %v1622
        %2153 = vmatpush1.msra.mxu0 %v1621
        %2154 = vmatprep.subr.mxu0 %v1627
        %2155 = vmatpush1.msra.mxu0 %v1626
        %2156 = vmatprep.subr.mxu0 %v1632
        %2157 = vmatpush1.msra.mxu0 %v1631
        %2158 = vmatprep.subr.mxu0 %v1637
        %2159 = vmatpush1.msra.mxu0 %v1636
        %2160 = vmatprep.subr.mxu0 %v1642
        %2161 = vmatpush1.msra.mxu0 %v1641
        %2162 = vmatprep.subr.mxu0 %v1647
        %2163 = vmatpush1.msra.mxu0 %v1646
        %2164 = vmatprep.subr.mxu0 %v1652
        %2165 = vmatpush1.msra.mxu0 %v1651
        %2166 = vmatprep.subr.mxu0 %v1657
        %2167 = vmatpush1.msra.mxu0 %v1656
        %2168 = vmatprep.subr.mxu0 %v1662
        %2169 = vmatpush1.msra.mxu0 %v1661
        %2170 = vmatprep.subr.mxu0 %v1667
        %2171 = vmatpush1.msra.mxu0 %v1666
        %2172 = vmatprep.subr.mxu0 %v1672
        %2173 = vmatpush1.msra.mxu0 %v1671
        %2174 = vmatprep.subr.mxu0 %v1677
        %2175 = vmatpush1.msra.mxu0 %v1676
        %2176 = vmatprep.subr.mxu0 %v1682
        %2177 = vmatpush1.msra.mxu0 %v1681
        %2178 = vmatprep.subr.mxu0 %v1687
        %2179 = vmatpush1.msra.mxu0 %v1686
        %2180 = vmatprep.subr.mxu0 %v1692
        %2181 = vmatpush1.msra.mxu0 %v1691
        %2182 = vmatprep.mubr.f32.mxu0 %v914
        %2183 = vmatmul.mubr.f32.gmra.mrb[0].mxu0 %v913
        %v2184 = vpop.f32.mrb[0].mxu0
        %v2185 = vadd.f32 %v2114, %v2184
        %v2186 = vpop.f32.mrb[0].mxu0
        %v2187 = vadd.f32 %v2116, %v2186
        %2188 = vdwg.mxu0
        %2189 = vmatprep.subr.mxu0 %v1697
        %2190 = vmatpush1.msra.mxu0 %v1696
        %2191 = vmatprep.subr.mxu0 %v1702
        %2192 = vmatpush1.msra.mxu0 %v1701
        %2193 = vmatprep.subr.mxu0 %v1707
        %2194 = vmatpush1.msra.mxu0 %v1706
        %2195 = vmatprep.subr.mxu0 %v1712
        %2196 = vmatpush1.msra.mxu0 %v1711
        %2197 = vmatprep.subr.mxu0 0.0
        %2198 = vmatpush1.msra.mxu0 0.0
        %2199 = vmatprep.subr.mxu0 0.0
        %2200 = vmatpush1.msra.mxu0 0.0
        %2201 = vmatprep.subr.mxu0 0.0
        %2202 = vmatpush1.msra.mxu0 0.0
        %2203 = vmatprep.subr.mxu0 0.0
        %2204 = vmatpush1.msra.mxu0 0.0
        %2205 = vmatprep.subr.mxu0 0.0
        %2206 = vmatpush1.msra.mxu0 0.0
        %2207 = vmatprep.subr.mxu0 0.0
        %2208 = vmatpush1.msra.mxu0 0.0
        %2209 = vmatprep.subr.mxu0 0.0
        %2210 = vmatpush1.msra.mxu0 0.0
        %2211 = vmatprep.subr.mxu0 0.0
        %2212 = vmatpush1.msra.mxu0 0.0
        %2213 = vmatprep.subr.mxu0 0.0
        %2214 = vmatpush1.msra.mxu0 0.0
        %2215 = vmatprep.subr.mxu0 0.0
        %2216 = vmatpush1.msra.mxu0 0.0
        %2217 = vmatprep.subr.mxu0 0.0
        %2218 = vmatpush1.msra.mxu0 0.0
        %2219 = vmatprep.subr.mxu0 0.0
        %2220 = vmatpush1.msra.mxu0 0.0
        %2221 = vmatprep.subr.mxu0 0.0
        %2222 = vmatpush1.msra.mxu0 0.0
        %2223 = vmatprep.subr.mxu0 0.0
        %2224 = vmatpush1.msra.mxu0 0.0
        %2225 = vmatprep.subr.mxu0 0.0
        %2226 = vmatpush1.msra.mxu0 0.0
        %2227 = vmatprep.subr.mxu0 0.0
        %2228 = vmatpush1.msra.mxu0 0.0
        %2229 = vmatprep.subr.mxu0 0.0
        %2230 = vmatpush1.msra.mxu0 0.0
        %2231 = vmatprep.subr.mxu0 0.0
        %2232 = vmatpush1.msra.mxu0 0.0
        %2233 = vmatprep.subr.mxu0 0.0
        %2234 = vmatpush1.msra.mxu0 0.0
        %2235 = vmatprep.subr.mxu0 0.0
        %2236 = vmatpush1.msra.mxu0 0.0
        %2237 = vmatprep.subr.mxu0 0.0
        %2238 = vmatpush1.msra.mxu0 0.0
        %2239 = vmatprep.subr.mxu0 0.0
        %2240 = vmatpush1.msra.mxu0 0.0
        %2241 = vmatprep.subr.mxu0 0.0
        %2242 = vmatpush1.msra.mxu0 0.0
        %2243 = vmatprep.subr.mxu0 0.0
        %2244 = vmatpush1.msra.mxu0 0.0
        %2245 = vmatprep.subr.mxu0 0.0
        %2246 = vmatpush1.msra.mxu0 0.0
        %2247 = vmatprep.subr.mxu0 0.0
        %2248 = vmatpush1.msra.mxu0 0.0
        %2249 = vmatprep.subr.mxu0 0.0
        %2250 = vmatpush1.msra.mxu0 0.0
        %2251 = vmatprep.subr.mxu0 0.0
        %2252 = vmatpush1.msra.mxu0 0.0
        %2253 = vmatprep.mubr.f32.mxu0 0.0
        %2254 = vmatmul.mubr.f32.gmra.mrb[0].mxu0 %v1974
        %v2255 = vpop.f32.mrb[0].mxu0
        %v2256 = vadd.f32 %v2185, %v2255
        %v2257 = vpop.f32.mrb[0].mxu0
        %v2258 = vadd.f32 %v2187, %v2257
        %2259 = vdwg.mxu0
        %2260 = vmatprep.subr.mxu0 %v1219
        %2261 = vmatpush1.msra.mxu0 %v1218
        %2262 = vmatprep.subr.mxu0 %v1224
        %2263 = vmatpush1.msra.mxu0 %v1223
        %2264 = vmatprep.subr.mxu0 %v1229
        %2265 = vmatpush1.msra.mxu0 %v1228
        %2266 = vmatprep.subr.mxu0 %v1234
        %2267 = vmatpush1.msra.mxu0 %v1233
        %2268 = vmatprep.subr.mxu0 %v1239
        %2269 = vmatpush1.msra.mxu0 %v1238
        %2270 = vmatprep.subr.mxu0 %v1244
        %2271 = vmatpush1.msra.mxu0 %v1243
        %2272 = vmatprep.subr.mxu0 %v1249
        %2273 = vmatpush1.msra.mxu0 %v1248
        %2274 = vmatprep.subr.mxu0 %v1254
        %2275 = vmatpush1.msra.mxu0 %v1253
        %2276 = vmatprep.subr.mxu0 %v1259
        %2277 = vmatpush1.msra.mxu0 %v1258
        %2278 = vmatprep.subr.mxu0 %v1264
        %2279 = vmatpush1.msra.mxu0 %v1263
        %2280 = vmatprep.subr.mxu0 %v1269
        %2281 = vmatpush1.msra.mxu0 %v1268
        %2282 = vmatprep.subr.mxu0 %v1274
        %2283 = vmatpush1.msra.mxu0 %v1273
        %2284 = vmatprep.subr.mxu0 %v1279
        %2285 = vmatpush1.msra.mxu0 %v1278
        %2286 = vmatprep.subr.mxu0 %v1284
        %2287 = vmatpush1.msra.mxu0 %v1283
        %2288 = vmatprep.subr.mxu0 %v1289
        %2289 = vmatpush1.msra.mxu0 %v1288
        %2290 = vmatprep.subr.mxu0 %v1294
        %2291 = vmatpush1.msra.mxu0 %v1293
        %2292 = vmatprep.subr.mxu0 %v1299
        %2293 = vmatpush1.msra.mxu0 %v1298
        %2294 = vmatprep.subr.mxu0 %v1304
        %2295 = vmatpush1.msra.mxu0 %v1303
        %2296 = vmatprep.subr.mxu0 %v1309
        %2297 = vmatpush1.msra.mxu0 %v1308
        %2298 = vmatprep.subr.mxu0 %v1314
        %2299 = vmatpush1.msra.mxu0 %v1313
        %2300 = vmatprep.subr.mxu0 %v1319
        %2301 = vmatpush1.msra.mxu0 %v1318
        %2302 = vmatprep.subr.mxu0 %v1324
        %2303 = vmatpush1.msra.mxu0 %v1323
        %2304 = vmatprep.subr.mxu0 %v1329
        %2305 = vmatpush1.msra.mxu0 %v1328
        %2306 = vmatprep.subr.mxu0 %v1334
        %2307 = vmatpush1.msra.mxu0 %v1333
        %2308 = vmatprep.subr.mxu0 %v1339
        %2309 = vmatpush1.msra.mxu0 %v1338
        %2310 = vmatprep.subr.mxu0 %v1344
        %2311 = vmatpush1.msra.mxu0 %v1343
        %2312 = vmatprep.subr.mxu0 %v1349
        %2313 = vmatpush1.msra.mxu0 %v1348
        %2314 = vmatprep.subr.mxu0 %v1354
        %2315 = vmatpush1.msra.mxu0 %v1353
        %2316 = vmatprep.subr.mxu0 %v1359
        %2317 = vmatpush1.msra.mxu0 %v1358
        %2318 = vmatprep.subr.mxu0 %v1364
        %2319 = vmatpush1.msra.mxu0 %v1363
        %2320 = vmatprep.subr.mxu0 %v1369
        %2321 = vmatpush1.msra.mxu0 %v1368
        %2322 = vmatprep.subr.mxu0 %v1374
        %2323 = vmatpush1.msra.mxu0 %v1373
        %2324 = vmatprep.mubr.f32.mxu0 %v910
        %2325 = vmatmul.mubr.f32.gmra.mrb[0].mxu0 %v909
        %v2326 = vpop.f32.mrb[0].mxu0
        %v2327 = vadd.f32 %v1898, %v2326
        %v2328 = vpop.f32.mrb[0].mxu0
        %v2329 = vadd.f32 %v1900, %v2328
        %2330 = vdwg.mxu0
        %2331 = vmatprep.subr.mxu0 %v1379
        %2332 = vmatpush1.msra.mxu0 %v1378
        %2333 = vmatprep.subr.mxu0 %v1384
        %2334 = vmatpush1.msra.mxu0 %v1383
        %2335 = vmatprep.subr.mxu0 %v1389
        %2336 = vmatpush1.msra.mxu0 %v1388
        %2337 = vmatprep.subr.mxu0 %v1394
        %2338 = vmatpush1.msra.mxu0 %v1393
        %2339 = vmatprep.subr.mxu0 %v1399
        %2340 = vmatpush1.msra.mxu0 %v1398
        %2341 = vmatprep.subr.mxu0 %v1404
        %2342 = vmatpush1.msra.mxu0 %v1403
        %2343 = vmatprep.subr.mxu0 %v1409
        %2344 = vmatpush1.msra.mxu0 %v1408
        %2345 = vmatprep.subr.mxu0 %v1414
        %2346 = vmatpush1.msra.mxu0 %v1413
        %2347 = vmatprep.subr.mxu0 %v1419
        %2348 = vmatpush1.msra.mxu0 %v1418
        %2349 = vmatprep.subr.mxu0 %v1424
        %2350 = vmatpush1.msra.mxu0 %v1423
        %2351 = vmatprep.subr.mxu0 %v1429
        %2352 = vmatpush1.msra.mxu0 %v1428
        %2353 = vmatprep.subr.mxu0 %v1434
        %2354 = vmatpush1.msra.mxu0 %v1433
        %2355 = vmatprep.subr.mxu0 %v1439
        %2356 = vmatpush1.msra.mxu0 %v1438
        %2357 = vmatprep.subr.mxu0 %v1444
        %2358 = vmatpush1.msra.mxu0 %v1443
        %2359 = vmatprep.subr.mxu0 %v1449
        %2360 = vmatpush1.msra.mxu0 %v1448
        %2361 = vmatprep.subr.mxu0 %v1454
        %2362 = vmatpush1.msra.mxu0 %v1453
        %2363 = vmatprep.subr.mxu0 %v1459
        %2364 = vmatpush1.msra.mxu0 %v1458
        %2365 = vmatprep.subr.mxu0 %v1464
        %2366 = vmatpush1.msra.mxu0 %v1463
        %2367 = vmatprep.subr.mxu0 %v1469
        %2368 = vmatpush1.msra.mxu0 %v1468
        %2369 = vmatprep.subr.mxu0 %v1474
        %2370 = vmatpush1.msra.mxu0 %v1473
        %2371 = vmatprep.subr.mxu0 %v1479
        %2372 = vmatpush1.msra.mxu0 %v1478
        %2373 = vmatprep.subr.mxu0 %v1484
        %2374 = vmatpush1.msra.mxu0 %v1483
        %2375 = vmatprep.subr.mxu0 %v1489
        %2376 = vmatpush1.msra.mxu0 %v1488
        %2377 = vmatprep.subr.mxu0 %v1494
        %2378 = vmatpush1.msra.mxu0 %v1493
        %2379 = vmatprep.subr.mxu0 %v1499
        %2380 = vmatpush1.msra.mxu0 %v1498
        %2381 = vmatprep.subr.mxu0 %v1504
        %2382 = vmatpush1.msra.mxu0 %v1503
        %2383 = vmatprep.subr.mxu0 %v1509
        %2384 = vmatpush1.msra.mxu0 %v1508
        %2385 = vmatprep.subr.mxu0 %v1514
        %2386 = vmatpush1.msra.mxu0 %v1513
        %2387 = vmatprep.subr.mxu0 %v1519
        %2388 = vmatpush1.msra.mxu0 %v1518
        %2389 = vmatprep.subr.mxu0 %v1524
        %2390 = vmatpush1.msra.mxu0 %v1523
        %2391 = vmatprep.subr.mxu0 %v1529
        %2392 = vmatpush1.msra.mxu0 %v1528
        %2393 = vmatprep.subr.mxu0 %v1534
        %2394 = vmatpush1.msra.mxu0 %v1533
        %2395 = vmatprep.mubr.f32.mxu0 %v912
        %2396 = vmatmul.mubr.f32.gmra.mrb[0].mxu0 %v911
        %v2397 = vpop.f32.mrb[0].mxu0
        %v2398 = vadd.f32 %v2327, %v2397
        %v2399 = vpop.f32.mrb[0].mxu0
        %v2400 = vadd.f32 %v2329, %v2399
        %2401 = vdwg.mxu0
        %2402 = vmatprep.subr.mxu0 %v1539
        %2403 = vmatpush1.msra.mxu0 %v1538
        %2404 = vmatprep.subr.mxu0 %v1544
        %2405 = vmatpush1.msra.mxu0 %v1543
        %2406 = vmatprep.subr.mxu0 %v1549
        %2407 = vmatpush1.msra.mxu0 %v1548
        %2408 = vmatprep.subr.mxu0 %v1554
        %2409 = vmatpush1.msra.mxu0 %v1553
        %2410 = vmatprep.subr.mxu0 %v1559
        %2411 = vmatpush1.msra.mxu0 %v1558
        %2412 = vmatprep.subr.mxu0 %v1564
        %2413 = vmatpush1.msra.mxu0 %v1563
        %2414 = vmatprep.subr.mxu0 %v1569
        %2415 = vmatpush1.msra.mxu0 %v1568
        %2416 = vmatprep.subr.mxu0 %v1574
        %2417 = vmatpush1.msra.mxu0 %v1573
        %2418 = vmatprep.subr.mxu0 %v1579
        %2419 = vmatpush1.msra.mxu0 %v1578
        %2420 = vmatprep.subr.mxu0 %v1584
        %2421 = vmatpush1.msra.mxu0 %v1583
        %2422 = vmatprep.subr.mxu0 %v1589
        %2423 = vmatpush1.msra.mxu0 %v1588
        %2424 = vmatprep.subr.mxu0 %v1594
        %2425 = vmatpush1.msra.mxu0 %v1593
        %2426 = vmatprep.subr.mxu0 %v1599
        %2427 = vmatpush1.msra.mxu0 %v1598
        %2428 = vmatprep.subr.mxu0 %v1604
        %2429 = vmatpush1.msra.mxu0 %v1603
        %2430 = vmatprep.subr.mxu0 %v1609
        %2431 = vmatpush1.msra.mxu0 %v1608
        %2432 = vmatprep.subr.mxu0 %v1614
        %2433 = vmatpush1.msra.mxu0 %v1613
        %2434 = vmatprep.subr.mxu0 %v1619
        %2435 = vmatpush1.msra.mxu0 %v1618
        %2436 = vmatprep.subr.mxu0 %v1624
        %2437 = vmatpush1.msra.mxu0 %v1623
        %2438 = vmatprep.subr.mxu0 %v1629
        %2439 = vmatpush1.msra.mxu0 %v1628
        %2440 = vmatprep.subr.mxu0 %v1634
        %2441 = vmatpush1.msra.mxu0 %v1633
        %2442 = vmatprep.subr.mxu0 %v1639
        %2443 = vmatpush1.msra.mxu0 %v1638
        %2444 = vmatprep.subr.mxu0 %v1644
        %2445 = vmatpush1.msra.mxu0 %v1643
        %2446 = vmatprep.subr.mxu0 %v1649
        %2447 = vmatpush1.msra.mxu0 %v1648
        %2448 = vmatprep.subr.mxu0 %v1654
        %2449 = vmatpush1.msra.mxu0 %v1653
        %2450 = vmatprep.subr.mxu0 %v1659
        %2451 = vmatpush1.msra.mxu0 %v1658
        %2452 = vmatprep.subr.mxu0 %v1664
        %2453 = vmatpush1.msra.mxu0 %v1663
        %2454 = vmatprep.subr.mxu0 %v1669
        %2455 = vmatpush1.msra.mxu0 %v1668
        %2456 = vmatprep.subr.mxu0 %v1674
        %2457 = vmatpush1.msra.mxu0 %v1673
        %2458 = vmatprep.subr.mxu0 %v1679
        %2459 = vmatpush1.msra.mxu0 %v1678
        %2460 = vmatprep.subr.mxu0 %v1684
        %2461 = vmatpush1.msra.mxu0 %v1683
        %2462 = vmatprep.subr.mxu0 %v1689
        %2463 = vmatpush1.msra.mxu0 %v1688
        %2464 = vmatprep.subr.mxu0 %v1694
        %2465 = vmatpush1.msra.mxu0 %v1693
        %2466 = vmatprep.mubr.f32.mxu0 %v914
        %2467 = vmatmul.mubr.f32.gmra.mrb[0].mxu0 %v913
        %v2468 = vpop.f32.mrb[0].mxu0
        %v2469 = vadd.f32 %v2398, %v2468
        %v2470 = vpop.f32.mrb[0].mxu0
        %v2471 = vadd.f32 %v2400, %v2470
        %2472 = vdwg.mxu0
        %2473 = vmatprep.subr.mxu0 %v1699
        %2474 = vmatpush1.msra.mxu0 %v1698
        %2475 = vmatprep.subr.mxu0 %v1704
        %2476 = vmatpush1.msra.mxu0 %v1703
        %2477 = vmatprep.subr.mxu0 %v1709
        %2478 = vmatpush1.msra.mxu0 %v1708
        %2479 = vmatprep.subr.mxu0 %v1714
        %2480 = vmatpush1.msra.mxu0 %v1713
        %2481 = vmatprep.subr.mxu0 0.0
        %2482 = vmatpush1.msra.mxu0 0.0
        %2483 = vmatprep.subr.mxu0 0.0
        %2484 = vmatpush1.msra.mxu0 0.0
        %2485 = vmatprep.subr.mxu0 0.0
        %2486 = vmatpush1.msra.mxu0 0.0
        %2487 = vmatprep.subr.mxu0 0.0
        %2488 = vmatpush1.msra.mxu0 0.0
        %2489 = vmatprep.subr.mxu0 0.0
        %2490 = vmatpush1.msra.mxu0 0.0
        %2491 = vmatprep.subr.mxu0 0.0
        %2492 = vmatpush1.msra.mxu0 0.0
        %2493 = vmatprep.subr.mxu0 0.0
        %2494 = vmatpush1.msra.mxu0 0.0
        %2495 = vmatprep.subr.mxu0 0.0
        %2496 = vmatpush1.msra.mxu0 0.0
        %2497 = vmatprep.subr.mxu0 0.0
        %2498 = vmatpush1.msra.mxu0 0.0
        %2499 = vmatprep.subr.mxu0 0.0
        %2500 = vmatpush1.msra.mxu0 0.0
        %2501 = vmatprep.subr.mxu0 0.0
        %2502 = vmatpush1.msra.mxu0 0.0
        %2503 = vmatprep.subr.mxu0 0.0
        %2504 = vmatpush1.msra.mxu0 0.0
        %2505 = vmatprep.subr.mxu0 0.0
        %2506 = vmatpush1.msra.mxu0 0.0
        %2507 = vmatprep.subr.mxu0 0.0
        %2508 = vmatpush1.msra.mxu0 0.0
        %2509 = vmatprep.subr.mxu0 0.0
        %2510 = vmatpush1.msra.mxu0 0.0
        %2511 = vmatprep.subr.mxu0 0.0
        %2512 = vmatpush1.msra.mxu0 0.0
        %2513 = vmatprep.subr.mxu0 0.0
        %2514 = vmatpush1.msra.mxu0 0.0
        %2515 = vmatprep.subr.mxu0 0.0
        %2516 = vmatpush1.msra.mxu0 0.0
        %2517 = vmatprep.subr.mxu0 0.0
        %2518 = vmatpush1.msra.mxu0 0.0
        %2519 = vmatprep.subr.mxu0 0.0
        %2520 = vmatpush1.msra.mxu0 0.0
        %2521 = vmatprep.subr.mxu0 0.0
        %2522 = vmatpush1.msra.mxu0 0.0
        %2523 = vmatprep.subr.mxu0 0.0
        %2524 = vmatpush1.msra.mxu0 0.0
        %2525 = vmatprep.subr.mxu0 0.0
        %2526 = vmatpush1.msra.mxu0 0.0
        %2527 = vmatprep.subr.mxu0 0.0
        %2528 = vmatpush1.msra.mxu0 0.0
        %2529 = vmatprep.subr.mxu0 0.0
        %2530 = vmatpush1.msra.mxu0 0.0
        %2531 = vmatprep.subr.mxu0 0.0
        %2532 = vmatpush1.msra.mxu0 0.0
        %2533 = vmatprep.subr.mxu0 0.0
        %2534 = vmatpush1.msra.mxu0 0.0
        %2535 = vmatprep.subr.mxu0 0.0
        %2536 = vmatpush1.msra.mxu0 0.0
        %2537 = vmatprep.mubr.f32.mxu0 0.0
        %2538 = vmatmul.mubr.f32.gmra.mrb[0].mxu0 %v1974
        %v2539 = vpop.f32.mrb[0].mxu0
        %v2540 = vadd.f32 %v2469, %v2539
        %v2541 = vpop.f32.mrb[0].mxu0
        %v2542 = vadd.f32 %v2471, %v2541
        %2543 = vdwg.mxu0
        %2544 = vmatprep.subr.mxu0 0.0
        %2545 = vmatpush1.msra.mxu0 %v1220
        %2546 = vmatprep.subr.mxu0 0.0
        %2547 = vmatpush1.msra.mxu0 %v1225
        %2548 = vmatprep.subr.mxu0 0.0
        %2549 = vmatpush1.msra.mxu0 %v1230
        %2550 = vmatprep.subr.mxu0 0.0
        %2551 = vmatpush1.msra.mxu0 %v1235
        %2552 = vmatprep.subr.mxu0 0.0
        %2553 = vmatpush1.msra.mxu0 %v1240
        %2554 = vmatprep.subr.mxu0 0.0
        %2555 = vmatpush1.msra.mxu0 %v1245
        %2556 = vmatprep.subr.mxu0 0.0
        %2557 = vmatpush1.msra.mxu0 %v1250
        %2558 = vmatprep.subr.mxu0 0.0
        %2559 = vmatpush1.msra.mxu0 %v1255
        %2560 = vmatprep.subr.mxu0 0.0
        %2561 = vmatpush1.msra.mxu0 %v1260
        %2562 = vmatprep.subr.mxu0 0.0
        %2563 = vmatpush1.msra.mxu0 %v1265
        %2564 = vmatprep.subr.mxu0 0.0
        %2565 = vmatpush1.msra.mxu0 %v1270
        %2566 = vmatprep.subr.mxu0 0.0
        %2567 = vmatpush1.msra.mxu0 %v1275
        %2568 = vmatprep.subr.mxu0 0.0
        %2569 = vmatpush1.msra.mxu0 %v1280
        %2570 = vmatprep.subr.mxu0 0.0
        %2571 = vmatpush1.msra.mxu0 %v1285
        %2572 = vmatprep.subr.mxu0 0.0
        %2573 = vmatpush1.msra.mxu0 %v1290
        %2574 = vmatprep.subr.mxu0 0.0
        %2575 = vmatpush1.msra.mxu0 %v1295
        %2576 = vmatprep.subr.mxu0 0.0
        %2577 = vmatpush1.msra.mxu0 %v1300
        %2578 = vmatprep.subr.mxu0 0.0
        %2579 = vmatpush1.msra.mxu0 %v1305
        %2580 = vmatprep.subr.mxu0 0.0
        %2581 = vmatpush1.msra.mxu0 %v1310
        %2582 = vmatprep.subr.mxu0 0.0
        %2583 = vmatpush1.msra.mxu0 %v1315
        %2584 = vmatprep.subr.mxu0 0.0
        %2585 = vmatpush1.msra.mxu0 %v1320
        %2586 = vmatprep.subr.mxu0 0.0
        %2587 = vmatpush1.msra.mxu0 %v1325
        %2588 = vmatprep.subr.mxu0 0.0
        %2589 = vmatpush1.msra.mxu0 %v1330
        %2590 = vmatprep.subr.mxu0 0.0
        %2591 = vmatpush1.msra.mxu0 %v1335
        %2592 = vmatprep.subr.mxu0 0.0
        %2593 = vmatpush1.msra.mxu0 %v1340
        %2594 = vmatprep.subr.mxu0 0.0
        %2595 = vmatpush1.msra.mxu0 %v1345
        %2596 = vmatprep.subr.mxu0 0.0
        %2597 = vmatpush1.msra.mxu0 %v1350
        %2598 = vmatprep.subr.mxu0 0.0
        %2599 = vmatpush1.msra.mxu0 %v1355
        %2600 = vmatprep.subr.mxu0 0.0
        %2601 = vmatpush1.msra.mxu0 %v1360
        %2602 = vmatprep.subr.mxu0 0.0
        %2603 = vmatpush1.msra.mxu0 %v1365
        %2604 = vmatprep.subr.mxu0 0.0
        %2605 = vmatpush1.msra.mxu0 %v1370
        %2606 = vmatprep.subr.mxu0 0.0
        %2607 = vmatpush1.msra.mxu0 %v1375
        %2608 = vmatprep.mubr.f32.mxu0 %v910
        %2609 = vmatmul.mubr.f32.gmra.mrb[0].mxu0 %v909
        %v2610 = vpop.f32.mrb[0].mxu0
        %v2611 = vadd.f32 %v1969, %v2610
        %v2612 = vpop.f32.mrb[0].mxu0
        %2613 = vdwg.mxu0
        %2614 = vmatprep.subr.mxu0 0.0
        %2615 = vmatpush1.msra.mxu0 %v1380
        %2616 = vmatprep.subr.mxu0 0.0
        %2617 = vmatpush1.msra.mxu0 %v1385
        %2618 = vmatprep.subr.mxu0 0.0
        %2619 = vmatpush1.msra.mxu0 %v1390
        %2620 = vmatprep.subr.mxu0 0.0
        %2621 = vmatpush1.msra.mxu0 %v1395
        %2622 = vmatprep.subr.mxu0 0.0
        %2623 = vmatpush1.msra.mxu0 %v1400
        %2624 = vmatprep.subr.mxu0 0.0
        %2625 = vmatpush1.msra.mxu0 %v1405
        %2626 = vmatprep.subr.mxu0 0.0
        %2627 = vmatpush1.msra.mxu0 %v1410
        %2628 = vmatprep.subr.mxu0 0.0
        %2629 = vmatpush1.msra.mxu0 %v1415
        %2630 = vmatprep.subr.mxu0 0.0
        %2631 = vmatpush1.msra.mxu0 %v1420
        %2632 = vmatprep.subr.mxu0 0.0
        %2633 = vmatpush1.msra.mxu0 %v1425
        %2634 = vmatprep.subr.mxu0 0.0
        %2635 = vmatpush1.msra.mxu0 %v1430
        %2636 = vmatprep.subr.mxu0 0.0
        %2637 = vmatpush1.msra.mxu0 %v1435
        %2638 = vmatprep.subr.mxu0 0.0
        %2639 = vmatpush1.msra.mxu0 %v1440
        %2640 = vmatprep.subr.mxu0 0.0
        %2641 = vmatpush1.msra.mxu0 %v1445
        %2642 = vmatprep.subr.mxu0 0.0
        %2643 = vmatpush1.msra.mxu0 %v1450
        %2644 = vmatprep.subr.mxu0 0.0
        %2645 = vmatpush1.msra.mxu0 %v1455
        %2646 = vmatprep.subr.mxu0 0.0
        %2647 = vmatpush1.msra.mxu0 %v1460
        %2648 = vmatprep.subr.mxu0 0.0
        %2649 = vmatpush1.msra.mxu0 %v1465
        %2650 = vmatprep.subr.mxu0 0.0
        %2651 = vmatpush1.msra.mxu0 %v1470
        %2652 = vmatprep.subr.mxu0 0.0
        %2653 = vmatpush1.msra.mxu0 %v1475
        %2654 = vmatprep.subr.mxu0 0.0
        %2655 = vmatpush1.msra.mxu0 %v1480
        %2656 = vmatprep.subr.mxu0 0.0
        %2657 = vmatpush1.msra.mxu0 %v1485
        %2658 = vmatprep.subr.mxu0 0.0
        %2659 = vmatpush1.msra.mxu0 %v1490
        %2660 = vmatprep.subr.mxu0 0.0
        %2661 = vmatpush1.msra.mxu0 %v1495
        %2662 = vmatprep.subr.mxu0 0.0
        %2663 = vmatpush1.msra.mxu0 %v1500
        %2664 = vmatprep.subr.mxu0 0.0
        %2665 = vmatpush1.msra.mxu0 %v1505
        %2666 = vmatprep.subr.mxu0 0.0
        %2667 = vmatpush1.msra.mxu0 %v1510
        %2668 = vmatprep.subr.mxu0 0.0
        %2669 = vmatpush1.msra.mxu0 %v1515
        %2670 = vmatprep.subr.mxu0 0.0
        %2671 = vmatpush1.msra.mxu0 %v1520
        %2672 = vmatprep.subr.mxu0 0.0
        %2673 = vmatpush1.msra.mxu0 %v1525
        %2674 = vmatprep.subr.mxu0 0.0
        %2675 = vmatpush1.msra.mxu0 %v1530
        %2676 = vmatprep.subr.mxu0 0.0
        %2677 = vmatpush1.msra.mxu0 %v1535
        %2678 = vmatprep.mubr.f32.mxu0 %v912
        %2679 = vmatmul.mubr.f32.gmra.mrb[0].mxu0 %v911
        %v2680 = vpop.f32.mrb[0].mxu0
        %v2681 = vadd.f32 %v2611, %v2680
        %v2682 = vpop.f32.mrb[0].mxu0
        %2683 = vdwg.mxu0
        %2684 = vmatprep.subr.mxu0 0.0
        %2685 = vmatpush1.msra.mxu0 %v1540
        %2686 = vmatprep.subr.mxu0 0.0
        %2687 = vmatpush1.msra.mxu0 %v1545
        %2688 = vmatprep.subr.mxu0 0.0
        %2689 = vmatpush1.msra.mxu0 %v1550
        %2690 = vmatprep.subr.mxu0 0.0
        %2691 = vmatpush1.msra.mxu0 %v1555
        %2692 = vmatprep.subr.mxu0 0.0
        %2693 = vmatpush1.msra.mxu0 %v1560
        %2694 = vmatprep.subr.mxu0 0.0
        %2695 = vmatpush1.msra.mxu0 %v1565
        %2696 = vmatprep.subr.mxu0 0.0
        %2697 = vmatpush1.msra.mxu0 %v1570
        %2698 = vmatprep.subr.mxu0 0.0
        %2699 = vmatpush1.msra.mxu0 %v1575
        %2700 = vmatprep.subr.mxu0 0.0
        %2701 = vmatpush1.msra.mxu0 %v1580
        %2702 = vmatprep.subr.mxu0 0.0
        %2703 = vmatpush1.msra.mxu0 %v1585
        %2704 = vmatprep.subr.mxu0 0.0
        %2705 = vmatpush1.msra.mxu0 %v1590
        %2706 = vmatprep.subr.mxu0 0.0
        %2707 = vmatpush1.msra.mxu0 %v1595
        %2708 = vmatprep.subr.mxu0 0.0
        %2709 = vmatpush1.msra.mxu0 %v1600
        %2710 = vmatprep.subr.mxu0 0.0
        %2711 = vmatpush1.msra.mxu0 %v1605
        %2712 = vmatprep.subr.mxu0 0.0
        %2713 = vmatpush1.msra.mxu0 %v1610
        %2714 = vmatprep.subr.mxu0 0.0
        %2715 = vmatpush1.msra.mxu0 %v1615
        %2716 = vmatprep.subr.mxu0 0.0
        %2717 = vmatpush1.msra.mxu0 %v1620
        %2718 = vmatprep.subr.mxu0 0.0
        %2719 = vmatpush1.msra.mxu0 %v1625
        %2720 = vmatprep.subr.mxu0 0.0
        %2721 = vmatpush1.msra.mxu0 %v1630
        %2722 = vmatprep.subr.mxu0 0.0
        %2723 = vmatpush1.msra.mxu0 %v1635
        %2724 = vmatprep.subr.mxu0 0.0
        %2725 = vmatpush1.msra.mxu0 %v1640
        %2726 = vmatprep.subr.mxu0 0.0
        %2727 = vmatpush1.msra.mxu0 %v1645
        %2728 = vmatprep.subr.mxu0 0.0
        %2729 = vmatpush1.msra.mxu0 %v1650
        %2730 = vmatprep.subr.mxu0 0.0
        %2731 = vmatpush1.msra.mxu0 %v1655
        %2732 = vmatprep.subr.mxu0 0.0
        %2733 = vmatpush1.msra.mxu0 %v1660
        %2734 = vmatprep.subr.mxu0 0.0
        %2735 = vmatpush1.msra.mxu0 %v1665
        %2736 = vmatprep.subr.mxu0 0.0
        %2737 = vmatpush1.msra.mxu0 %v1670
        %2738 = vmatprep.subr.mxu0 0.0
        %2739 = vmatpush1.msra.mxu0 %v1675
        %2740 = vmatprep.subr.mxu0 0.0
        %2741 = vmatpush1.msra.mxu0 %v1680
        %2742 = vmatprep.subr.mxu0 0.0
        %2743 = vmatpush1.msra.mxu0 %v1685
        %2744 = vmatprep.subr.mxu0 0.0
        %2745 = vmatpush1.msra.mxu0 %v1690
        %2746 = vmatprep.subr.mxu0 0.0
        %2747 = vmatpush1.msra.mxu0 %v1695
        %2748 = vmatprep.mubr.f32.mxu0 %v914
        %2749 = vmatmul.mubr.f32.gmra.mrb[0].mxu0 %v913
        %v2750 = vpop.f32.mrb[0].mxu0
        %v2751 = vadd.f32 %v2681, %v2750
        %v2752 = vpop.f32.mrb[0].mxu0
        %2753 = vdwg.mxu0
        %2754 = vmatprep.subr.mxu0 0.0
        %2755 = vmatpush1.msra.mxu0 %v1700
        %2756 = vmatprep.subr.mxu0 0.0
        %2757 = vmatpush1.msra.mxu0 %v1705
        %2758 = vmatprep.subr.mxu0 0.0
        %2759 = vmatpush1.msra.mxu0 %v1710
        %2760 = vmatprep.subr.mxu0 0.0
        %2761 = vmatpush1.msra.mxu0 %v1715
        %2762 = vmatprep.subr.mxu0 0.0
        %2763 = vmatpush1.msra.mxu0 0.0
        %2764 = vmatprep.subr.mxu0 0.0
        %2765 = vmatpush1.msra.mxu0 0.0
        %2766 = vmatprep.subr.mxu0 0.0
        %2767 = vmatpush1.msra.mxu0 0.0
        %2768 = vmatprep.subr.mxu0 0.0
        %2769 = vmatpush1.msra.mxu0 0.0
        %2770 = vmatprep.subr.mxu0 0.0
        %2771 = vmatpush1.msra.mxu0 0.0
        %2772 = vmatprep.subr.mxu0 0.0
        %2773 = vmatpush1.msra.mxu0 0.0
        %2774 = vmatprep.subr.mxu0 0.0
        %2775 = vmatpush1.msra.mxu0 0.0
        %2776 = vmatprep.subr.mxu0 0.0
        %2777 = vmatpush1.msra.mxu0 0.0
        %2778 = vmatprep.subr.mxu0 0.0
        %2779 = vmatpush1.msra.mxu0 0.0
        %2780 = vmatprep.subr.mxu0 0.0
        %2781 = vmatpush1.msra.mxu0 0.0
        %2782 = vmatprep.subr.mxu0 0.0
        %2783 = vmatpush1.msra.mxu0 0.0
        %2784 = vmatprep.subr.mxu0 0.0
        %2785 = vmatpush1.msra.mxu0 0.0
        %2786 = vmatprep.subr.mxu0 0.0
        %2787 = vmatpush1.msra.mxu0 0.0
        %2788 = vmatprep.subr.mxu0 0.0
        %2789 = vmatpush1.msra.mxu0 0.0
        %2790 = vmatprep.subr.mxu0 0.0
        %2791 = vmatpush1.msra.mxu0 0.0
        %2792 = vmatprep.subr.mxu0 0.0
        %2793 = vmatpush1.msra.mxu0 0.0
        %2794 = vmatprep.subr.mxu0 0.0
        %2795 = vmatpush1.msra.mxu0 0.0
        %2796 = vmatprep.subr.mxu0 0.0
        %2797 = vmatpush1.msra.mxu0 0.0
        %2798 = vmatprep.subr.mxu0 0.0
        %2799 = vmatpush1.msra.mxu0 0.0
        %2800 = vmatprep.subr.mxu0 0.0
        %2801 = vmatpush1.msra.mxu0 0.0
        %2802 = vmatprep.subr.mxu0 0.0
        %2803 = vmatpush1.msra.mxu0 0.0
        %2804 = vmatprep.subr.mxu0 0.0
        %2805 = vmatpush1.msra.mxu0 0.0
        %2806 = vmatprep.subr.mxu0 0.0
        %2807 = vmatpush1.msra.mxu0 0.0
        %2808 = vmatprep.subr.mxu0 0.0
        %2809 = vmatpush1.msra.mxu0 0.0
        %2810 = vmatprep.subr.mxu0 0.0
        %2811 = vmatpush1.msra.mxu0 0.0
        %2812 = vmatprep.subr.mxu0 0.0
        %2813 = vmatpush1.msra.mxu0 0.0
        %2814 = vmatprep.subr.mxu0 0.0
        %2815 = vmatpush1.msra.mxu0 0.0
        %2816 = vmatprep.subr.mxu0 0.0
        %2817 = vmatpush1.msra.mxu0 0.0
        %2818 = vmatprep.mubr.f32.mxu0 0.0
        %2819 = vmatmul.mubr.f32.gmra.mrb[0].mxu0 %v1974
        %v2820 = vpop.f32.mrb[0].mxu0
        %v2821 = vadd.f32 %v2751, %v2820
        %v2822 = vpop.f32.mrb[0].mxu0
        %2823 = vdwg.mxu0
        %v2824 = vld [vmem:[%s476] sm:$0x1f]
        %v2826 = vlaneseq
        %v2827 = vshrl.u32 %v2826, 7
        %v2828 = vsub.s32 0, %v2827
        %v2829 = vrot.slane %v2824, %v2828
        %v2830 = vlaneseq
        %v2831 = vshrl.u32 %v2830, 7
        %v2832 = vsub.s32 1, %v2831
        %v2833 = vrot.slane %v2824, %v2832
        %v2834 = vlaneseq
        %v2835 = vshrl.u32 %v2834, 7
        %v2836 = vsub.s32 2, %v2835
        %v2837 = vrot.slane %v2824, %v2836
        %v2838 = vlaneseq
        %v2839 = vshrl.u32 %v2838, 7
        %v2840 = vsub.s32 3, %v2839
        %v2841 = vrot.slane %v2824, %v2840
        %v2842 = vlaneseq
        %v2843 = vshrl.u32 %v2842, 7
        %v2844 = vsub.s32 4, %v2843
        %v2845 = vrot.slane %v2824, %v2844
        %v2851 = vadd.f32 %v2256, %v2829
        %v2852 = vadd.f32 %v2258, %v2833
        %v2853 = vadd.f32 %v2540, %v2837
        %v2854 = vadd.f32 %v2542, %v2841
        %v2855 = vadd.f32 %v2821, %v2845
        %v2856 = vmax.f32 %v2851, 0.0
        %v2857 = vmax.f32 %v2852, 0.0
        %v2858 = vmax.f32 %v2853, 0.0
        %v2859 = vmax.f32 %v2854, 0.0
        %v2860 = vmax.f32 %v2855, 0.0
        %v2861 = vld [vmem:[%s542] sm:$0xf]
        %v2862 = vld [vmem:[%s542 + $0x4] sm:$0xf]
        %v2863 = vld [vmem:[%s542 + $0x8] sm:$0xf]
        %v2864 = vld [vmem:[%s542 + $0xc] sm:$0xf]
        %v2865 = vld [vmem:[%s542 + $0x10] sm:$0xf]
        %v2866 = vld [vmem:[%s542 + $0x14] sm:$0xf]
        %v2867 = vld [vmem:[%s542 + $0x18] sm:$0xf]
        %v2868 = vld [vmem:[%s542 + $0x1c] sm:$0xf]
        %v2869 = vld [vmem:[%s542 + $0x20] sm:$0xf]
        %v2870 = vld [vmem:[%s542 + $0x24] sm:$0xf]
        %v2871 = vld [vmem:[%s542 + $0x28] sm:$0xf]
        %v2872 = vld [vmem:[%s542 + $0x2c] sm:$0xf]
        %v2873 = vld [vmem:[%s542 + $0x30] sm:$0xf]
        %v2874 = vld [vmem:[%s542 + $0x34] sm:$0xf]
        %v2875 = vld [vmem:[%s542 + $0x38] sm:$0xf]
        %v2876 = vld [vmem:[%s542 + $0x3c] sm:$0xf]
        %v2877 = vld [vmem:[%s542 + $0x40] sm:$0xf]
        %v2878 = vld [vmem:[%s542 + $0x44] sm:$0xf]
        %v2879 = vld [vmem:[%s542 + $0x48] sm:$0xf]
        %v2880 = vld [vmem:[%s542 + $0x4c] sm:$0xf]
        %v2881 = vld [vmem:[%s542 + $0x50] sm:$0xf]
        %v2882 = vld [vmem:[%s542 + $0x54] sm:$0xf]
        %v2883 = vld [vmem:[%s542 + $0x58] sm:$0xf]
        %v2884 = vld [vmem:[%s542 + $0x5c] sm:$0xf]
        %v2885 = vld [vmem:[%s542 + $0x60] sm:$0xf]
        %v2886 = vld [vmem:[%s542 + $0x64] sm:$0xf]
        %v2887 = vld [vmem:[%s542 + $0x68] sm:$0xf]
        %v2888 = vld [vmem:[%s542 + $0x6c] sm:$0xf]
        %v2889 = vld [vmem:[%s542 + $0x70] sm:$0xf]
        %v2890 = vld [vmem:[%s542 + $0x74] sm:$0xf]
        %v2891 = vld [vmem:[%s542 + $0x78] sm:$0xf]
        %v2892 = vld [vmem:[%s542 + $0x7c] sm:$0xf]
        %v2893 = vld [vmem:[%s542 + $0x80] sm:$0xf]
        %v2894 = vld [vmem:[%s542 + $0x84] sm:$0xf]
        %v2895 = vld [vmem:[%s542 + $0x88] sm:$0xf]
        %v2896 = vld [vmem:[%s542 + $0x8c] sm:$0xf]
        %v2897 = vld [vmem:[%s542 + $0x90] sm:$0xf]
        %v2898 = vld [vmem:[%s542 + $0x94] sm:$0xf]
        %v2899 = vld [vmem:[%s542 + $0x98] sm:$0xf]
        %v2900 = vld [vmem:[%s542 + $0x9c] sm:$0xf]
        %v2901 = vld [vmem:[%s542 + $0xa0] sm:$0xf]
        %v2902 = vld [vmem:[%s542 + $0xa4] sm:$0xf]
        %v2903 = vld [vmem:[%s542 + $0xa8] sm:$0xf]
        %v2904 = vld [vmem:[%s542 + $0xac] sm:$0xf]
        %v2905 = vld [vmem:[%s542 + $0xb0] sm:$0xf]
        %v2906 = vld [vmem:[%s542 + $0xb4] sm:$0xf]
        %v2907 = vld [vmem:[%s542 + $0xb8] sm:$0xf]
        %v2908 = vld [vmem:[%s542 + $0xbc] sm:$0xf]
        %v2909 = vld [vmem:[%s542 + $0xc0] sm:$0xf]
        %v2910 = vld [vmem:[%s542 + $0xc4] sm:$0xf]
        %v2911 = vld [vmem:[%s542 + $0xc8] sm:$0xf]
        %v2912 = vld [vmem:[%s542 + $0xcc] sm:$0xf]
        %v2913 = vld [vmem:[%s542 + $0xd0] sm:$0xf]
        %v2914 = vld [vmem:[%s542 + $0xd4] sm:$0xf]
        %v2915 = vld [vmem:[%s542 + $0xd8] sm:$0xf]
        %v2916 = vld [vmem:[%s542 + $0xdc] sm:$0xf]
        %v2917 = vld [vmem:[%s542 + $0xe0] sm:$0xf]
        %v2918 = vld [vmem:[%s542 + $0xe4] sm:$0xf]
        %v2919 = vld [vmem:[%s542 + $0xe8] sm:$0xf]
        %v2920 = vld [vmem:[%s542 + $0xec] sm:$0xf]
        %v2921 = vld [vmem:[%s542 + $0xf0] sm:$0xf]
        %v2922 = vld [vmem:[%s542 + $0xf4] sm:$0xf]
        %v2923 = vld [vmem:[%s542 + $0xf8] sm:$0xf]
        %v2924 = vld [vmem:[%s542 + $0xfc] sm:$0xf]
        %v2925 = vld [vmem:[%s542 + $0x100] sm:$0xf]
        %v2926 = vld [vmem:[%s542 + $0x104] sm:$0xf]
        %v2927 = vld [vmem:[%s542 + $0x108] sm:$0xf]
        %v2928 = vld [vmem:[%s542 + $0x10c] sm:$0xf]
        %v2929 = vld [vmem:[%s542 + $0x110] sm:$0xf]
        %v2930 = vld [vmem:[%s542 + $0x114] sm:$0xf]
        %v2931 = vld [vmem:[%s542 + $0x118] sm:$0xf]
        %v2932 = vld [vmem:[%s542 + $0x11c] sm:$0xf]
        %v2933 = vld [vmem:[%s542 + $0x120] sm:$0xf]
        %v2934 = vld [vmem:[%s542 + $0x124] sm:$0xf]
        %v2935 = vld [vmem:[%s542 + $0x128] sm:$0xf]
        %v2936 = vunpack.c.l.bf16 %v2861
        %v2937 = vunpack.c.l.bf16 %v2862
        %v2938 = vunpack.c.l.bf16 %v2863
        %v2939 = vunpack.c.l.bf16 %v2864
        %v2940 = vunpack.c.l.bf16 %v2865
        %v2941 = vunpack.c.l.bf16 %v2866
        %v2942 = vunpack.c.l.bf16 %v2867
        %v2943 = vunpack.c.l.bf16 %v2868
        %v2944 = vunpack.c.l.bf16 %v2869
        %v2945 = vunpack.c.l.bf16 %v2870
        %v2946 = vunpack.c.l.bf16 %v2871
        %v2947 = vunpack.c.l.bf16 %v2872
        %v2948 = vunpack.c.l.bf16 %v2873
        %v2949 = vunpack.c.l.bf16 %v2874
        %v2950 = vunpack.c.l.bf16 %v2875
        %v2951 = vunpack.c.l.bf16 %v2876
        %v2952 = vunpack.c.l.bf16 %v2877
        %v2953 = vunpack.c.l.bf16 %v2878
        %v2954 = vunpack.c.l.bf16 %v2879
        %v2955 = vunpack.c.l.bf16 %v2880
        %v2956 = vunpack.c.l.bf16 %v2881
        %v2957 = vunpack.c.l.bf16 %v2882
        %v2958 = vunpack.c.l.bf16 %v2883
        %v2959 = vunpack.c.l.bf16 %v2884
        %v2960 = vunpack.c.l.bf16 %v2885
        %v2961 = vunpack.c.l.bf16 %v2886
        %v2962 = vunpack.c.l.bf16 %v2887
        %v2963 = vunpack.c.l.bf16 %v2888
        %v2964 = vunpack.c.l.bf16 %v2889
        %v2965 = vunpack.c.l.bf16 %v2890
        %v2966 = vunpack.c.l.bf16 %v2891
        %v2967 = vunpack.c.l.bf16 %v2892
        %v2968 = vunpack.c.l.bf16 %v2893
        %v2969 = vunpack.c.l.bf16 %v2894
        %v2970 = vunpack.c.l.bf16 %v2895
        %v2971 = vunpack.c.l.bf16 %v2896
        %v2972 = vunpack.c.l.bf16 %v2897
        %v2973 = vunpack.c.l.bf16 %v2898
        %v2974 = vunpack.c.l.bf16 %v2899
        %v2975 = vunpack.c.l.bf16 %v2900
        %v2976 = vunpack.c.l.bf16 %v2901
        %v2977 = vunpack.c.l.bf16 %v2902
        %v2978 = vunpack.c.l.bf16 %v2903
        %v2979 = vunpack.c.l.bf16 %v2904
        %v2980 = vunpack.c.l.bf16 %v2905
        %v2981 = vunpack.c.l.bf16 %v2906
        %v2982 = vunpack.c.l.bf16 %v2907
        %v2983 = vunpack.c.l.bf16 %v2908
        %v2984 = vunpack.c.l.bf16 %v2909
        %v2985 = vunpack.c.l.bf16 %v2910
        %v2986 = vunpack.c.l.bf16 %v2911
        %v2987 = vunpack.c.l.bf16 %v2912
        %v2988 = vunpack.c.l.bf16 %v2913
        %v2989 = vunpack.c.l.bf16 %v2914
        %v2990 = vunpack.c.l.bf16 %v2915
        %v2991 = vunpack.c.l.bf16 %v2916
        %v2992 = vunpack.c.l.bf16 %v2917
        %v2993 = vunpack.c.l.bf16 %v2918
        %v2994 = vunpack.c.l.bf16 %v2919
        %v2995 = vunpack.c.l.bf16 %v2920
        %v2996 = vunpack.c.l.bf16 %v2921
        %v2997 = vunpack.c.l.bf16 %v2922
        %v2998 = vunpack.c.l.bf16 %v2923
        %v2999 = vunpack.c.l.bf16 %v2924
        %v3000 = vunpack.c.l.bf16 %v2925
        %v3001 = vunpack.c.l.bf16 %v2926
        %v3002 = vunpack.c.l.bf16 %v2927
        %v3003 = vunpack.c.l.bf16 %v2928
        %v3004 = vunpack.c.l.bf16 %v2929
        %v3005 = vunpack.c.l.bf16 %v2930
        %v3006 = vunpack.c.l.bf16 %v2931
        %v3007 = vunpack.c.l.bf16 %v2932
        %v3008 = vunpack.c.l.bf16 %v2933
        %v3009 = vunpack.c.l.bf16 %v2934
        %v3010 = vunpack.c.l.bf16 %v2935
        %v3011 = vld [vmem:[%s545] sm:$0x1]
        %v3013 = vlaneseq
        %v3014 = vshrl.u32 %v3013, 7
        %v3015 = vsub.s32 0, %v3014
        %v3016 = vrot.slane %v3011, %v3015
        %vm3018 = vcmask 719872
        %v3020 = vsel %vm3018, %v2860, 0
        %3022 = vmatprep.subr.mxu0 0.0
        %3023 = vmatpush1.msra.mxu0 %v2936
        %3024 = vmatprep.subr.mxu0 0.0
        %3025 = vmatpush1.msra.mxu0 %v2937
        %3026 = vmatprep.subr.mxu0 0.0
        %3027 = vmatpush1.msra.mxu0 %v2938
        %3028 = vmatprep.subr.mxu0 0.0
        %3029 = vmatpush1.msra.mxu0 %v2939
        %3030 = vmatprep.subr.mxu0 0.0
        %3031 = vmatpush1.msra.mxu0 %v2940
        %3032 = vmatprep.subr.mxu0 0.0
        %3033 = vmatpush1.msra.mxu0 %v2941
        %3034 = vmatprep.subr.mxu0 0.0
        %3035 = vmatpush1.msra.mxu0 %v2942
        %3036 = vmatprep.subr.mxu0 0.0
        %3037 = vmatpush1.msra.mxu0 %v2943
        %3038 = vmatprep.subr.mxu0 0.0
        %3039 = vmatpush1.msra.mxu0 %v2944
        %3040 = vmatprep.subr.mxu0 0.0
        %3041 = vmatpush1.msra.mxu0 %v2945
        %3042 = vmatprep.subr.mxu0 0.0
        %3043 = vmatpush1.msra.mxu0 %v2946
        %3044 = vmatprep.subr.mxu0 0.0
        %3045 = vmatpush1.msra.mxu0 %v2947
        %3046 = vmatprep.subr.mxu0 0.0
        %3047 = vmatpush1.msra.mxu0 %v2948
        %3048 = vmatprep.subr.mxu0 0.0
        %3049 = vmatpush1.msra.mxu0 %v2949
        %3050 = vmatprep.subr.mxu0 0.0
        %3051 = vmatpush1.msra.mxu0 %v2950
        %3052 = vmatprep.subr.mxu0 0.0
        %3053 = vmatpush1.msra.mxu0 %v2951
        %3054 = vmatprep.subr.mxu0 0.0
        %3055 = vmatpush1.msra.mxu0 %v2952
        %3056 = vmatprep.subr.mxu0 0.0
        %3057 = vmatpush1.msra.mxu0 %v2953
        %3058 = vmatprep.subr.mxu0 0.0
        %3059 = vmatpush1.msra.mxu0 %v2954
        %3060 = vmatprep.subr.mxu0 0.0
        %3061 = vmatpush1.msra.mxu0 %v2955
        %3062 = vmatprep.subr.mxu0 0.0
        %3063 = vmatpush1.msra.mxu0 %v2956
        %3064 = vmatprep.subr.mxu0 0.0
        %3065 = vmatpush1.msra.mxu0 %v2957
        %3066 = vmatprep.subr.mxu0 0.0
        %3067 = vmatpush1.msra.mxu0 %v2958
        %3068 = vmatprep.subr.mxu0 0.0
        %3069 = vmatpush1.msra.mxu0 %v2959
        %3070 = vmatprep.subr.mxu0 0.0
        %3071 = vmatpush1.msra.mxu0 %v2960
        %3072 = vmatprep.subr.mxu0 0.0
        %3073 = vmatpush1.msra.mxu0 %v2961
        %3074 = vmatprep.subr.mxu0 0.0
        %3075 = vmatpush1.msra.mxu0 %v2962
        %3076 = vmatprep.subr.mxu0 0.0
        %3077 = vmatpush1.msra.mxu0 %v2963
        %3078 = vmatprep.subr.mxu0 0.0
        %3079 = vmatpush1.msra.mxu0 %v2964
        %3080 = vmatprep.subr.mxu0 0.0
        %3081 = vmatpush1.msra.mxu0 %v2965
        %3082 = vmatprep.subr.mxu0 0.0
        %3083 = vmatpush1.msra.mxu0 %v2966
        %3084 = vmatprep.subr.mxu0 0.0
        %3085 = vmatpush1.msra.mxu0 %v2967
        %3086 = vmatprep.mubr.f32.mxu0 %v2857
        %3087 = vmatmul.mubr.f32.gmra.mrb[0].mxu0 %v2856
        %v3088 = vpop.f32.mrb[0].mxu0
        %v3089 = vadd.f32 %v3016, %v3088
        %v3090 = vpop.f32.mrb[0].mxu0
        %3091 = vdwg.mxu0
        %3092 = vmatprep.subr.mxu0 0.0
        %3093 = vmatpush1.msra.mxu0 %v2968
        %3094 = vmatprep.subr.mxu0 0.0
        %3095 = vmatpush1.msra.mxu0 %v2969
        %3096 = vmatprep.subr.mxu0 0.0
        %3097 = vmatpush1.msra.mxu0 %v2970
        %3098 = vmatprep.subr.mxu0 0.0
        %3099 = vmatpush1.msra.mxu0 %v2971
        %3100 = vmatprep.subr.mxu0 0.0
        %3101 = vmatpush1.msra.mxu0 %v2972
        %3102 = vmatprep.subr.mxu0 0.0
        %3103 = vmatpush1.msra.mxu0 %v2973
        %3104 = vmatprep.subr.mxu0 0.0
        %3105 = vmatpush1.msra.mxu0 %v2974
        %3106 = vmatprep.subr.mxu0 0.0
        %3107 = vmatpush1.msra.mxu0 %v2975
        %3108 = vmatprep.subr.mxu0 0.0
        %3109 = vmatpush1.msra.mxu0 %v2976
        %3110 = vmatprep.subr.mxu0 0.0
        %3111 = vmatpush1.msra.mxu0 %v2977
        %3112 = vmatprep.subr.mxu0 0.0
        %3113 = vmatpush1.msra.mxu0 %v2978
        %3114 = vmatprep.subr.mxu0 0.0
        %3115 = vmatpush1.msra.mxu0 %v2979
        %3116 = vmatprep.subr.mxu0 0.0
        %3117 = vmatpush1.msra.mxu0 %v2980
        %3118 = vmatprep.subr.mxu0 0.0
        %3119 = vmatpush1.msra.mxu0 %v2981
        %3120 = vmatprep.subr.mxu0 0.0
        %3121 = vmatpush1.msra.mxu0 %v2982
        %3122 = vmatprep.subr.mxu0 0.0
        %3123 = vmatpush1.msra.mxu0 %v2983
        %3124 = vmatprep.subr.mxu0 0.0
        %3125 = vmatpush1.msra.mxu0 %v2984
        %3126 = vmatprep.subr.mxu0 0.0
        %3127 = vmatpush1.msra.mxu0 %v2985
        %3128 = vmatprep.subr.mxu0 0.0
        %3129 = vmatpush1.msra.mxu0 %v2986
        %3130 = vmatprep.subr.mxu0 0.0
        %3131 = vmatpush1.msra.mxu0 %v2987
        %3132 = vmatprep.subr.mxu0 0.0
        %3133 = vmatpush1.msra.mxu0 %v2988
        %3134 = vmatprep.subr.mxu0 0.0
        %3135 = vmatpush1.msra.mxu0 %v2989
        %3136 = vmatprep.subr.mxu0 0.0
        %3137 = vmatpush1.msra.mxu0 %v2990
        %3138 = vmatprep.subr.mxu0 0.0
        %3139 = vmatpush1.msra.mxu0 %v2991
        %3140 = vmatprep.subr.mxu0 0.0
        %3141 = vmatpush1.msra.mxu0 %v2992
        %3142 = vmatprep.subr.mxu0 0.0
        %3143 = vmatpush1.msra.mxu0 %v2993
        %3144 = vmatprep.subr.mxu0 0.0
        %3145 = vmatpush1.msra.mxu0 %v2994
        %3146 = vmatprep.subr.mxu0 0.0
        %3147 = vmatpush1.msra.mxu0 %v2995
        %3148 = vmatprep.subr.mxu0 0.0
        %3149 = vmatpush1.msra.mxu0 %v2996
        %3150 = vmatprep.subr.mxu0 0.0
        %3151 = vmatpush1.msra.mxu0 %v2997
        %3152 = vmatprep.subr.mxu0 0.0
        %3153 = vmatpush1.msra.mxu0 %v2998
        %3154 = vmatprep.subr.mxu0 0.0
        %3155 = vmatpush1.msra.mxu0 %v2999
        %3156 = vmatprep.mubr.f32.mxu0 %v2859
        %3157 = vmatmul.mubr.f32.gmra.mrb[0].mxu0 %v2858
        %v3158 = vpop.f32.mrb[0].mxu0
        %v3159 = vadd.f32 %v3089, %v3158
        %v3160 = vpop.f32.mrb[0].mxu0
        %3161 = vdwg.mxu0
        %3162 = vmatprep.subr.mxu0 0.0
        %3163 = vmatpush1.msra.mxu0 %v3000
        %3164 = vmatprep.subr.mxu0 0.0
        %3165 = vmatpush1.msra.mxu0 %v3001
        %3166 = vmatprep.subr.mxu0 0.0
        %3167 = vmatpush1.msra.mxu0 %v3002
        %3168 = vmatprep.subr.mxu0 0.0
        %3169 = vmatpush1.msra.mxu0 %v3003
        %3170 = vmatprep.subr.mxu0 0.0
        %3171 = vmatpush1.msra.mxu0 %v3004
        %3172 = vmatprep.subr.mxu0 0.0
        %3173 = vmatpush1.msra.mxu0 %v3005
        %3174 = vmatprep.subr.mxu0 0.0
        %3175 = vmatpush1.msra.mxu0 %v3006
        %3176 = vmatprep.subr.mxu0 0.0
        %3177 = vmatpush1.msra.mxu0 %v3007
        %3178 = vmatprep.subr.mxu0 0.0
        %3179 = vmatpush1.msra.mxu0 %v3008
        %3180 = vmatprep.subr.mxu0 0.0
        %3181 = vmatpush1.msra.mxu0 %v3009
        %3182 = vmatprep.subr.mxu0 0.0
        %3183 = vmatpush1.msra.mxu0 %v3010
        %3184 = vmatprep.subr.mxu0 0.0
        %3185 = vmatpush1.msra.mxu0 0.0
        %3186 = vmatprep.subr.mxu0 0.0
        %3187 = vmatpush1.msra.mxu0 0.0
        %3188 = vmatprep.subr.mxu0 0.0
        %3189 = vmatpush1.msra.mxu0 0.0
        %3190 = vmatprep.subr.mxu0 0.0
        %3191 = vmatpush1.msra.mxu0 0.0
        %3192 = vmatprep.subr.mxu0 0.0
        %3193 = vmatpush1.msra.mxu0 0.0
        %3194 = vmatprep.subr.mxu0 0.0
        %3195 = vmatpush1.msra.mxu0 0.0
        %3196 = vmatprep.subr.mxu0 0.0
        %3197 = vmatpush1.msra.mxu0 0.0
        %3198 = vmatprep.subr.mxu0 0.0
        %3199 = vmatpush1.msra.mxu0 0.0
        %3200 = vmatprep.subr.mxu0 0.0
        %3201 = vmatpush1.msra.mxu0 0.0
        %3202 = vmatprep.subr.mxu0 0.0
        %3203 = vmatpush1.msra.mxu0 0.0
        %3204 = vmatprep.subr.mxu0 0.0
        %3205 = vmatpush1.msra.mxu0 0.0
        %3206 = vmatprep.subr.mxu0 0.0
        %3207 = vmatpush1.msra.mxu0 0.0
        %3208 = vmatprep.subr.mxu0 0.0
        %3209 = vmatpush1.msra.mxu0 0.0
        %3210 = vmatprep.subr.mxu0 0.0
        %3211 = vmatpush1.msra.mxu0 0.0
        %3212 = vmatprep.subr.mxu0 0.0
        %3213 = vmatpush1.msra.mxu0 0.0
        %3214 = vmatprep.subr.mxu0 0.0
        %3215 = vmatpush1.msra.mxu0 0.0
        %3216 = vmatprep.subr.mxu0 0.0
        %3217 = vmatpush1.msra.mxu0 0.0
        %3218 = vmatprep.subr.mxu0 0.0
        %3219 = vmatpush1.msra.mxu0 0.0
        %3220 = vmatprep.subr.mxu0 0.0
        %3221 = vmatpush1.msra.mxu0 0.0
        %3222 = vmatprep.subr.mxu0 0.0
        %3223 = vmatpush1.msra.mxu0 0.0
        %3224 = vmatprep.subr.mxu0 0.0
        %3225 = vmatpush1.msra.mxu0 0.0
        %3226 = vmatprep.mubr.f32.mxu0 0.0
        %3227 = vmatmul.mubr.f32.gmra.mrb[0].mxu0 %v3020
        %v3228 = vpop.f32.mrb[0].mxu0
        %v3229 = vadd.f32 %v3159, %v3228
        %v3230 = vpop.f32.mrb[0].mxu0
        %3231 = vdwg.mxu0
        %vm3232 = vcmask 1024
        %3233 = vst.msk [vmem:[%s549] sm:$0x3] %vm3232, %v3229
        %p3234 = scmp.lt.s32.totalorder %s22, 1
        %s3235 = scalar_select %p3234, %s22, 1
        %s3236 = smul.addr %s3235, 2
        %s3237 = scalar_lea.vmem %s9, %s3236
        // Predicated region
        $region85: #{critic_forward.1} parent=55 // pred_check
          %p3238 = pneg %p264
        $region86: #{critic_forward.1} parent=55 // pred_check_branch
          %3240 = sbr.rel (%p3238) target = $region88
        $region87: #{critic_forward.1} parent=55 // pred_region
          _
        $region88: #{critic_forward.1} parent=55 // pred_fallthru
          _
      $region56: #{critic_forward.1} parent=5 // pred_fallthru
        _
      %p3241 = scmp.le.s32.totalorder 2, %s17
      // Predicated region
      $region89: #{critic_forward.1} parent=5 // pred_check
        %p3242 = pneg %p3241
      $region90: #{critic_forward.1} parent=5 // pred_check_branch
        %3244 = sbr.rel (%p3242) target = $region92
      $region91: #{critic_forward.1} parent=5 // pred_region
        %s3245 = ssub.s32 %s17, 2
        // Predicated region
        $region93: #{critic_forward.1} parent=91 // pred_check
          %p3246 = pneg %p270
        $region94: #{critic_forward.1} parent=91 // pred_check_branch
          %3248 = sbr.rel (%p3246) target = $region96
        $region95: #{critic_forward.1} parent=91 // pred_region
          %p3249 = scmp.lt.s32.totalorder %s23, 1
          %s3250 = scalar_select %p3249, %s23, 1
          %s3251 = smul.addr %s3250, 2
          %s3252 = scalar_lea.vmem %s9, %s3251
        $region96: #{critic_forward.1} parent=91 // pred_fallthru
          _
      $region92: #{critic_forward.1} parent=5 // pred_fallthru
        _
    $region6: #{critic_forward.1} parent=1 // loop_footer
      %s21 = sadd.s32 1, %s17
    $region7: #{critic_forward.1} parent=1 // loop_footer_branch
      %16 = sbr.rel target = $region3
    $region8: #{critic_forward.1} parent=1 // loop_exit
      _
    %3253 = vsyncpa [#allocation3], 1
    %s3254 = scalar_lea.sflag [#allocation3], 1
    %3255 = vsyncpa %s3254, 1
    %3256 = vsyncpa [#allocation5], 1

</llo_original>
